<compile_context>
chip_gen: v7x
topology: tpu7x:2x2x1
jax: 0.10.0
libtpu: 0.0.40
codegen_flags: <defaults>
</compile_context>

<pallas_src>
import math
import functools

import jax
import jax.numpy as jnp
from jax.experimental import pallas as pl
from jax.experimental.pallas import tpu as pltpu


def _attention_w2_kernel(B, S, num_heads, head_dim, vis,
                         xqk_ref, xv_ref,
                         wqk_ref, bqk_ref,
                         wv_ref, bv_ref,
                         wo_ref, bo_ref,
                         out_ref, *vis_refs):
    """Single grid step; batch is folded into rows for the projections."""
    H = num_heads * head_dim
    mm_dtype = wqk_ref.dtype                      # MXU operand dtype (f32 / bf16)
    wts_ref = vis_refs[0] if vis else None

    xqk = xqk_ref[...].astype(mm_dtype)           # (B*S, H) -> Q,K projections
    xv = xv_ref[...].astype(mm_dtype)             # (B*S, H) -> V projection

    # --- fused Q|K projection and V projection (gates/scale pre-folded) -----
    qk = jnp.dot(xqk, wqk_ref[...], preferred_element_type=jnp.float32) + bqk_ref[...]
    v_all = jnp.dot(xv, wv_ref[...], preferred_element_type=jnp.float32) + bv_ref[...]

    q_all = qk[:, :H]                             # (B*S, H), already * sigmoid(g_q)/sqrt(hd)
    k_all = qk[:, H:]                             # (B*S, H), already * sigmoid(g_k)

    # --- per-batch multi-head attention (B is a small static Python int) ----
    for b in range(B):
        r0 = b * S
        qb = q_all[r0:r0 + S].reshape(S, num_heads, head_dim).astype(mm_dtype)
        kb = k_all[r0:r0 + S].reshape(S, num_heads, head_dim).astype(mm_dtype)
        vb = v_all[r0:r0 + S].reshape(S, num_heads, head_dim).astype(mm_dtype)

        # scores[h, q, k] = sum_d qb[q,h,d] * kb[k,h,d]   (no explicit k.T)
        scores = jnp.einsum('qhd,khd->hqk', qb, kb,
                            preferred_element_type=jnp.float32)     # (nh, S, S)

        # softmax over keys in f32; reciprocal on the EUP slot
        m = jnp.max(scores, axis=-1, keepdims=True)
        e = jnp.exp(scores - m)
        inv = pl.reciprocal(jnp.sum(e, axis=-1, keepdims=True), approx=True)
        probs = e * inv                                             # (nh, S, S)

        # attn_dropout is identity in inference mode.
        if vis:
            wts_ref[b] = probs.astype(wts_ref.dtype)

        # context[q, h, d] = sum_k probs[h,q,k] * vb[k,h,d]
        ctx = jnp.einsum('hqk,khd->qhd', probs.astype(mm_dtype), vb,
                         preferred_element_type=jnp.float32)        # (S, nh, hd)
        ctx = ctx.reshape(S, H)

        # --- output projection (proj_dropout identity in inference) ---------
        out_b = jnp.dot(ctx.astype(mm_dtype), wo_ref[...],
                        preferred_element_type=jnp.float32) + bo_ref[...]
        out_ref[r0:r0 + S, :] = out_b.astype(out_ref.dtype)


def attention_w2_pallas(hidden_states, hidden_states2, params, num_heads,
                        mm_dtype=jnp.float32, vis=True, probs_dtype=jnp.float32):
    """hidden_states (-> V), hidden_states2 (-> Q, K): (B, S, H) float32.

    params holds torch-style Linear weights already transposed to (in, out).
    mm_dtype selects the MXU operand dtype (bf16 is the fast path on v6e/v7x);
    accumulation and softmax stay f32.  vis=False skips the probs output
    entirely (the module returns weights=None in that case anyway).
    """
    B, S, H = hidden_states.shape
    head_dim = H // num_heads
    f32 = jnp.float32

    # --- fold gates + 1/sqrt(hd) into weights/biases once (per-parameter) ---
    s_q = (jax.nn.sigmoid(params["g_q"].astype(f32)) / math.sqrt(head_dim)).reshape(())
    s_k = jax.nn.sigmoid(params["g_k"].astype(f32)).reshape(())
    s_v = jax.nn.sigmoid(params["g_v"].astype(f32)).reshape(())

    wqk = jnp.concatenate([params["wq"].astype(f32) * s_q,
                           params["wk"].astype(f32) * s_k], axis=1).astype(mm_dtype)  # (H,2H)
    bqk = jnp.concatenate([params["bq"].astype(f32) * s_q,
                           params["bk"].astype(f32) * s_k], axis=1)                    # (1,2H)
    wv = (params["wv"].astype(f32) * s_v).astype(mm_dtype)
    bv = params["bv"].astype(f32) * s_v
    wo = params["wo"].astype(mm_dtype)
    bo = params["bo"].astype(f32)

    # Fold batch into rows for the projection matmuls (free reshape in XLA).
    xqk = hidden_states2.reshape(B * S, H)
    xv = hidden_states.reshape(B * S, H)

    kernel = functools.partial(_attention_w2_kernel, B, S, num_heads, head_dim, vis)

    def spec(shape):
        return pl.BlockSpec(shape, lambda i, _n=len(shape): (0,) * _n)

    in_specs = [
        spec((B * S, H)), spec((B * S, H)),        # xqk, xv
        spec((H, 2 * H)), spec((1, 2 * H)),        # Wq|Wk fused, bq|bk fused
        spec((H, H)), spec((1, H)),                # Wv, bv
        spec((H, H)), spec((1, H)),                # Wo, bo
    ]

    if vis:
        out_shape = (jax.ShapeDtypeStruct((B * S, H), f32),
                     jax.ShapeDtypeStruct((B, num_heads, S, S), probs_dtype))
        out_specs = (spec((B * S, H)), spec((B, num_heads, S, S)))
    else:
        out_shape = jax.ShapeDtypeStruct((B * S, H), f32)
        out_specs = spec((B * S, H))

    itemsize = jnp.dtype(mm_dtype).itemsize
    probs_bytes = B * num_heads * S * S * jnp.dtype(probs_dtype).itemsize if vis else 0
    cost = pl.CostEstimate(
        flops=8 * B * S * H * H + 4 * B * num_heads * S * S * head_dim,
        transcendentals=B * num_heads * S * (S + 1),
        bytes_accessed=(2 * B * S * H * 4              # both inputs (f32)
                        + 4 * H * H * itemsize         # fused + V + O weights
                        + 4 * H * 4                    # biases
                        + B * S * H * 4                # attention output
                        + probs_bytes))                # optional probs

    result = pl.pallas_call(
        kernel,
        out_shape=out_shape,
        grid=(1,),
        in_specs=in_specs,
        out_specs=out_specs,
        compiler_params=pltpu.CompilerParams(
            dimension_semantics=("arbitrary",)),
        cost_estimate=cost,
    )(xqk, xv, wqk, bqk, wv, bv, wo, bo)

    if vis:
        out_flat, wts = result
        return out_flat.reshape(B, S, H), wts
    return result.reshape(B, S, H), None


def attention_w2_reference(hidden_states, hidden_states2, params, num_heads):
    """Pure-JAX reference mirroring the PyTorch forward (dropout = identity)."""
    B, S, H = hidden_states.shape
    hd = H // num_heads
    q = hidden_states2 @ params["wq"] + params["bq"][0]
    k = hidden_states2 @ params["wk"] + params["bk"][0]
    v = hidden_states @ params["wv"] + params["bv"][0]

    def split(t):  # (B,S,H) -> (B, nh, S, hd)
        return t.reshape(B, S, num_heads, hd).transpose(0, 2, 1, 3)

    q = split(q) * jax.nn.sigmoid(params["g_q"])
    k = split(k) * jax.nn.sigmoid(params["g_k"])
    v = split(v) * jax.nn.sigmoid(params["g_v"])

    scores = jnp.einsum("bhqd,bhkd->bhqk", q, k) / math.sqrt(hd)
    probs = jax.nn.softmax(scores, axis=-1)
    ctx = jnp.einsum("bhqk,bhkd->bhqd", probs, v)
    ctx = ctx.transpose(0, 2, 1, 3).reshape(B, S, H)
    out = ctx @ params["wo"] + params["bo"][0]
    return out, probs


if __name__ == "__main__":
    # Small config consistent with the module: hidden_size=32, num_heads=4, seq=8, batch=2.
    B, S, H = 2, 8, 32
    NUM_HEADS = 4

    key = jax.random.PRNGKey(0)
    keys = jax.random.split(key, 10)

    # Torch Linear weights are (out,in); create torch-style then transpose to (in,out).
    def linear_w(k):
        return (jax.random.normal(k, (H, H), jnp.float32) * 0.05).T

    params = {
        "wq": linear_w(keys[0]), "bq": jax.random.normal(keys[1], (1, H), jnp.float32) * 0.01,
        "wk": linear_w(keys[2]), "bk": jax.random.normal(keys[3], (1, H), jnp.float32) * 0.01,
        "wv": linear_w(keys[4]), "bv": jax.random.normal(keys[5], (1, H), jnp.float32) * 0.01,
        "wo": linear_w(keys[6]), "bo": jax.random.normal(keys[7], (1, H), jnp.float32) * 0.01,
        "g_q": jnp.array(0.1, jnp.float32),
        "g_k": jnp.array(0.1, jnp.float32),
        "g_v": jnp.array(0.1, jnp.float32),
    }

    hidden_states = jax.random.normal(keys[8], (B, S, H), jnp.float32)    # -> V
    hidden_states2 = jax.random.normal(keys[9], (B, S, H), jnp.float32)   # -> Q, K

    out_ref, wts_ref = attention_w2_reference(hidden_states, hidden_states2, params, NUM_HEADS)

    # f32 MXU-operand path, vis=True (probs returned). Tolerance accounts for
    # the approximate EUP reciprocal in the softmax.
    out, wts = attention_w2_pallas(hidden_states, hidden_states2, params, NUM_HEADS,
                                   mm_dtype=jnp.float32, vis=True)
    jax.block_until_ready(out)
    jax.block_until_ready(wts)
    assert jnp.allclose(out, out_ref, atol=2e-3, rtol=2e-3), "output mismatch (f32)"
    assert jnp.allclose(wts, wts_ref, atol=2e-3, rtol=2e-3), "weights mismatch (f32)"

    # bf16 MXU-operand path (v6e/v7x fast path), vis=False: probs writeback skipped.
    out_bf, wts_none = attention_w2_pallas(hidden_states, hidden_states2, params, NUM_HEADS,
                                           mm_dtype=jnp.bfloat16, vis=False)
    jax.block_until_ready(out_bf)
    assert wts_none is None
    assert jnp.allclose(out_bf, out_ref, atol=3e-2, rtol=3e-2), "output mismatch (bf16)"

    print("KERNEL_OK")
</pallas_src>

<mosaic_0001>
module attributes {stable_mosaic.version = 11 : i64} {
  func.func @_attention_w2_kernel(%arg0: i32, %arg1: memref<16x32xf32, #tpu.memory_space<vmem>>, %arg2: memref<16x32xf32, #tpu.memory_space<vmem>>, %arg3: memref<32x64xf32, #tpu.memory_space<vmem>>, %arg4: memref<1x64xf32, #tpu.memory_space<vmem>>, %arg5: memref<32x32xf32, #tpu.memory_space<vmem>>, %arg6: memref<1x32xf32, #tpu.memory_space<vmem>>, %arg7: memref<32x32xf32, #tpu.memory_space<vmem>>, %arg8: memref<1x32xf32, #tpu.memory_space<vmem>>, %arg9: memref<16x32xf32, #tpu.memory_space<vmem>>, %arg10: memref<2x4x8x8xf32, #tpu.memory_space<vmem>>) attributes {dimension_semantics = [#tpu.dimension_semantics<arbitrary>], iteration_bounds = array<i64: 1>, scalar_prefetch = 0 : i64, scratch_operands = 0 : i64, tpu.core_type = #tpu.core_type<tc>, window_params = [{pipeline_mode = #tpu.pipeline_mode<synchronous>, transform_indices = @transform_0, window_bounds = array<i64: 16, 32>}, {pipeline_mode = #tpu.pipeline_mode<synchronous>, transform_indices = @transform_1, window_bounds = array<i64: 16, 32>}, {pipeline_mode = #tpu.pipeline_mode<synchronous>, transform_indices = @transform_2, window_bounds = array<i64: 32, 64>}, {pipeline_mode = #tpu.pipeline_mode<synchronous>, transform_indices = @transform_3, window_bounds = array<i64: 1, 64>}, {pipeline_mode = #tpu.pipeline_mode<synchronous>, transform_indices = @transform_4, window_bounds = array<i64: 32, 32>}, {pipeline_mode = #tpu.pipeline_mode<synchronous>, transform_indices = @transform_5, window_bounds = array<i64: 1, 32>}, {pipeline_mode = #tpu.pipeline_mode<synchronous>, transform_indices = @transform_6, window_bounds = array<i64: 32, 32>}, {pipeline_mode = #tpu.pipeline_mode<synchronous>, transform_indices = @transform_7, window_bounds = array<i64: 1, 32>}, {pipeline_mode = #tpu.pipeline_mode<synchronous>, transform_indices = @transform_8, window_bounds = array<i64: 16, 32>}, {pipeline_mode = #tpu.pipeline_mode<synchronous>, transform_indices = @transform_9, window_bounds = array<i64: 2, 4, 8, 8>}]} {
    %c0 = arith.constant 0 : index
    %c0_0 = arith.constant 0 : index
    %0 = vector.load %arg1[%c0, %c0_0] : memref<16x32xf32, #tpu.memory_space<vmem>>, vector<16x32xf32>
    %c0_1 = arith.constant 0 : index
    %c0_2 = arith.constant 0 : index
    %1 = vector.load %arg2[%c0_1, %c0_2] : memref<16x32xf32, #tpu.memory_space<vmem>>, vector<16x32xf32>
    %c0_3 = arith.constant 0 : index
    %c0_4 = arith.constant 0 : index
    %2 = vector.load %arg3[%c0_3, %c0_4] : memref<32x64xf32, #tpu.memory_space<vmem>>, vector<32x64xf32>
    %cst = arith.constant dense<0.000000e+00> : vector<16x64xf32>
    %3 = tpu.matmul %0, %2, %cst {dimension_numbers = #tpu.dot_dimension_numbers<[1], [0], [0], [1], [0, 0, 1, 1], [], []>} : vector<16x32xf32>, vector<32x64xf32>, vector<16x64xf32> -> vector<16x64xf32>
    %c0_5 = arith.constant 0 : index
    %c0_6 = arith.constant 0 : index
    %4 = vector.load %arg4[%c0_5, %c0_6] : memref<1x64xf32, #tpu.memory_space<vmem>>, vector<1x64xf32>
    %5 = vector.broadcast %4 : vector<1x64xf32> to vector<16x64xf32>
    %6 = arith.addf %3, %5 : vector<16x64xf32>
    %c0_7 = arith.constant 0 : index
    %c0_8 = arith.constant 0 : index
    %7 = vector.load %arg5[%c0_7, %c0_8] : memref<32x32xf32, #tpu.memory_space<vmem>>, vector<32x32xf32>
    %cst_9 = arith.constant dense<0.000000e+00> : vector<16x32xf32>
    %8 = tpu.matmul %1, %7, %cst_9 {dimension_numbers = #tpu.dot_dimension_numbers<[1], [0], [0], [1], [0, 0, 1, 1], [], []>} : vector<16x32xf32>, vector<32x32xf32>, vector<16x32xf32> -> vector<16x32xf32>
    %c0_10 = arith.constant 0 : index
    %c0_11 = arith.constant 0 : index
    %9 = vector.load %arg6[%c0_10, %c0_11] : memref<1x32xf32, #tpu.memory_space<vmem>>, vector<1x32xf32>
    %10 = vector.broadcast %9 : vector<1x32xf32> to vector<16x32xf32>
    %11 = arith.addf %8, %10 : vector<16x32xf32>
    %12 = vector.extract_strided_slice %6 {offsets = [0, 0], sizes = [16, 32], strides = [1, 1]} : vector<16x64xf32> to vector<16x32xf32>
    %13 = vector.extract_strided_slice %6 {offsets = [0, 32], sizes = [16, 32], strides = [1, 1]} : vector<16x64xf32> to vector<16x32xf32>
    %14 = vector.extract_strided_slice %12 {offsets = [0, 0], sizes = [8, 32], strides = [1, 1]} : vector<16x32xf32> to vector<8x32xf32>
    %15 = vector.shape_cast %14 : vector<8x32xf32> to vector<8x4x8xf32>
    %16 = vector.extract_strided_slice %13 {offsets = [0, 0], sizes = [8, 32], strides = [1, 1]} : vector<16x32xf32> to vector<8x32xf32>
    %17 = vector.shape_cast %16 : vector<8x32xf32> to vector<8x4x8xf32>
    %18 = vector.extract_strided_slice %11 {offsets = [0, 0], sizes = [8, 32], strides = [1, 1]} : vector<16x32xf32> to vector<8x32xf32>
    %19 = vector.shape_cast %18 : vector<8x32xf32> to vector<8x4x8xf32>
    "tpu.trace_start"() <{level = 10 : i32, message = "qhd,khd->hqk"}> : () -> ()
    %cst_12 = arith.constant dense<0.000000e+00> : vector<4x8x8xf32>
    %20 = tpu.matmul %15, %17, %cst_12 {dimension_numbers = #tpu.dot_dimension_numbers<[2], [2], [0], [0], [0, 1, 0, 0, 1, 0], [1], [1]>} : vector<8x4x8xf32>, vector<8x4x8xf32>, vector<4x8x8xf32> -> vector<4x8x8xf32>
    "tpu.trace_stop"() : () -> ()
    %cst_13 = arith.constant dense<0xFF800000> : vector<4x8xf32>
    %21 = vector.multi_reduction <maximumf>, %20, %cst_13 [2] : vector<4x8x8xf32> to vector<4x8xf32>
    %22 = vector.shape_cast %21 : vector<4x8xf32> to vector<4x8x1xf32>
    %23 = vector.broadcast %22 : vector<4x8x1xf32> to vector<4x8x8xf32>
    %24 = arith.subf %20, %23 : vector<4x8x8xf32>
    %25 = math.exp %24 : vector<4x8x8xf32>
    %cst_14 = arith.constant dense<0.000000e+00> : vector<4x8xf32>
    %26 = vector.multi_reduction <add>, %25, %cst_14 [2] : vector<4x8x8xf32> to vector<4x8xf32>
    %27 = vector.shape_cast %26 : vector<4x8xf32> to vector<4x8x1xf32>
    %28 = tpu.reciprocal %27 {approx = true} : vector<4x8x1xf32> -> vector<4x8x1xf32>
    %29 = vector.broadcast %28 : vector<4x8x1xf32> to vector<4x8x8xf32>
    %30 = arith.mulf %25, %29 : vector<4x8x8xf32>
    %c0_15 = arith.constant 0 : index
    %c0_16 = arith.constant 0 : index
    %c0_17 = arith.constant 0 : index
    %c0_18 = arith.constant 0 : index
    %31 = vector.load %arg10[%c0_15, %c0_16, %c0_17, %c0_18] : memref<2x4x8x8xf32, #tpu.memory_space<vmem>>, vector<1x4x8x8xf32>
    %32 = vector.shape_cast %31 : vector<1x4x8x8xf32> to vector<4x8x8xf32>
    %33 = vector.shape_cast %30 : vector<4x8x8xf32> to vector<1x4x8x8xf32>
    tpu.vector_store %arg10[%c0_15, %c0_16, %c0_17, %c0_18], %33 {strides = array<i32>} : memref<2x4x8x8xf32, #tpu.memory_space<vmem>>, vector<1x4x8x8xf32>,
    "tpu.trace_start"() <{level = 10 : i32, message = "hqk,khd->qhd"}> : () -> ()
    %cst_19 = arith.constant dense<0.000000e+00> : vector<4x8x8xf32>
    %34 = tpu.matmul %19, %30, %cst_19 {dimension_numbers = #tpu.dot_dimension_numbers<[0], [2], [2], [1], [0, 1, 0, 2, 1, 1], [1], [0]>} : vector<8x4x8xf32>, vector<4x8x8xf32>, vector<4x8x8xf32> -> vector<4x8x8xf32>
    %35 = tpu.transpose %34, [2, 0, 1] : vector<4x8x8xf32> -> vector<8x4x8xf32>
    "tpu.trace_stop"() : () -> ()
    %36 = vector.shape_cast %35 : vector<8x4x8xf32> to vector<8x32xf32>
    %c0_20 = arith.constant 0 : index
    %c0_21 = arith.constant 0 : index
    %37 = vector.load %arg7[%c0_20, %c0_21] : memref<32x32xf32, #tpu.memory_space<vmem>>, vector<32x32xf32>
    %cst_22 = arith.constant dense<0.000000e+00> : vector<8x32xf32>
    %38 = tpu.matmul %36, %37, %cst_22 {dimension_numbers = #tpu.dot_dimension_numbers<[1], [0], [0], [1], [0, 0, 1, 1], [], []>} : vector<8x32xf32>, vector<32x32xf32>, vector<8x32xf32> -> vector<8x32xf32>
    %c0_23 = arith.constant 0 : index
    %c0_24 = arith.constant 0 : index
    %39 = vector.load %arg8[%c0_23, %c0_24] : memref<1x32xf32, #tpu.memory_space<vmem>>, vector<1x32xf32>
    %40 = vector.broadcast %39 : vector<1x32xf32> to vector<8x32xf32>
    %41 = arith.addf %38, %40 : vector<8x32xf32>
    %c0_25 = arith.constant 0 : index
    %c0_26 = arith.constant 0 : index
    %42 = vector.load %arg9[%c0_25, %c0_26] : memref<16x32xf32, #tpu.memory_space<vmem>>, vector<8x32xf32>
    tpu.vector_store %arg9[%c0_25, %c0_26], %41 {strides = array<i32>} : memref<16x32xf32, #tpu.memory_space<vmem>>, vector<8x32xf32>,
    %43 = vector.extract_strided_slice %12 {offsets = [8, 0], sizes = [8, 32], strides = [1, 1]} : vector<16x32xf32> to vector<8x32xf32>
    %44 = vector.shape_cast %43 : vector<8x32xf32> to vector<8x4x8xf32>
    %45 = vector.extract_strided_slice %13 {offsets = [8, 0], sizes = [8, 32], strides = [1, 1]} : vector<16x32xf32> to vector<8x32xf32>
    %46 = vector.shape_cast %45 : vector<8x32xf32> to vector<8x4x8xf32>
    %47 = vector.extract_strided_slice %11 {offsets = [8, 0], sizes = [8, 32], strides = [1, 1]} : vector<16x32xf32> to vector<8x32xf32>
    %48 = vector.shape_cast %47 : vector<8x32xf32> to vector<8x4x8xf32>
    "tpu.trace_start"() <{level = 10 : i32, message = "qhd,khd->hqk"}> : () -> ()
    %cst_27 = arith.constant dense<0.000000e+00> : vector<4x8x8xf32>
    %49 = tpu.matmul %44, %46, %cst_27 {dimension_numbers = #tpu.dot_dimension_numbers<[2], [2], [0], [0], [0, 1, 0, 0, 1, 0], [1], [1]>} : vector<8x4x8xf32>, vector<8x4x8xf32>, vector<4x8x8xf32> -> vector<4x8x8xf32>
    "tpu.trace_stop"() : () -> ()
    %cst_28 = arith.constant dense<0xFF800000> : vector<4x8xf32>
    %50 = vector.multi_reduction <maximumf>, %49, %cst_28 [2] : vector<4x8x8xf32> to vector<4x8xf32>
    %51 = vector.shape_cast %50 : vector<4x8xf32> to vector<4x8x1xf32>
    %52 = vector.broadcast %51 : vector<4x8x1xf32> to vector<4x8x8xf32>
    %53 = arith.subf %49, %52 : vector<4x8x8xf32>
    %54 = math.exp %53 : vector<4x8x8xf32>
    %cst_29 = arith.constant dense<0.000000e+00> : vector<4x8xf32>
    %55 = vector.multi_reduction <add>, %54, %cst_29 [2] : vector<4x8x8xf32> to vector<4x8xf32>
    %56 = vector.shape_cast %55 : vector<4x8xf32> to vector<4x8x1xf32>
    %57 = tpu.reciprocal %56 {approx = true} : vector<4x8x1xf32> -> vector<4x8x1xf32>
    %58 = vector.broadcast %57 : vector<4x8x1xf32> to vector<4x8x8xf32>
    %59 = arith.mulf %54, %58 : vector<4x8x8xf32>
    %c1 = arith.constant 1 : index
    %c0_30 = arith.constant 0 : index
    %c0_31 = arith.constant 0 : index
    %c0_32 = arith.constant 0 : index
    %60 = vector.load %arg10[%c1, %c0_30, %c0_31, %c0_32] : memref<2x4x8x8xf32, #tpu.memory_space<vmem>>, vector<1x4x8x8xf32>
    %61 = vector.shape_cast %60 : vector<1x4x8x8xf32> to vector<4x8x8xf32>
    %62 = vector.shape_cast %59 : vector<4x8x8xf32> to vector<1x4x8x8xf32>
    tpu.vector_store %arg10[%c1, %c0_30, %c0_31, %c0_32], %62 {strides = array<i32>} : memref<2x4x8x8xf32, #tpu.memory_space<vmem>>, vector<1x4x8x8xf32>,
    "tpu.trace_start"() <{level = 10 : i32, message = "hqk,khd->qhd"}> : () -> ()
    %cst_33 = arith.constant dense<0.000000e+00> : vector<4x8x8xf32>
    %63 = tpu.matmul %48, %59, %cst_33 {dimension_numbers = #tpu.dot_dimension_numbers<[0], [2], [2], [1], [0, 1, 0, 2, 1, 1], [1], [0]>} : vector<8x4x8xf32>, vector<4x8x8xf32>, vector<4x8x8xf32> -> vector<4x8x8xf32>
    %64 = tpu.transpose %63, [2, 0, 1] : vector<4x8x8xf32> -> vector<8x4x8xf32>
    "tpu.trace_stop"() : () -> ()
    %65 = vector.shape_cast %64 : vector<8x4x8xf32> to vector<8x32xf32>
    %c0_34 = arith.constant 0 : index
    %c0_35 = arith.constant 0 : index
    %66 = vector.load %arg7[%c0_34, %c0_35] : memref<32x32xf32, #tpu.memory_space<vmem>>, vector<32x32xf32>
    %cst_36 = arith.constant dense<0.000000e+00> : vector<8x32xf32>
    %67 = tpu.matmul %65, %66, %cst_36 {dimension_numbers = #tpu.dot_dimension_numbers<[1], [0], [0], [1], [0, 0, 1, 1], [], []>} : vector<8x32xf32>, vector<32x32xf32>, vector<8x32xf32> -> vector<8x32xf32>
    %c0_37 = arith.constant 0 : index
    %c0_38 = arith.constant 0 : index
    %68 = vector.load %arg8[%c0_37, %c0_38] : memref<1x32xf32, #tpu.memory_space<vmem>>, vector<1x32xf32>
    %69 = vector.broadcast %68 : vector<1x32xf32> to vector<8x32xf32>
    %70 = arith.addf %67, %69 : vector<8x32xf32>
    %c8 = arith.constant 8 : index
    %c0_39 = arith.constant 0 : index
    %71 = vector.load %arg9[%c8, %c0_39] : memref<16x32xf32, #tpu.memory_space<vmem>>, vector<8x32xf32>
    tpu.vector_store %arg9[%c8, %c0_39], %70 {strides = array<i32>} : memref<16x32xf32, #tpu.memory_space<vmem>>, vector<8x32xf32>,
    return
  }
  func.func @transform_0(%arg0: i32) -> (i32, i32) {
    %c0_i32 = arith.constant 0 : i32
    %c0_i32_0 = arith.constant 0 : i32
    %c0_i32_1 = arith.constant 0 : i32
    return %c0_i32, %c0_i32_0 : i32, i32
  }
  func.func @transform_1(%arg0: i32) -> (i32, i32) {
    %c0_i32 = arith.constant 0 : i32
    %c0_i32_0 = arith.constant 0 : i32
    %c0_i32_1 = arith.constant 0 : i32
    return %c0_i32, %c0_i32_0 : i32, i32
  }
  func.func @transform_2(%arg0: i32) -> (i32, i32) {
    %c0_i32 = arith.constant 0 : i32
    %c0_i32_0 = arith.constant 0 : i32
    %c0_i32_1 = arith.constant 0 : i32
    return %c0_i32, %c0_i32_0 : i32, i32
  }
  func.func @transform_3(%arg0: i32) -> (i32, i32) {
    %c0_i32 = arith.constant 0 : i32
    %c0_i32_0 = arith.constant 0 : i32
    %c0_i32_1 = arith.constant 0 : i32
    return %c0_i32, %c0_i32_0 : i32, i32
  }
  func.func @transform_4(%arg0: i32) -> (i32, i32) {
    %c0_i32 = arith.constant 0 : i32
    %c0_i32_0 = arith.constant 0 : i32
    %c0_i32_1 = arith.constant 0 : i32
    return %c0_i32, %c0_i32_0 : i32, i32
  }
  func.func @transform_5(%arg0: i32) -> (i32, i32) {
    %c0_i32 = arith.constant 0 : i32
    %c0_i32_0 = arith.constant 0 : i32
    %c0_i32_1 = arith.constant 0 : i32
    return %c0_i32, %c0_i32_0 : i32, i32
  }
  func.func @transform_6(%arg0: i32) -> (i32, i32) {
    %c0_i32 = arith.constant 0 : i32
    %c0_i32_0 = arith.constant 0 : i32
    %c0_i32_1 = arith.constant 0 : i32
    return %c0_i32, %c0_i32_0 : i32, i32
  }
  func.func @transform_7(%arg0: i32) -> (i32, i32) {
    %c0_i32 = arith.constant 0 : i32
    %c0_i32_0 = arith.constant 0 : i32
    %c0_i32_1 = arith.constant 0 : i32
    return %c0_i32, %c0_i32_0 : i32, i32
  }
  func.func @transform_8(%arg0: i32) -> (i32, i32) {
    %c0_i32 = arith.constant 0 : i32
    %c0_i32_0 = arith.constant 0 : i32
    %c0_i32_1 = arith.constant 0 : i32
    return %c0_i32, %c0_i32_0 : i32, i32
  }
  func.func @transform_9(%arg0: i32) -> (i32, i32, i32, i32) {
    %c0_i32 = arith.constant 0 : i32
    %c0_i32_0 = arith.constant 0 : i32
    %c0_i32_1 = arith.constant 0 : i32
    %c0_i32_2 = arith.constant 0 : i32
    %c0_i32_3 = arith.constant 0 : i32
    return %c0_i32, %c0_i32_0, %c0_i32_1, %c0_i32_2 : i32, i32, i32, i32
  }
}

</mosaic_0001>

<llo_original>
// kernel: tpu_custom_call.1
$region0: #{tpu_custom_call.1}
  #allocation0 [shape = 'u32[]', space=smem, size = 0x4, offset = 0x4, fixed_abs, tag = 'smem constant byte address 0x4 - core index']
  #allocation1 [shape = 'u32[144,128]{1,0:T(1,128)}', space=vmem, size = 0x12000, scoped, tag = 'internal scratch']
  %s0 = inlined_call_operand.hbm [shape: f32[16,32], index: 0, kind: input, shape index: {}]
  %s1 = inlined_call_operand.hbm [shape: f32[16,32], index: 1, kind: input, shape index: {}]
  %s2 = inlined_call_operand.hbm [shape: f32[32,64], index: 2, kind: input, shape index: {}]
  %s3 = inlined_call_operand.vmem [shape: f32[1,64], index: 3, kind: input, shape index: {}]
  %s4 = inlined_call_operand.hbm [shape: f32[32,32], index: 4, kind: input, shape index: {}]
  %s5 = inlined_call_operand.vmem [shape: f32[1,32], index: 5, kind: input, shape index: {}]
  %s6 = inlined_call_operand.hbm [shape: f32[32,32], index: 6, kind: input, shape index: {}]
  %s7 = inlined_call_operand.vmem [shape: f32[1,32], index: 7, kind: input, shape index: {}]
  %s8 = inlined_call_operand.hbm [shape: f32[16,32], index: 8, kind: output, shape index: {0}]
  %s9 = inlined_call_operand.hbm [shape: f32[2,4,8,8], index: 9, kind: output, shape index: {1}]
  %10 = xla_tuple %s8, %s9
  %s11 = sld [smem:[#allocation0]]
  $region70: #{tpu_custom_call.1} parent=0
    _
  %s13 = ssub.s32 1, %s11
  %s14 = scalar_select 0, %s13, %s11
  $region1: #{tpu_custom_call.1} parent=0
    #allocation2 [shape = 'u8[8192]{0}', space=vmem, size = 0x2000, scoped, tag = 'input window, operand 0, single buffered']
    #allocation3 [shape = 's32[1]{0}', space=sflag, size = 0x4, scoped, tag = 'scoped memory for tpu_custom_call.1']
    #allocation4 [shape = 's32[1]{0}', space=sflag, size = 0x4, scoped, tag = 'scoped memory for tpu_custom_call.1']
    #allocation5 [shape = 'u8[8192]{0}', space=vmem, size = 0x2000, scoped, tag = 'input window, operand 1, single buffered']
    #allocation6 [shape = 's32[1]{0}', space=sflag, size = 0x4, scoped, tag = 'scoped memory for tpu_custom_call.1']
    #allocation7 [shape = 'u8[16384]{0}', space=vmem, size = 0x4000, scoped, tag = 'input window, operand 2, single buffered']
    #allocation8 [shape = 'u8[16384]{0}', space=vmem, size = 0x4000, scoped, tag = 'input window, operand 4, single buffered']
    #allocation9 [shape = 's32[1]{0}', space=sflag, size = 0x4, scoped, tag = 'scoped memory for tpu_custom_call.1']
    #allocation10 [shape = 'u8[16384]{0}', space=vmem, size = 0x4000, scoped, tag = 'input window, operand 6, single buffered']
    #allocation11 [shape = 'u8[8192]{0}', space=vmem, size = 0x2000, scoped, tag = 'output window, operand 0, single buffered']
    #allocation12 [shape = 'u8[32768]{0}', space=vmem, size = 0x8000, scoped, tag = 'output window, operand 1, single buffered']
    #allocation13 [shape = 's32[1]{0}', space=sflag, size = 0x4, scoped, tag = 'scoped memory for tpu_custom_call.1']
    %15 = vsyncpa [#allocation3], 0
    %16 = vsyncpa [#allocation6], 0
    %17 = vsyncpa [#allocation9], 0
    %18 = vsyncpa [#allocation4], 0
    %19 = vsyncpa [#allocation13], 0
    // Predicated region
    $region2: #{tpu_custom_call.1} parent=1 // pred_check
      _
    $region3: #{tpu_custom_call.1} parent=1 // pred_check_branch
      %21 = sbr.rel (0) target = $region5
    $region4: #{tpu_custom_call.1} parent=1 // pred_region
      %s23 = ssub.s32 256, 256
      %24 = vsyncadd [#allocation3], %s23
      %s25 = sshll.u32 [#allocation2], 4
      %s26 = int_to_ptr.vmem [resolvable:$true] %s25
      %31 = dma.hbm_to_vmem [thread:$0]  %s0, 256, %s26, [#allocation3], 128, 128, 8
    $region5: #{tpu_custom_call.1} parent=1 // pred_fallthru
      _
    // Predicated region
    $region6: #{tpu_custom_call.1} parent=1 // pred_check
      _
    $region7: #{tpu_custom_call.1} parent=1 // pred_check_branch
      %33 = sbr.rel (0) target = $region9
    $region8: #{tpu_custom_call.1} parent=1 // pred_region
      %s35 = ssub.s32 256, 256
      %36 = vsyncadd [#allocation6], %s35
      %s37 = sshll.u32 [#allocation5], 4
      %s38 = int_to_ptr.vmem [resolvable:$true] %s37
      %43 = dma.hbm_to_vmem [thread:$0]  %s1, 256, %s38, [#allocation6], 128, 128, 8
    $region9: #{tpu_custom_call.1} parent=1 // pred_fallthru
      _
    // Predicated region
    $region10: #{tpu_custom_call.1} parent=1 // pred_check
      _
    $region11: #{tpu_custom_call.1} parent=1 // pred_check_branch
      %45 = sbr.rel (0) target = $region13
    $region12: #{tpu_custom_call.1} parent=1 // pred_region
      %s47 = ssub.s32 512, 512
      %48 = vsyncadd [#allocation6], %s47
      %s49 = sshll.u32 [#allocation7], 4
      %s50 = int_to_ptr.vmem [resolvable:$true] %s49
      %55 = dma.hbm_to_vmem [thread:$0]  %s2, 512, %s50, [#allocation6], 128, 128, 8
    $region13: #{tpu_custom_call.1} parent=1 // pred_fallthru
      _
    // Predicated region
    $region14: #{tpu_custom_call.1} parent=1 // pred_check
      _
    $region15: #{tpu_custom_call.1} parent=1 // pred_check_branch
      %57 = sbr.rel (0) target = $region17
    $region16: #{tpu_custom_call.1} parent=1 // pred_region
      _
    $region17: #{tpu_custom_call.1} parent=1 // pred_fallthru
      _
    // Predicated region
    $region18: #{tpu_custom_call.1} parent=1 // pred_check
      _
    $region19: #{tpu_custom_call.1} parent=1 // pred_check_branch
      %59 = sbr.rel (0) target = $region21
    $region20: #{tpu_custom_call.1} parent=1 // pred_region
      %s61 = ssub.s32 512, 512
      %62 = vsyncadd [#allocation9], %s61
      %s63 = sshll.u32 [#allocation8], 4
      %s64 = int_to_ptr.vmem [resolvable:$true] %s63
      %69 = dma.hbm_to_vmem [thread:$0]  %s4, 512, %s64, [#allocation9], 128, 128, 8
    $region21: #{tpu_custom_call.1} parent=1 // pred_fallthru
      _
    // Predicated region
    $region22: #{tpu_custom_call.1} parent=1 // pred_check
      _
    $region23: #{tpu_custom_call.1} parent=1 // pred_check_branch
      %71 = sbr.rel (0) target = $region25
    $region24: #{tpu_custom_call.1} parent=1 // pred_region
      _
    $region25: #{tpu_custom_call.1} parent=1 // pred_fallthru
      _
    // Predicated region
    $region26: #{tpu_custom_call.1} parent=1 // pred_check
      _
    $region27: #{tpu_custom_call.1} parent=1 // pred_check_branch
      %73 = sbr.rel (0) target = $region29
    $region28: #{tpu_custom_call.1} parent=1 // pred_region
      %s75 = ssub.s32 512, 512
      %76 = vsyncadd [#allocation9], %s75
      %s77 = sshll.u32 [#allocation10], 4
      %s78 = int_to_ptr.vmem [resolvable:$true] %s77
      %83 = dma.hbm_to_vmem [thread:$0]  %s6, 512, %s78, [#allocation9], 128, 128, 8
    $region29: #{tpu_custom_call.1} parent=1 // pred_fallthru
      _
    // Predicated region
    $region30: #{tpu_custom_call.1} parent=1 // pred_check
      _
    $region31: #{tpu_custom_call.1} parent=1 // pred_check_branch
      %85 = sbr.rel (0) target = $region33
    $region32: #{tpu_custom_call.1} parent=1 // pred_region
      _
    $region33: #{tpu_custom_call.1} parent=1 // pred_fallthru
      _
    // Predicated region
    $region34: #{tpu_custom_call.1} parent=1 // pred_check
      _
    $region35: #{tpu_custom_call.1} parent=1 // pred_check_branch
      %87 = sbr.rel (0) target = $region37
    $region36: #{tpu_custom_call.1} parent=1 // pred_region
      %88 = dma.done [#allocation3], 256
    $region37: #{tpu_custom_call.1} parent=1 // pred_fallthru
      _
    // Predicated region
    $region38: #{tpu_custom_call.1} parent=1 // pred_check
      _
    $region39: #{tpu_custom_call.1} parent=1 // pred_check_branch
      %90 = sbr.rel (0) target = $region41
    $region40: #{tpu_custom_call.1} parent=1 // pred_region
      %91 = dma.done [#allocation6], 256
    $region41: #{tpu_custom_call.1} parent=1 // pred_fallthru
      _
    // Predicated region
    $region42: #{tpu_custom_call.1} parent=1 // pred_check
      _
    $region43: #{tpu_custom_call.1} parent=1 // pred_check_branch
      %93 = sbr.rel (0) target = $region45
    $region44: #{tpu_custom_call.1} parent=1 // pred_region
      %94 = dma.done [#allocation6], 512
    $region45: #{tpu_custom_call.1} parent=1 // pred_fallthru
      _
    // Predicated region
    $region46: #{tpu_custom_call.1} parent=1 // pred_check
      _
    $region47: #{tpu_custom_call.1} parent=1 // pred_check_branch
      %96 = sbr.rel (0) target = $region49
    $region48: #{tpu_custom_call.1} parent=1 // pred_region
      %97 = dma.done [#allocation9], 512
    $region49: #{tpu_custom_call.1} parent=1 // pred_fallthru
      _
    // Predicated region
    $region50: #{tpu_custom_call.1} parent=1 // pred_check
      _
    $region51: #{tpu_custom_call.1} parent=1 // pred_check_branch
      %99 = sbr.rel (0) target = $region53
    $region52: #{tpu_custom_call.1} parent=1 // pred_region
      %100 = dma.done [#allocation9], 512
    $region53: #{tpu_custom_call.1} parent=1 // pred_fallthru
      _
    %v101 = vld [vmem:[#allocation2] sm:$0xff]
    %v102 = vld [vmem:[#allocation2 + $0x8] sm:$0xff]
    %v103 = vld [vmem:[#allocation5] sm:$0xff]
    %v104 = vld [vmem:[#allocation5 + $0x8] sm:$0xff]
    %v105 = vld [vmem:[#allocation7] sm:$0xff]
    %v106 = vld [vmem:[#allocation7 + $0x8] sm:$0xff]
    %v107 = vld [vmem:[#allocation7 + $0x10] sm:$0xff]
    %v108 = vld [vmem:[#allocation7 + $0x18] sm:$0xff]
    %v109 = vld [vmem:[%s3] sm:$0x1]
    %v111 = vlaneseq
    %v112 = vshrl.u32 %v111, 7
    %v113 = vsub.s32 0, %v112
    %v114 = vrot.slane %v109, %v113
    %vm116 = vcmask 261120
    %v118 = vsel %vm116, %v101, 0
    %v121 = vsel %vm116, %v102, 0
    %123 = vmatprep.subr.mxu0 0.0
    %124 = vmatpush1.msra.mxu0 %v105
    %125 = vmatprep.subr.mxu0 0.0
    %126 = vmatpush1.msra.mxu0 %v106
    %127 = vmatprep.subr.mxu0 0.0
    %128 = vmatpush1.msra.mxu0 %v107
    %129 = vmatprep.subr.mxu0 0.0
    %130 = vmatpush1.msra.mxu0 %v108
    %131 = vmatprep.subr.mxu0 0.0
    %132 = vmatpush1.msra.mxu0 0.0
    %133 = vmatprep.subr.mxu0 0.0
    %134 = vmatpush1.msra.mxu0 0.0
    %135 = vmatprep.subr.mxu0 0.0
    %136 = vmatpush1.msra.mxu0 0.0
    %137 = vmatprep.subr.mxu0 0.0
    %138 = vmatpush1.msra.mxu0 0.0
    %139 = vmatprep.subr.mxu0 0.0
    %140 = vmatpush1.msra.mxu0 0.0
    %141 = vmatprep.subr.mxu0 0.0
    %142 = vmatpush1.msra.mxu0 0.0
    %143 = vmatprep.subr.mxu0 0.0
    %144 = vmatpush1.msra.mxu0 0.0
    %145 = vmatprep.subr.mxu0 0.0
    %146 = vmatpush1.msra.mxu0 0.0
    %147 = vmatprep.subr.mxu0 0.0
    %148 = vmatpush1.msra.mxu0 0.0
    %149 = vmatprep.subr.mxu0 0.0
    %150 = vmatpush1.msra.mxu0 0.0
    %151 = vmatprep.subr.mxu0 0.0
    %152 = vmatpush1.msra.mxu0 0.0
    %153 = vmatprep.subr.mxu0 0.0
    %154 = vmatpush1.msra.mxu0 0.0
    %155 = vmatprep.subr.mxu0 0.0
    %156 = vmatpush1.msra.mxu0 0.0
    %157 = vmatprep.subr.mxu0 0.0
    %158 = vmatpush1.msra.mxu0 0.0
    %159 = vmatprep.subr.mxu0 0.0
    %160 = vmatpush1.msra.mxu0 0.0
    %161 = vmatprep.subr.mxu0 0.0
    %162 = vmatpush1.msra.mxu0 0.0
    %163 = vmatprep.subr.mxu0 0.0
    %164 = vmatpush1.msra.mxu0 0.0
    %165 = vmatprep.subr.mxu0 0.0
    %166 = vmatpush1.msra.mxu0 0.0
    %167 = vmatprep.subr.mxu0 0.0
    %168 = vmatpush1.msra.mxu0 0.0
    %169 = vmatprep.subr.mxu0 0.0
    %170 = vmatpush1.msra.mxu0 0.0
    %171 = vmatprep.subr.mxu0 0.0
    %172 = vmatpush1.msra.mxu0 0.0
    %173 = vmatprep.subr.mxu0 0.0
    %174 = vmatpush1.msra.mxu0 0.0
    %175 = vmatprep.subr.mxu0 0.0
    %176 = vmatpush1.msra.mxu0 0.0
    %177 = vmatprep.subr.mxu0 0.0
    %178 = vmatpush1.msra.mxu0 0.0
    %179 = vmatprep.subr.mxu0 0.0
    %180 = vmatpush1.msra.mxu0 0.0
    %181 = vmatprep.subr.mxu0 0.0
    %182 = vmatpush1.msra.mxu0 0.0
    %183 = vmatprep.subr.mxu0 0.0
    %184 = vmatpush1.msra.mxu0 0.0
    %185 = vmatprep.subr.mxu0 0.0
    %186 = vmatpush1.msra.mxu0 0.0
    %187 = vmatprep.mubr.f32.mxu0 0.0
    %188 = vmatmul.mubr.f32.gmra.mrb[0].mxu0 %v118
    %v189 = vpop.f32.mrb[0].mxu0
    %v190 = vadd.f32 %v114, %v189
    %v191 = vpop.f32.mrb[0].mxu0
    %192 = vmatprep.mubr.f32.mxu0 0.0
    %193 = vmatmul.mubr.f32.gmra.mrb[0].mxu0 %v121
    %v194 = vpop.f32.mrb[0].mxu0
    %v195 = vadd.f32 %v114, %v194
    %v196 = vpop.f32.mrb[0].mxu0
    %197 = vdwg.mxu0
    %v198 = vld [vmem:[#allocation8] sm:$0xff]
    %v199 = vld [vmem:[#allocation8 + $0x8] sm:$0xff]
    %v200 = vld [vmem:[#allocation8 + $0x10] sm:$0xff]
    %v201 = vld [vmem:[#allocation8 + $0x18] sm:$0xff]
    %v202 = vld [vmem:[%s5] sm:$0x1]
    %v204 = vlaneseq
    %v205 = vshrl.u32 %v204, 7
    %v206 = vsub.s32 0, %v205
    %v207 = vrot.slane %v202, %v206
    %v210 = vsel %vm116, %v103, 0
    %v213 = vsel %vm116, %v104, 0
    %215 = vmatprep.subr.mxu0 0.0
    %216 = vmatpush1.msra.mxu0 %v198
    %217 = vmatprep.subr.mxu0 0.0
    %218 = vmatpush1.msra.mxu0 %v199
    %219 = vmatprep.subr.mxu0 0.0
    %220 = vmatpush1.msra.mxu0 %v200
    %221 = vmatprep.subr.mxu0 0.0
    %222 = vmatpush1.msra.mxu0 %v201
    %223 = vmatprep.subr.mxu0 0.0
    %224 = vmatpush1.msra.mxu0 0.0
    %225 = vmatprep.subr.mxu0 0.0
    %226 = vmatpush1.msra.mxu0 0.0
    %227 = vmatprep.subr.mxu0 0.0
    %228 = vmatpush1.msra.mxu0 0.0
    %229 = vmatprep.subr.mxu0 0.0
    %230 = vmatpush1.msra.mxu0 0.0
    %231 = vmatprep.subr.mxu0 0.0
    %232 = vmatpush1.msra.mxu0 0.0
    %233 = vmatprep.subr.mxu0 0.0
    %234 = vmatpush1.msra.mxu0 0.0
    %235 = vmatprep.subr.mxu0 0.0
    %236 = vmatpush1.msra.mxu0 0.0
    %237 = vmatprep.subr.mxu0 0.0
    %238 = vmatpush1.msra.mxu0 0.0
    %239 = vmatprep.subr.mxu0 0.0
    %240 = vmatpush1.msra.mxu0 0.0
    %241 = vmatprep.subr.mxu0 0.0
    %242 = vmatpush1.msra.mxu0 0.0
    %243 = vmatprep.subr.mxu0 0.0
    %244 = vmatpush1.msra.mxu0 0.0
    %245 = vmatprep.subr.mxu0 0.0
    %246 = vmatpush1.msra.mxu0 0.0
    %247 = vmatprep.subr.mxu0 0.0
    %248 = vmatpush1.msra.mxu0 0.0
    %249 = vmatprep.subr.mxu0 0.0
    %250 = vmatpush1.msra.mxu0 0.0
    %251 = vmatprep.subr.mxu0 0.0
    %252 = vmatpush1.msra.mxu0 0.0
    %253 = vmatprep.subr.mxu0 0.0
    %254 = vmatpush1.msra.mxu0 0.0
    %255 = vmatprep.subr.mxu0 0.0
    %256 = vmatpush1.msra.mxu0 0.0
    %257 = vmatprep.subr.mxu0 0.0
    %258 = vmatpush1.msra.mxu0 0.0
    %259 = vmatprep.subr.mxu0 0.0
    %260 = vmatpush1.msra.mxu0 0.0
    %261 = vmatprep.subr.mxu0 0.0
    %262 = vmatpush1.msra.mxu0 0.0
    %263 = vmatprep.subr.mxu0 0.0
    %264 = vmatpush1.msra.mxu0 0.0
    %265 = vmatprep.subr.mxu0 0.0
    %266 = vmatpush1.msra.mxu0 0.0
    %267 = vmatprep.subr.mxu0 0.0
    %268 = vmatpush1.msra.mxu0 0.0
    %269 = vmatprep.subr.mxu0 0.0
    %270 = vmatpush1.msra.mxu0 0.0
    %271 = vmatprep.subr.mxu0 0.0
    %272 = vmatpush1.msra.mxu0 0.0
    %273 = vmatprep.subr.mxu0 0.0
    %274 = vmatpush1.msra.mxu0 0.0
    %275 = vmatprep.subr.mxu0 0.0
    %276 = vmatpush1.msra.mxu0 0.0
    %277 = vmatprep.subr.mxu0 0.0
    %278 = vmatpush1.msra.mxu0 0.0
    %279 = vmatprep.mubr.f32.mxu0 0.0
    %280 = vmatmul.mubr.f32.gmra.mrb[0].mxu0 %v210
    %v281 = vpop.f32.mrb[0].mxu0
    %v282 = vadd.f32 %v207, %v281
    %v283 = vpop.f32.mrb[0].mxu0
    %284 = vmatprep.mubr.f32.mxu0 0.0
    %285 = vmatmul.mubr.f32.gmra.mrb[0].mxu0 %v213
    %v286 = vpop.f32.mrb[0].mxu0
    %v287 = vadd.f32 %v207, %v286
    %v288 = vpop.f32.mrb[0].mxu0
    %289 = vdwg.mxu0
    %291 = vrot.lane.b32.xlu0 %v190, 120
    %v292 = vpop.permute.xlu0 %291
    %293 = vrot.lane.b32.xlu0 %v190, 112
    %v294 = vpop.permute.xlu0 %293
    %295 = vrot.lane.b32.xlu0 %v190, 104
    %v296 = vpop.permute.xlu0 %295
    %298 = vrot.lane.b32.xlu0 %v282, 120
    %v299 = vpop.permute.xlu0 %298
    %301 = vrot.lane.b32.xlu0 %v282, 112
    %v302 = vpop.permute.xlu0 %301
    %304 = vrot.lane.b32.xlu0 %v282, 104
    %v305 = vpop.permute.xlu0 %304
    %307 = vrot.lane.b32.xlu0 %v190, 96
    %v308 = vpop.permute.xlu0 %307
    %309 = vrot.lane.b32.xlu0 %v292, 96
    %v310 = vpop.permute.xlu0 %309
    %311 = vrot.lane.b32.xlu0 %v294, 96
    %v312 = vpop.permute.xlu0 %311
    %313 = vrot.lane.b32.xlu0 %v296, 96
    %v314 = vpop.permute.xlu0 %313
    %319 = vxpose.xlu0.b32.start [1/16] %v308, 128
    %320 = vxpose.xlu0.b32.cont [2/16] 0.0, 128
    %321 = vxpose.xlu0.b32.cont [3/16] 0.0, 128
    %322 = vxpose.xlu0.b32.cont [4/16] 0.0, 128
    %323 = vxpose.xlu0.b32.cont [5/16] 0.0, 128
    %324 = vxpose.xlu0.b32.cont [6/16] 0.0, 128
    %325 = vxpose.xlu0.b32.cont [7/16] 0.0, 128
    %326 = vxpose.xlu0.b32.cont [8/16] 0.0, 128
    %327 = vxpose.xlu0.b32.cont [9/16] 0.0, 128
    %328 = vxpose.xlu0.b32.cont [10/16] 0.0, 128
    %329 = vxpose.xlu0.b32.cont [11/16] 0.0, 128
    %330 = vxpose.xlu0.b32.cont [12/16] 0.0, 128
    %331 = vxpose.xlu0.b32.cont [13/16] 0.0, 128
    %332 = vxpose.xlu0.b32.cont [14/16] 0.0, 128
    %333 = vxpose.xlu0.b32.cont [15/16] 0.0, 128
    %334 = vxpose.xlu0.b32.end [16/16] 0.0, 128
    %v335 = vpop.trf.xlu0
    %v336 = vpop.trf.xlu0
    %v337 = vpop.trf.xlu0
    %v338 = vpop.trf.xlu0
    %v339 = vpop.trf.xlu0
    %v340 = vpop.trf.xlu0
    %v341 = vpop.trf.xlu0
    %v342 = vpop.trf.xlu0
    %v343 = vpop.trf.xlu0
    %v344 = vpop.trf.xlu0
    %v345 = vpop.trf.xlu0
    %v346 = vpop.trf.xlu0
    %v347 = vpop.trf.xlu0
    %v348 = vpop.trf.xlu0
    %v349 = vpop.trf.xlu0
    %v350 = vpop.trf.xlu0
    %351 = vxpose.xlu0.b32.start [1/16] %v310, 128
    %352 = vxpose.xlu0.b32.cont [2/16] 0.0, 128
    %353 = vxpose.xlu0.b32.cont [3/16] 0.0, 128
    %354 = vxpose.xlu0.b32.cont [4/16] 0.0, 128
    %355 = vxpose.xlu0.b32.cont [5/16] 0.0, 128
    %356 = vxpose.xlu0.b32.cont [6/16] 0.0, 128
    %357 = vxpose.xlu0.b32.cont [7/16] 0.0, 128
    %358 = vxpose.xlu0.b32.cont [8/16] 0.0, 128
    %359 = vxpose.xlu0.b32.cont [9/16] 0.0, 128
    %360 = vxpose.xlu0.b32.cont [10/16] 0.0, 128
    %361 = vxpose.xlu0.b32.cont [11/16] 0.0, 128
    %362 = vxpose.xlu0.b32.cont [12/16] 0.0, 128
    %363 = vxpose.xlu0.b32.cont [13/16] 0.0, 128
    %364 = vxpose.xlu0.b32.cont [14/16] 0.0, 128
    %365 = vxpose.xlu0.b32.cont [15/16] 0.0, 128
    %366 = vxpose.xlu0.b32.end [16/16] 0.0, 128
    %v367 = vpop.trf.xlu0
    %v368 = vpop.trf.xlu0
    %v369 = vpop.trf.xlu0
    %v370 = vpop.trf.xlu0
    %v371 = vpop.trf.xlu0
    %v372 = vpop.trf.xlu0
    %v373 = vpop.trf.xlu0
    %v374 = vpop.trf.xlu0
    %v375 = vpop.trf.xlu0
    %v376 = vpop.trf.xlu0
    %v377 = vpop.trf.xlu0
    %v378 = vpop.trf.xlu0
    %v379 = vpop.trf.xlu0
    %v380 = vpop.trf.xlu0
    %v381 = vpop.trf.xlu0
    %v382 = vpop.trf.xlu0
    %383 = vxpose.xlu0.b32.start [1/16] %v312, 128
    %384 = vxpose.xlu0.b32.cont [2/16] 0.0, 128
    %385 = vxpose.xlu0.b32.cont [3/16] 0.0, 128
    %386 = vxpose.xlu0.b32.cont [4/16] 0.0, 128
    %387 = vxpose.xlu0.b32.cont [5/16] 0.0, 128
    %388 = vxpose.xlu0.b32.cont [6/16] 0.0, 128
    %389 = vxpose.xlu0.b32.cont [7/16] 0.0, 128
    %390 = vxpose.xlu0.b32.cont [8/16] 0.0, 128
    %391 = vxpose.xlu0.b32.cont [9/16] 0.0, 128
    %392 = vxpose.xlu0.b32.cont [10/16] 0.0, 128
    %393 = vxpose.xlu0.b32.cont [11/16] 0.0, 128
    %394 = vxpose.xlu0.b32.cont [12/16] 0.0, 128
    %395 = vxpose.xlu0.b32.cont [13/16] 0.0, 128
    %396 = vxpose.xlu0.b32.cont [14/16] 0.0, 128
    %397 = vxpose.xlu0.b32.cont [15/16] 0.0, 128
    %398 = vxpose.xlu0.b32.end [16/16] 0.0, 128
    %v399 = vpop.trf.xlu0
    %v400 = vpop.trf.xlu0
    %v401 = vpop.trf.xlu0
    %v402 = vpop.trf.xlu0
    %v403 = vpop.trf.xlu0
    %v404 = vpop.trf.xlu0
    %v405 = vpop.trf.xlu0
    %v406 = vpop.trf.xlu0
    %v407 = vpop.trf.xlu0
    %v408 = vpop.trf.xlu0
    %v409 = vpop.trf.xlu0
    %v410 = vpop.trf.xlu0
    %v411 = vpop.trf.xlu0
    %v412 = vpop.trf.xlu0
    %v413 = vpop.trf.xlu0
    %v414 = vpop.trf.xlu0
    %415 = vxpose.xlu0.b32.start [1/16] %v314, 128
    %416 = vxpose.xlu0.b32.cont [2/16] 0.0, 128
    %417 = vxpose.xlu0.b32.cont [3/16] 0.0, 128
    %418 = vxpose.xlu0.b32.cont [4/16] 0.0, 128
    %419 = vxpose.xlu0.b32.cont [5/16] 0.0, 128
    %420 = vxpose.xlu0.b32.cont [6/16] 0.0, 128
    %421 = vxpose.xlu0.b32.cont [7/16] 0.0, 128
    %422 = vxpose.xlu0.b32.cont [8/16] 0.0, 128
    %423 = vxpose.xlu0.b32.cont [9/16] 0.0, 128
    %424 = vxpose.xlu0.b32.cont [10/16] 0.0, 128
    %425 = vxpose.xlu0.b32.cont [11/16] 0.0, 128
    %426 = vxpose.xlu0.b32.cont [12/16] 0.0, 128
    %427 = vxpose.xlu0.b32.cont [13/16] 0.0, 128
    %428 = vxpose.xlu0.b32.cont [14/16] 0.0, 128
    %429 = vxpose.xlu0.b32.cont [15/16] 0.0, 128
    %430 = vxpose.xlu0.b32.end [16/16] 0.0, 128
    %v431 = vpop.trf.xlu0
    %v432 = vpop.trf.xlu0
    %v433 = vpop.trf.xlu0
    %v434 = vpop.trf.xlu0
    %v435 = vpop.trf.xlu0
    %v436 = vpop.trf.xlu0
    %v437 = vpop.trf.xlu0
    %v438 = vpop.trf.xlu0
    %v439 = vpop.trf.xlu0
    %v440 = vpop.trf.xlu0
    %v441 = vpop.trf.xlu0
    %v442 = vpop.trf.xlu0
    %v443 = vpop.trf.xlu0
    %v444 = vpop.trf.xlu0
    %v445 = vpop.trf.xlu0
    %v446 = vpop.trf.xlu0
    %vm447 = vcmask 64512
    %v448 = vsel %vm447, %v190, 0
    %450 = vmatprep.subr.mxu0 0.0
    %451 = vmatpush1.msra.mxu0 %v335
    %452 = vmatprep.subr.mxu0 0.0
    %453 = vmatpush1.msra.mxu0 0.0
    %454 = vmatprep.subr.mxu0 0.0
    %455 = vmatpush1.msra.mxu0 0.0
    %456 = vmatprep.subr.mxu0 0.0
    %457 = vmatpush1.msra.mxu0 0.0
    %458 = vmatprep.subr.mxu0 0.0
    %459 = vmatpush1.msra.mxu0 0.0
    %460 = vmatprep.subr.mxu0 0.0
    %461 = vmatpush1.msra.mxu0 0.0
    %462 = vmatprep.subr.mxu0 0.0
    %463 = vmatpush1.msra.mxu0 0.0
    %464 = vmatprep.subr.mxu0 0.0
    %465 = vmatpush1.msra.mxu0 0.0
    %466 = vmatprep.subr.mxu0 0.0
    %467 = vmatpush1.msra.mxu0 0.0
    %468 = vmatprep.subr.mxu0 0.0
    %469 = vmatpush1.msra.mxu0 0.0
    %470 = vmatprep.subr.mxu0 0.0
    %471 = vmatpush1.msra.mxu0 0.0
    %472 = vmatprep.subr.mxu0 0.0
    %473 = vmatpush1.msra.mxu0 0.0
    %474 = vmatprep.subr.mxu0 0.0
    %475 = vmatpush1.msra.mxu0 0.0
    %476 = vmatprep.subr.mxu0 0.0
    %477 = vmatpush1.msra.mxu0 0.0
    %478 = vmatprep.subr.mxu0 0.0
    %479 = vmatpush1.msra.mxu0 0.0
    %480 = vmatprep.subr.mxu0 0.0
    %481 = vmatpush1.msra.mxu0 0.0
    %482 = vmatprep.subr.mxu0 0.0
    %483 = vmatpush1.msra.mxu0 0.0
    %484 = vmatprep.subr.mxu0 0.0
    %485 = vmatpush1.msra.mxu0 0.0
    %486 = vmatprep.subr.mxu0 0.0
    %487 = vmatpush1.msra.mxu0 0.0
    %488 = vmatprep.subr.mxu0 0.0
    %489 = vmatpush1.msra.mxu0 0.0
    %490 = vmatprep.subr.mxu0 0.0
    %491 = vmatpush1.msra.mxu0 0.0
    %492 = vmatprep.subr.mxu0 0.0
    %493 = vmatpush1.msra.mxu0 0.0
    %494 = vmatprep.subr.mxu0 0.0
    %495 = vmatpush1.msra.mxu0 0.0
    %496 = vmatprep.subr.mxu0 0.0
    %497 = vmatpush1.msra.mxu0 0.0
    %498 = vmatprep.subr.mxu0 0.0
    %499 = vmatpush1.msra.mxu0 0.0
    %500 = vmatprep.subr.mxu0 0.0
    %501 = vmatpush1.msra.mxu0 0.0
    %502 = vmatprep.subr.mxu0 0.0
    %503 = vmatpush1.msra.mxu0 0.0
    %504 = vmatprep.subr.mxu0 0.0
    %505 = vmatpush1.msra.mxu0 0.0
    %506 = vmatprep.subr.mxu0 0.0
    %507 = vmatpush1.msra.mxu0 0.0
    %508 = vmatprep.subr.mxu0 0.0
    %509 = vmatpush1.msra.mxu0 0.0
    %510 = vmatprep.subr.mxu0 0.0
    %511 = vmatpush1.msra.mxu0 0.0
    %512 = vmatprep.subr.mxu0 0.0
    %513 = vmatpush1.msra.mxu0 0.0
    %514 = vmatprep.mubr.f32.mxu0 0.0
    %515 = vmatmul.mubr.f32.gmra.mrb[0].mxu0 %v448
    %v516 = vpop.f32.mrb[0].mxu0
    %v517 = vadd.f32 0.0, %v516
    %v518 = vpop.f32.mrb[0].mxu0
    %519 = vdwg.mxu0
    %v520 = vsel %vm447, %v292, 0
    %522 = vmatprep.subr.mxu0 0.0
    %523 = vmatpush1.msra.mxu0 %v367
    %524 = vmatprep.subr.mxu0 0.0
    %525 = vmatpush1.msra.mxu0 0.0
    %526 = vmatprep.subr.mxu0 0.0
    %527 = vmatpush1.msra.mxu0 0.0
    %528 = vmatprep.subr.mxu0 0.0
    %529 = vmatpush1.msra.mxu0 0.0
    %530 = vmatprep.subr.mxu0 0.0
    %531 = vmatpush1.msra.mxu0 0.0
    %532 = vmatprep.subr.mxu0 0.0
    %533 = vmatpush1.msra.mxu0 0.0
    %534 = vmatprep.subr.mxu0 0.0
    %535 = vmatpush1.msra.mxu0 0.0
    %536 = vmatprep.subr.mxu0 0.0
    %537 = vmatpush1.msra.mxu0 0.0
    %538 = vmatprep.subr.mxu0 0.0
    %539 = vmatpush1.msra.mxu0 0.0
    %540 = vmatprep.subr.mxu0 0.0
    %541 = vmatpush1.msra.mxu0 0.0
    %542 = vmatprep.subr.mxu0 0.0
    %543 = vmatpush1.msra.mxu0 0.0
    %544 = vmatprep.subr.mxu0 0.0
    %545 = vmatpush1.msra.mxu0 0.0
    %546 = vmatprep.subr.mxu0 0.0
    %547 = vmatpush1.msra.mxu0 0.0
    %548 = vmatprep.subr.mxu0 0.0
    %549 = vmatpush1.msra.mxu0 0.0
    %550 = vmatprep.subr.mxu0 0.0
    %551 = vmatpush1.msra.mxu0 0.0
    %552 = vmatprep.subr.mxu0 0.0
    %553 = vmatpush1.msra.mxu0 0.0
    %554 = vmatprep.subr.mxu0 0.0
    %555 = vmatpush1.msra.mxu0 0.0
    %556 = vmatprep.subr.mxu0 0.0
    %557 = vmatpush1.msra.mxu0 0.0
    %558 = vmatprep.subr.mxu0 0.0
    %559 = vmatpush1.msra.mxu0 0.0
    %560 = vmatprep.subr.mxu0 0.0
    %561 = vmatpush1.msra.mxu0 0.0
    %562 = vmatprep.subr.mxu0 0.0
    %563 = vmatpush1.msra.mxu0 0.0
    %564 = vmatprep.subr.mxu0 0.0
    %565 = vmatpush1.msra.mxu0 0.0
    %566 = vmatprep.subr.mxu0 0.0
    %567 = vmatpush1.msra.mxu0 0.0
    %568 = vmatprep.subr.mxu0 0.0
    %569 = vmatpush1.msra.mxu0 0.0
    %570 = vmatprep.subr.mxu0 0.0
    %571 = vmatpush1.msra.mxu0 0.0
    %572 = vmatprep.subr.mxu0 0.0
    %573 = vmatpush1.msra.mxu0 0.0
    %574 = vmatprep.subr.mxu0 0.0
    %575 = vmatpush1.msra.mxu0 0.0
    %576 = vmatprep.subr.mxu0 0.0
    %577 = vmatpush1.msra.mxu0 0.0
    %578 = vmatprep.subr.mxu0 0.0
    %579 = vmatpush1.msra.mxu0 0.0
    %580 = vmatprep.subr.mxu0 0.0
    %581 = vmatpush1.msra.mxu0 0.0
    %582 = vmatprep.subr.mxu0 0.0
    %583 = vmatpush1.msra.mxu0 0.0
    %584 = vmatprep.subr.mxu0 0.0
    %585 = vmatpush1.msra.mxu0 0.0
    %586 = vmatprep.mubr.f32.mxu0 0.0
    %587 = vmatmul.mubr.f32.gmra.mrb[0].mxu0 %v520
    %v588 = vpop.f32.mrb[0].mxu0
    %v589 = vadd.f32 0.0, %v588
    %v590 = vpop.f32.mrb[0].mxu0
    %591 = vdwg.mxu0
    %v592 = vsel %vm447, %v294, 0
    %594 = vmatprep.subr.mxu0 0.0
    %595 = vmatpush1.msra.mxu0 %v399
    %596 = vmatprep.subr.mxu0 0.0
    %597 = vmatpush1.msra.mxu0 0.0
    %598 = vmatprep.subr.mxu0 0.0
    %599 = vmatpush1.msra.mxu0 0.0
    %600 = vmatprep.subr.mxu0 0.0
    %601 = vmatpush1.msra.mxu0 0.0
    %602 = vmatprep.subr.mxu0 0.0
    %603 = vmatpush1.msra.mxu0 0.0
    %604 = vmatprep.subr.mxu0 0.0
    %605 = vmatpush1.msra.mxu0 0.0
    %606 = vmatprep.subr.mxu0 0.0
    %607 = vmatpush1.msra.mxu0 0.0
    %608 = vmatprep.subr.mxu0 0.0
    %609 = vmatpush1.msra.mxu0 0.0
    %610 = vmatprep.subr.mxu0 0.0
    %611 = vmatpush1.msra.mxu0 0.0
    %612 = vmatprep.subr.mxu0 0.0
    %613 = vmatpush1.msra.mxu0 0.0
    %614 = vmatprep.subr.mxu0 0.0
    %615 = vmatpush1.msra.mxu0 0.0
    %616 = vmatprep.subr.mxu0 0.0
    %617 = vmatpush1.msra.mxu0 0.0
    %618 = vmatprep.subr.mxu0 0.0
    %619 = vmatpush1.msra.mxu0 0.0
    %620 = vmatprep.subr.mxu0 0.0
    %621 = vmatpush1.msra.mxu0 0.0
    %622 = vmatprep.subr.mxu0 0.0
    %623 = vmatpush1.msra.mxu0 0.0
    %624 = vmatprep.subr.mxu0 0.0
    %625 = vmatpush1.msra.mxu0 0.0
    %626 = vmatprep.subr.mxu0 0.0
    %627 = vmatpush1.msra.mxu0 0.0
    %628 = vmatprep.subr.mxu0 0.0
    %629 = vmatpush1.msra.mxu0 0.0
    %630 = vmatprep.subr.mxu0 0.0
    %631 = vmatpush1.msra.mxu0 0.0
    %632 = vmatprep.subr.mxu0 0.0
    %633 = vmatpush1.msra.mxu0 0.0
    %634 = vmatprep.subr.mxu0 0.0
    %635 = vmatpush1.msra.mxu0 0.0
    %636 = vmatprep.subr.mxu0 0.0
    %637 = vmatpush1.msra.mxu0 0.0
    %638 = vmatprep.subr.mxu0 0.0
    %639 = vmatpush1.msra.mxu0 0.0
    %640 = vmatprep.subr.mxu0 0.0
    %641 = vmatpush1.msra.mxu0 0.0
    %642 = vmatprep.subr.mxu0 0.0
    %643 = vmatpush1.msra.mxu0 0.0
    %644 = vmatprep.subr.mxu0 0.0
    %645 = vmatpush1.msra.mxu0 0.0
    %646 = vmatprep.subr.mxu0 0.0
    %647 = vmatpush1.msra.mxu0 0.0
    %648 = vmatprep.subr.mxu0 0.0
    %649 = vmatpush1.msra.mxu0 0.0
    %650 = vmatprep.subr.mxu0 0.0
    %651 = vmatpush1.msra.mxu0 0.0
    %652 = vmatprep.subr.mxu0 0.0
    %653 = vmatpush1.msra.mxu0 0.0
    %654 = vmatprep.subr.mxu0 0.0
    %655 = vmatpush1.msra.mxu0 0.0
    %656 = vmatprep.subr.mxu0 0.0
    %657 = vmatpush1.msra.mxu0 0.0
    %658 = vmatprep.mubr.f32.mxu0 0.0
    %659 = vmatmul.mubr.f32.gmra.mrb[0].mxu0 %v592
    %v660 = vpop.f32.mrb[0].mxu0
    %v661 = vadd.f32 0.0, %v660
    %v662 = vpop.f32.mrb[0].mxu0
    %663 = vdwg.mxu0
    %v664 = vsel %vm447, %v296, 0
    %666 = vmatprep.subr.mxu0 0.0
    %667 = vmatpush1.msra.mxu0 %v431
    %668 = vmatprep.subr.mxu0 0.0
    %669 = vmatpush1.msra.mxu0 0.0
    %670 = vmatprep.subr.mxu0 0.0
    %671 = vmatpush1.msra.mxu0 0.0
    %672 = vmatprep.subr.mxu0 0.0
    %673 = vmatpush1.msra.mxu0 0.0
    %674 = vmatprep.subr.mxu0 0.0
    %675 = vmatpush1.msra.mxu0 0.0
    %676 = vmatprep.subr.mxu0 0.0
    %677 = vmatpush1.msra.mxu0 0.0
    %678 = vmatprep.subr.mxu0 0.0
    %679 = vmatpush1.msra.mxu0 0.0
    %680 = vmatprep.subr.mxu0 0.0
    %681 = vmatpush1.msra.mxu0 0.0
    %682 = vmatprep.subr.mxu0 0.0
    %683 = vmatpush1.msra.mxu0 0.0
    %684 = vmatprep.subr.mxu0 0.0
    %685 = vmatpush1.msra.mxu0 0.0
    %686 = vmatprep.subr.mxu0 0.0
    %687 = vmatpush1.msra.mxu0 0.0
    %688 = vmatprep.subr.mxu0 0.0
    %689 = vmatpush1.msra.mxu0 0.0
    %690 = vmatprep.subr.mxu0 0.0
    %691 = vmatpush1.msra.mxu0 0.0
    %692 = vmatprep.subr.mxu0 0.0
    %693 = vmatpush1.msra.mxu0 0.0
    %694 = vmatprep.subr.mxu0 0.0
    %695 = vmatpush1.msra.mxu0 0.0
    %696 = vmatprep.subr.mxu0 0.0
    %697 = vmatpush1.msra.mxu0 0.0
    %698 = vmatprep.subr.mxu0 0.0
    %699 = vmatpush1.msra.mxu0 0.0
    %700 = vmatprep.subr.mxu0 0.0
    %701 = vmatpush1.msra.mxu0 0.0
    %702 = vmatprep.subr.mxu0 0.0
    %703 = vmatpush1.msra.mxu0 0.0
    %704 = vmatprep.subr.mxu0 0.0
    %705 = vmatpush1.msra.mxu0 0.0
    %706 = vmatprep.subr.mxu0 0.0
    %707 = vmatpush1.msra.mxu0 0.0
    %708 = vmatprep.subr.mxu0 0.0
    %709 = vmatpush1.msra.mxu0 0.0
    %710 = vmatprep.subr.mxu0 0.0
    %711 = vmatpush1.msra.mxu0 0.0
    %712 = vmatprep.subr.mxu0 0.0
    %713 = vmatpush1.msra.mxu0 0.0
    %714 = vmatprep.subr.mxu0 0.0
    %715 = vmatpush1.msra.mxu0 0.0
    %716 = vmatprep.subr.mxu0 0.0
    %717 = vmatpush1.msra.mxu0 0.0
    %718 = vmatprep.subr.mxu0 0.0
    %719 = vmatpush1.msra.mxu0 0.0
    %720 = vmatprep.subr.mxu0 0.0
    %721 = vmatpush1.msra.mxu0 0.0
    %722 = vmatprep.subr.mxu0 0.0
    %723 = vmatpush1.msra.mxu0 0.0
    %724 = vmatprep.subr.mxu0 0.0
    %725 = vmatpush1.msra.mxu0 0.0
    %726 = vmatprep.subr.mxu0 0.0
    %727 = vmatpush1.msra.mxu0 0.0
    %728 = vmatprep.subr.mxu0 0.0
    %729 = vmatpush1.msra.mxu0 0.0
    %730 = vmatprep.mubr.f32.mxu0 0.0
    %731 = vmatmul.mubr.f32.gmra.mrb[0].mxu0 %v664
    %v732 = vpop.f32.mrb[0].mxu0
    %v733 = vadd.f32 0.0, %v732
    %v734 = vpop.f32.mrb[0].mxu0
    %735 = vdwg.mxu0
    %v736 = vsel %vm447, %v517, -inf
    %737 = vmax.xlane.f32.xlu0 %v736
    %v738 = vpop.xlane.xlu0 %737
    %v739 = vsel %vm447, %v589, -inf
    %740 = vmax.xlane.f32.xlu0 %v739
    %v741 = vpop.xlane.xlu0 %740
    %v742 = vsel %vm447, %v661, -inf
    %743 = vmax.xlane.f32.xlu0 %v742
    %v744 = vpop.xlane.xlu0 %743
    %v745 = vsel %vm447, %v733, -inf
    %746 = vmax.xlane.f32.xlu0 %v745
    %v747 = vpop.xlane.xlu0 %746
    %v748 = vsub.f32 %v517, %v738
    %v749 = vsub.f32 %v589, %v741
    %v750 = vsub.f32 %v661, %v744
    %v751 = vsub.f32 %v733, %v747
    %v752 = vmul.f32 %v748, 1.442695
    %v753 = vpow.pop %v752
    %v754 = vmul.f32 %v749, 1.442695
    %v755 = vpow.pop %v754
    %v756 = vmul.f32 %v750, 1.442695
    %v757 = vpow.pop %v756
    %v758 = vmul.f32 %v751, 1.442695
    %v759 = vpow.pop %v758
    %v760 = vsel %vm447, %v753, 0.0
    %761 = vadd.xlane.f32.xlu0 %v760
    %v762 = vpop.xlane.xlu0 %761
    %v763 = vsel %vm447, %v755, 0.0
    %764 = vadd.xlane.f32.xlu0 %v763
    %v765 = vpop.xlane.xlu0 %764
    %v766 = vsel %vm447, %v757, 0.0
    %767 = vadd.xlane.f32.xlu0 %v766
    %v768 = vpop.xlane.xlu0 %767
    %v769 = vsel %vm447, %v759, 0.0
    %770 = vadd.xlane.f32.xlu0 %v769
    %v771 = vpop.xlane.xlu0 %770
    %v772 = vrcp.pop %v762
    %v773 = vrcp.pop %v765
    %v774 = vrcp.pop %v768
    %v775 = vrcp.pop %v771
    %v776 = vmul.f32 %v753, %v772
    %v777 = vmul.f32 %v755, %v773
    %v778 = vmul.f32 %v757, %v774
    %v779 = vmul.f32 %v759, %v775
    %780 = vst.msk [vmem:[#allocation12] sm:$0xff] %vm447, %v776
    %781 = vst.msk [vmem:[#allocation12 + $0x8] sm:$0xff] %vm447, %v777
    %782 = vst.msk [vmem:[#allocation12 + $0x10] sm:$0xff] %vm447, %v778
    %783 = vst.msk [vmem:[#allocation12 + $0x18] sm:$0xff] %vm447, %v779
    %784 = vxpose.xlu0.b32.start [1/16] %v282, 128
    %785 = vxpose.xlu0.b32.cont [2/16] 0.0, 128
    %786 = vxpose.xlu0.b32.cont [3/16] 0.0, 128
    %787 = vxpose.xlu0.b32.cont [4/16] 0.0, 128
    %788 = vxpose.xlu0.b32.cont [5/16] 0.0, 128
    %789 = vxpose.xlu0.b32.cont [6/16] 0.0, 128
    %790 = vxpose.xlu0.b32.cont [7/16] 0.0, 128
    %791 = vxpose.xlu0.b32.cont [8/16] 0.0, 128
    %792 = vxpose.xlu0.b32.cont [9/16] 0.0, 128
    %793 = vxpose.xlu0.b32.cont [10/16] 0.0, 128
    %794 = vxpose.xlu0.b32.cont [11/16] 0.0, 128
    %795 = vxpose.xlu0.b32.cont [12/16] 0.0, 128
    %796 = vxpose.xlu0.b32.cont [13/16] 0.0, 128
    %797 = vxpose.xlu0.b32.cont [14/16] 0.0, 128
    %798 = vxpose.xlu0.b32.cont [15/16] 0.0, 128
    %799 = vxpose.xlu0.b32.end [16/16] 0.0, 128
    %v800 = vpop.trf.xlu0
    %v801 = vpop.trf.xlu0
    %v802 = vpop.trf.xlu0
    %v803 = vpop.trf.xlu0
    %v804 = vpop.trf.xlu0
    %v805 = vpop.trf.xlu0
    %v806 = vpop.trf.xlu0
    %v807 = vpop.trf.xlu0
    %v808 = vpop.trf.xlu0
    %v809 = vpop.trf.xlu0
    %v810 = vpop.trf.xlu0
    %v811 = vpop.trf.xlu0
    %v812 = vpop.trf.xlu0
    %v813 = vpop.trf.xlu0
    %v814 = vpop.trf.xlu0
    %v815 = vpop.trf.xlu0
    %816 = vxpose.xlu0.b32.start [1/16] %v299, 128
    %817 = vxpose.xlu0.b32.cont [2/16] 0.0, 128
    %818 = vxpose.xlu0.b32.cont [3/16] 0.0, 128
    %819 = vxpose.xlu0.b32.cont [4/16] 0.0, 128
    %820 = vxpose.xlu0.b32.cont [5/16] 0.0, 128
    %821 = vxpose.xlu0.b32.cont [6/16] 0.0, 128
    %822 = vxpose.xlu0.b32.cont [7/16] 0.0, 128
    %823 = vxpose.xlu0.b32.cont [8/16] 0.0, 128
    %824 = vxpose.xlu0.b32.cont [9/16] 0.0, 128
    %825 = vxpose.xlu0.b32.cont [10/16] 0.0, 128
    %826 = vxpose.xlu0.b32.cont [11/16] 0.0, 128
    %827 = vxpose.xlu0.b32.cont [12/16] 0.0, 128
    %828 = vxpose.xlu0.b32.cont [13/16] 0.0, 128
    %829 = vxpose.xlu0.b32.cont [14/16] 0.0, 128
    %830 = vxpose.xlu0.b32.cont [15/16] 0.0, 128
    %831 = vxpose.xlu0.b32.end [16/16] 0.0, 128
    %v832 = vpop.trf.xlu0
    %v833 = vpop.trf.xlu0
    %v834 = vpop.trf.xlu0
    %v835 = vpop.trf.xlu0
    %v836 = vpop.trf.xlu0
    %v837 = vpop.trf.xlu0
    %v838 = vpop.trf.xlu0
    %v839 = vpop.trf.xlu0
    %v840 = vpop.trf.xlu0
    %v841 = vpop.trf.xlu0
    %v842 = vpop.trf.xlu0
    %v843 = vpop.trf.xlu0
    %v844 = vpop.trf.xlu0
    %v845 = vpop.trf.xlu0
    %v846 = vpop.trf.xlu0
    %v847 = vpop.trf.xlu0
    %848 = vxpose.xlu0.b32.start [1/16] %v302, 128
    %849 = vxpose.xlu0.b32.cont [2/16] 0.0, 128
    %850 = vxpose.xlu0.b32.cont [3/16] 0.0, 128
    %851 = vxpose.xlu0.b32.cont [4/16] 0.0, 128
    %852 = vxpose.xlu0.b32.cont [5/16] 0.0, 128
    %853 = vxpose.xlu0.b32.cont [6/16] 0.0, 128
    %854 = vxpose.xlu0.b32.cont [7/16] 0.0, 128
    %855 = vxpose.xlu0.b32.cont [8/16] 0.0, 128
    %856 = vxpose.xlu0.b32.cont [9/16] 0.0, 128
    %857 = vxpose.xlu0.b32.cont [10/16] 0.0, 128
    %858 = vxpose.xlu0.b32.cont [11/16] 0.0, 128
    %859 = vxpose.xlu0.b32.cont [12/16] 0.0, 128
    %860 = vxpose.xlu0.b32.cont [13/16] 0.0, 128
    %861 = vxpose.xlu0.b32.cont [14/16] 0.0, 128
    %862 = vxpose.xlu0.b32.cont [15/16] 0.0, 128
    %863 = vxpose.xlu0.b32.end [16/16] 0.0, 128
    %v864 = vpop.trf.xlu0
    %v865 = vpop.trf.xlu0
    %v866 = vpop.trf.xlu0
    %v867 = vpop.trf.xlu0
    %v868 = vpop.trf.xlu0
    %v869 = vpop.trf.xlu0
    %v870 = vpop.trf.xlu0
    %v871 = vpop.trf.xlu0
    %v872 = vpop.trf.xlu0
    %v873 = vpop.trf.xlu0
    %v874 = vpop.trf.xlu0
    %v875 = vpop.trf.xlu0
    %v876 = vpop.trf.xlu0
    %v877 = vpop.trf.xlu0
    %v878 = vpop.trf.xlu0
    %v879 = vpop.trf.xlu0
    %880 = vxpose.xlu0.b32.start [1/16] %v305, 128
    %881 = vxpose.xlu0.b32.cont [2/16] 0.0, 128
    %882 = vxpose.xlu0.b32.cont [3/16] 0.0, 128
    %883 = vxpose.xlu0.b32.cont [4/16] 0.0, 128
    %884 = vxpose.xlu0.b32.cont [5/16] 0.0, 128
    %885 = vxpose.xlu0.b32.cont [6/16] 0.0, 128
    %886 = vxpose.xlu0.b32.cont [7/16] 0.0, 128
    %887 = vxpose.xlu0.b32.cont [8/16] 0.0, 128
    %888 = vxpose.xlu0.b32.cont [9/16] 0.0, 128
    %889 = vxpose.xlu0.b32.cont [10/16] 0.0, 128
    %890 = vxpose.xlu0.b32.cont [11/16] 0.0, 128
    %891 = vxpose.xlu0.b32.cont [12/16] 0.0, 128
    %892 = vxpose.xlu0.b32.cont [13/16] 0.0, 128
    %893 = vxpose.xlu0.b32.cont [14/16] 0.0, 128
    %894 = vxpose.xlu0.b32.cont [15/16] 0.0, 128
    %895 = vxpose.xlu0.b32.end [16/16] 0.0, 128
    %v896 = vpop.trf.xlu0
    %v897 = vpop.trf.xlu0
    %v898 = vpop.trf.xlu0
    %v899 = vpop.trf.xlu0
    %v900 = vpop.trf.xlu0
    %v901 = vpop.trf.xlu0
    %v902 = vpop.trf.xlu0
    %v903 = vpop.trf.xlu0
    %v904 = vpop.trf.xlu0
    %v905 = vpop.trf.xlu0
    %v906 = vpop.trf.xlu0
    %v907 = vpop.trf.xlu0
    %v908 = vpop.trf.xlu0
    %v909 = vpop.trf.xlu0
    %v910 = vpop.trf.xlu0
    %v911 = vpop.trf.xlu0
    %v913 = vsel %vm447, %v800, 0
    %v916 = vsel %vm447, %v776, 0
    %918 = vmatprep.subr.mxu0 0.0
    %919 = vmatpush1.xpose.msra.mxu0 %v916
    %920 = vmatprep.subr.mxu0 0.0
    %921 = vmatpush1.xpose.msra.mxu0 0.0
    %922 = vmatprep.subr.mxu0 0.0
    %923 = vmatpush1.xpose.msra.mxu0 0.0
    %924 = vmatprep.subr.mxu0 0.0
    %925 = vmatpush1.xpose.msra.mxu0 0.0
    %926 = vmatprep.subr.mxu0 0.0
    %927 = vmatpush1.xpose.msra.mxu0 0.0
    %928 = vmatprep.subr.mxu0 0.0
    %929 = vmatpush1.xpose.msra.mxu0 0.0
    %930 = vmatprep.subr.mxu0 0.0
    %931 = vmatpush1.xpose.msra.mxu0 0.0
    %932 = vmatprep.subr.mxu0 0.0
    %933 = vmatpush1.xpose.msra.mxu0 0.0
    %934 = vmatprep.subr.mxu0 0.0
    %935 = vmatpush1.xpose.msra.mxu0 0.0
    %936 = vmatprep.subr.mxu0 0.0
    %937 = vmatpush1.xpose.msra.mxu0 0.0
    %938 = vmatprep.subr.mxu0 0.0
    %939 = vmatpush1.xpose.msra.mxu0 0.0
    %940 = vmatprep.subr.mxu0 0.0
    %941 = vmatpush1.xpose.msra.mxu0 0.0
    %942 = vmatprep.subr.mxu0 0.0
    %943 = vmatpush1.xpose.msra.mxu0 0.0
    %944 = vmatprep.subr.mxu0 0.0
    %945 = vmatpush1.xpose.msra.mxu0 0.0
    %946 = vmatprep.subr.mxu0 0.0
    %947 = vmatpush1.xpose.msra.mxu0 0.0
    %948 = vmatprep.subr.mxu0 0.0
    %949 = vmatpush1.xpose.msra.mxu0 0.0
    %950 = vmatprep.subr.mxu0 0.0
    %951 = vmatpush1.xpose.msra.mxu0 0.0
    %952 = vmatprep.subr.mxu0 0.0
    %953 = vmatpush1.xpose.msra.mxu0 0.0
    %954 = vmatprep.subr.mxu0 0.0
    %955 = vmatpush1.xpose.msra.mxu0 0.0
    %956 = vmatprep.subr.mxu0 0.0
    %957 = vmatpush1.xpose.msra.mxu0 0.0
    %958 = vmatprep.subr.mxu0 0.0
    %959 = vmatpush1.xpose.msra.mxu0 0.0
    %960 = vmatprep.subr.mxu0 0.0
    %961 = vmatpush1.xpose.msra.mxu0 0.0
    %962 = vmatprep.subr.mxu0 0.0
    %963 = vmatpush1.xpose.msra.mxu0 0.0
    %964 = vmatprep.subr.mxu0 0.0
    %965 = vmatpush1.xpose.msra.mxu0 0.0
    %966 = vmatprep.subr.mxu0 0.0
    %967 = vmatpush1.xpose.msra.mxu0 0.0
    %968 = vmatprep.subr.mxu0 0.0
    %969 = vmatpush1.xpose.msra.mxu0 0.0
    %970 = vmatprep.subr.mxu0 0.0
    %971 = vmatpush1.xpose.msra.mxu0 0.0
    %972 = vmatprep.subr.mxu0 0.0
    %973 = vmatpush1.xpose.msra.mxu0 0.0
    %974 = vmatprep.subr.mxu0 0.0
    %975 = vmatpush1.xpose.msra.mxu0 0.0
    %976 = vmatprep.subr.mxu0 0.0
    %977 = vmatpush1.xpose.msra.mxu0 0.0
    %978 = vmatprep.subr.mxu0 0.0
    %979 = vmatpush1.xpose.msra.mxu0 0.0
    %980 = vmatprep.subr.mxu0 0.0
    %981 = vmatpush1.xpose.msra.mxu0 0.0
    %982 = vmatprep.mubr.f32.mxu0 0.0
    %983 = vmatmul.mubr.f32.gmra.mrb[0].mxu0 %v913
    %v984 = vpop.f32.mrb[0].mxu0
    %v985 = vadd.f32 0.0, %v984
    %v986 = vpop.f32.mrb[0].mxu0
    %987 = vdwg.mxu0
    %v989 = vsel %vm447, %v832, 0
    %v992 = vsel %vm447, %v777, 0
    %994 = vmatprep.subr.mxu0 0.0
    %995 = vmatpush1.xpose.msra.mxu0 %v992
    %996 = vmatprep.subr.mxu0 0.0
    %997 = vmatpush1.xpose.msra.mxu0 0.0
    %998 = vmatprep.subr.mxu0 0.0
    %999 = vmatpush1.xpose.msra.mxu0 0.0
    %1000 = vmatprep.subr.mxu0 0.0
    %1001 = vmatpush1.xpose.msra.mxu0 0.0
    %1002 = vmatprep.subr.mxu0 0.0
    %1003 = vmatpush1.xpose.msra.mxu0 0.0
    %1004 = vmatprep.subr.mxu0 0.0
    %1005 = vmatpush1.xpose.msra.mxu0 0.0
    %1006 = vmatprep.subr.mxu0 0.0
    %1007 = vmatpush1.xpose.msra.mxu0 0.0
    %1008 = vmatprep.subr.mxu0 0.0
    %1009 = vmatpush1.xpose.msra.mxu0 0.0
    %1010 = vmatprep.subr.mxu0 0.0
    %1011 = vmatpush1.xpose.msra.mxu0 0.0
    %1012 = vmatprep.subr.mxu0 0.0
    %1013 = vmatpush1.xpose.msra.mxu0 0.0
    %1014 = vmatprep.subr.mxu0 0.0
    %1015 = vmatpush1.xpose.msra.mxu0 0.0
    %1016 = vmatprep.subr.mxu0 0.0
    %1017 = vmatpush1.xpose.msra.mxu0 0.0
    %1018 = vmatprep.subr.mxu0 0.0
    %1019 = vmatpush1.xpose.msra.mxu0 0.0
    %1020 = vmatprep.subr.mxu0 0.0
    %1021 = vmatpush1.xpose.msra.mxu0 0.0
    %1022 = vmatprep.subr.mxu0 0.0
    %1023 = vmatpush1.xpose.msra.mxu0 0.0
    %1024 = vmatprep.subr.mxu0 0.0
    %1025 = vmatpush1.xpose.msra.mxu0 0.0
    %1026 = vmatprep.subr.mxu0 0.0
    %1027 = vmatpush1.xpose.msra.mxu0 0.0
    %1028 = vmatprep.subr.mxu0 0.0
    %1029 = vmatpush1.xpose.msra.mxu0 0.0
    %1030 = vmatprep.subr.mxu0 0.0
    %1031 = vmatpush1.xpose.msra.mxu0 0.0
    %1032 = vmatprep.subr.mxu0 0.0
    %1033 = vmatpush1.xpose.msra.mxu0 0.0
    %1034 = vmatprep.subr.mxu0 0.0
    %1035 = vmatpush1.xpose.msra.mxu0 0.0
    %1036 = vmatprep.subr.mxu0 0.0
    %1037 = vmatpush1.xpose.msra.mxu0 0.0
    %1038 = vmatprep.subr.mxu0 0.0
    %1039 = vmatpush1.xpose.msra.mxu0 0.0
    %1040 = vmatprep.subr.mxu0 0.0
    %1041 = vmatpush1.xpose.msra.mxu0 0.0
    %1042 = vmatprep.subr.mxu0 0.0
    %1043 = vmatpush1.xpose.msra.mxu0 0.0
    %1044 = vmatprep.subr.mxu0 0.0
    %1045 = vmatpush1.xpose.msra.mxu0 0.0
    %1046 = vmatprep.subr.mxu0 0.0
    %1047 = vmatpush1.xpose.msra.mxu0 0.0
    %1048 = vmatprep.subr.mxu0 0.0
    %1049 = vmatpush1.xpose.msra.mxu0 0.0
    %1050 = vmatprep.subr.mxu0 0.0
    %1051 = vmatpush1.xpose.msra.mxu0 0.0
    %1052 = vmatprep.subr.mxu0 0.0
    %1053 = vmatpush1.xpose.msra.mxu0 0.0
    %1054 = vmatprep.subr.mxu0 0.0
    %1055 = vmatpush1.xpose.msra.mxu0 0.0
    %1056 = vmatprep.subr.mxu0 0.0
    %1057 = vmatpush1.xpose.msra.mxu0 0.0
    %1058 = vmatprep.mubr.f32.mxu0 0.0
    %1059 = vmatmul.mubr.f32.gmra.mrb[0].mxu0 %v989
    %v1060 = vpop.f32.mrb[0].mxu0
    %v1061 = vadd.f32 0.0, %v1060
    %v1062 = vpop.f32.mrb[0].mxu0
    %1063 = vdwg.mxu0
    %v1065 = vsel %vm447, %v864, 0
    %v1068 = vsel %vm447, %v778, 0
    %1070 = vmatprep.subr.mxu0 0.0
    %1071 = vmatpush1.xpose.msra.mxu0 %v1068
    %1072 = vmatprep.subr.mxu0 0.0
    %1073 = vmatpush1.xpose.msra.mxu0 0.0
    %1074 = vmatprep.subr.mxu0 0.0
    %1075 = vmatpush1.xpose.msra.mxu0 0.0
    %1076 = vmatprep.subr.mxu0 0.0
    %1077 = vmatpush1.xpose.msra.mxu0 0.0
    %1078 = vmatprep.subr.mxu0 0.0
    %1079 = vmatpush1.xpose.msra.mxu0 0.0
    %1080 = vmatprep.subr.mxu0 0.0
    %1081 = vmatpush1.xpose.msra.mxu0 0.0
    %1082 = vmatprep.subr.mxu0 0.0
    %1083 = vmatpush1.xpose.msra.mxu0 0.0
    %1084 = vmatprep.subr.mxu0 0.0
    %1085 = vmatpush1.xpose.msra.mxu0 0.0
    %1086 = vmatprep.subr.mxu0 0.0
    %1087 = vmatpush1.xpose.msra.mxu0 0.0
    %1088 = vmatprep.subr.mxu0 0.0
    %1089 = vmatpush1.xpose.msra.mxu0 0.0
    %1090 = vmatprep.subr.mxu0 0.0
    %1091 = vmatpush1.xpose.msra.mxu0 0.0
    %1092 = vmatprep.subr.mxu0 0.0
    %1093 = vmatpush1.xpose.msra.mxu0 0.0
    %1094 = vmatprep.subr.mxu0 0.0
    %1095 = vmatpush1.xpose.msra.mxu0 0.0
    %1096 = vmatprep.subr.mxu0 0.0
    %1097 = vmatpush1.xpose.msra.mxu0 0.0
    %1098 = vmatprep.subr.mxu0 0.0
    %1099 = vmatpush1.xpose.msra.mxu0 0.0
    %1100 = vmatprep.subr.mxu0 0.0
    %1101 = vmatpush1.xpose.msra.mxu0 0.0
    %1102 = vmatprep.subr.mxu0 0.0
    %1103 = vmatpush1.xpose.msra.mxu0 0.0
    %1104 = vmatprep.subr.mxu0 0.0
    %1105 = vmatpush1.xpose.msra.mxu0 0.0
    %1106 = vmatprep.subr.mxu0 0.0
    %1107 = vmatpush1.xpose.msra.mxu0 0.0
    %1108 = vmatprep.subr.mxu0 0.0
    %1109 = vmatpush1.xpose.msra.mxu0 0.0
    %1110 = vmatprep.subr.mxu0 0.0
    %1111 = vmatpush1.xpose.msra.mxu0 0.0
    %1112 = vmatprep.subr.mxu0 0.0
    %1113 = vmatpush1.xpose.msra.mxu0 0.0
    %1114 = vmatprep.subr.mxu0 0.0
    %1115 = vmatpush1.xpose.msra.mxu0 0.0
    %1116 = vmatprep.subr.mxu0 0.0
    %1117 = vmatpush1.xpose.msra.mxu0 0.0
    %1118 = vmatprep.subr.mxu0 0.0
    %1119 = vmatpush1.xpose.msra.mxu0 0.0
    %1120 = vmatprep.subr.mxu0 0.0
    %1121 = vmatpush1.xpose.msra.mxu0 0.0
    %1122 = vmatprep.subr.mxu0 0.0
    %1123 = vmatpush1.xpose.msra.mxu0 0.0
    %1124 = vmatprep.subr.mxu0 0.0
    %1125 = vmatpush1.xpose.msra.mxu0 0.0
    %1126 = vmatprep.subr.mxu0 0.0
    %1127 = vmatpush1.xpose.msra.mxu0 0.0
    %1128 = vmatprep.subr.mxu0 0.0
    %1129 = vmatpush1.xpose.msra.mxu0 0.0
    %1130 = vmatprep.subr.mxu0 0.0
    %1131 = vmatpush1.xpose.msra.mxu0 0.0
    %1132 = vmatprep.subr.mxu0 0.0
    %1133 = vmatpush1.xpose.msra.mxu0 0.0
    %1134 = vmatprep.mubr.f32.mxu0 0.0
    %1135 = vmatmul.mubr.f32.gmra.mrb[0].mxu0 %v1065
    %v1136 = vpop.f32.mrb[0].mxu0
    %v1137 = vadd.f32 0.0, %v1136
    %v1138 = vpop.f32.mrb[0].mxu0
    %1139 = vdwg.mxu0
    %v1141 = vsel %vm447, %v896, 0
    %v1144 = vsel %vm447, %v779, 0
    %1146 = vmatprep.subr.mxu0 0.0
    %1147 = vmatpush1.xpose.msra.mxu0 %v1144
    %1148 = vmatprep.subr.mxu0 0.0
    %1149 = vmatpush1.xpose.msra.mxu0 0.0
    %1150 = vmatprep.subr.mxu0 0.0
    %1151 = vmatpush1.xpose.msra.mxu0 0.0
    %1152 = vmatprep.subr.mxu0 0.0
    %1153 = vmatpush1.xpose.msra.mxu0 0.0
    %1154 = vmatprep.subr.mxu0 0.0
    %1155 = vmatpush1.xpose.msra.mxu0 0.0
    %1156 = vmatprep.subr.mxu0 0.0
    %1157 = vmatpush1.xpose.msra.mxu0 0.0
    %1158 = vmatprep.subr.mxu0 0.0
    %1159 = vmatpush1.xpose.msra.mxu0 0.0
    %1160 = vmatprep.subr.mxu0 0.0
    %1161 = vmatpush1.xpose.msra.mxu0 0.0
    %1162 = vmatprep.subr.mxu0 0.0
    %1163 = vmatpush1.xpose.msra.mxu0 0.0
    %1164 = vmatprep.subr.mxu0 0.0
    %1165 = vmatpush1.xpose.msra.mxu0 0.0
    %1166 = vmatprep.subr.mxu0 0.0
    %1167 = vmatpush1.xpose.msra.mxu0 0.0
    %1168 = vmatprep.subr.mxu0 0.0
    %1169 = vmatpush1.xpose.msra.mxu0 0.0
    %1170 = vmatprep.subr.mxu0 0.0
    %1171 = vmatpush1.xpose.msra.mxu0 0.0
    %1172 = vmatprep.subr.mxu0 0.0
    %1173 = vmatpush1.xpose.msra.mxu0 0.0
    %1174 = vmatprep.subr.mxu0 0.0
    %1175 = vmatpush1.xpose.msra.mxu0 0.0
    %1176 = vmatprep.subr.mxu0 0.0
    %1177 = vmatpush1.xpose.msra.mxu0 0.0
    %1178 = vmatprep.subr.mxu0 0.0
    %1179 = vmatpush1.xpose.msra.mxu0 0.0
    %1180 = vmatprep.subr.mxu0 0.0
    %1181 = vmatpush1.xpose.msra.mxu0 0.0
    %1182 = vmatprep.subr.mxu0 0.0
    %1183 = vmatpush1.xpose.msra.mxu0 0.0
    %1184 = vmatprep.subr.mxu0 0.0
    %1185 = vmatpush1.xpose.msra.mxu0 0.0
    %1186 = vmatprep.subr.mxu0 0.0
    %1187 = vmatpush1.xpose.msra.mxu0 0.0
    %1188 = vmatprep.subr.mxu0 0.0
    %1189 = vmatpush1.xpose.msra.mxu0 0.0
    %1190 = vmatprep.subr.mxu0 0.0
    %1191 = vmatpush1.xpose.msra.mxu0 0.0
    %1192 = vmatprep.subr.mxu0 0.0
    %1193 = vmatpush1.xpose.msra.mxu0 0.0
    %1194 = vmatprep.subr.mxu0 0.0
    %1195 = vmatpush1.xpose.msra.mxu0 0.0
    %1196 = vmatprep.subr.mxu0 0.0
    %1197 = vmatpush1.xpose.msra.mxu0 0.0
    %1198 = vmatprep.subr.mxu0 0.0
    %1199 = vmatpush1.xpose.msra.mxu0 0.0
    %1200 = vmatprep.subr.mxu0 0.0
    %1201 = vmatpush1.xpose.msra.mxu0 0.0
    %1202 = vmatprep.subr.mxu0 0.0
    %1203 = vmatpush1.xpose.msra.mxu0 0.0
    %1204 = vmatprep.subr.mxu0 0.0
    %1205 = vmatpush1.xpose.msra.mxu0 0.0
    %1206 = vmatprep.subr.mxu0 0.0
    %1207 = vmatpush1.xpose.msra.mxu0 0.0
    %1208 = vmatprep.subr.mxu0 0.0
    %1209 = vmatpush1.xpose.msra.mxu0 0.0
    %1210 = vmatprep.mubr.f32.mxu0 0.0
    %1211 = vmatmul.mubr.f32.gmra.mrb[0].mxu0 %v1141
    %v1212 = vpop.f32.mrb[0].mxu0
    %v1213 = vadd.f32 0.0, %v1212
    %v1214 = vpop.f32.mrb[0].mxu0
    %1215 = vdwg.mxu0
    %1216 = vxpose.xlu0.b32.start [1/16] %v985, 128
    %1217 = vxpose.xlu0.b32.cont [2/16] 0.0, 128
    %1218 = vxpose.xlu0.b32.cont [3/16] 0.0, 128
    %1219 = vxpose.xlu0.b32.cont [4/16] 0.0, 128
    %1220 = vxpose.xlu0.b32.cont [5/16] 0.0, 128
    %1221 = vxpose.xlu0.b32.cont [6/16] 0.0, 128
    %1222 = vxpose.xlu0.b32.cont [7/16] 0.0, 128
    %1223 = vxpose.xlu0.b32.cont [8/16] 0.0, 128
    %1224 = vxpose.xlu0.b32.cont [9/16] 0.0, 128
    %1225 = vxpose.xlu0.b32.cont [10/16] 0.0, 128
    %1226 = vxpose.xlu0.b32.cont [11/16] 0.0, 128
    %1227 = vxpose.xlu0.b32.cont [12/16] 0.0, 128
    %1228 = vxpose.xlu0.b32.cont [13/16] 0.0, 128
    %1229 = vxpose.xlu0.b32.cont [14/16] 0.0, 128
    %1230 = vxpose.xlu0.b32.cont [15/16] 0.0, 128
    %1231 = vxpose.xlu0.b32.end [16/16] 0.0, 128
    %v1232 = vpop.trf.xlu0
    %v1233 = vpop.trf.xlu0
    %v1234 = vpop.trf.xlu0
    %v1235 = vpop.trf.xlu0
    %v1236 = vpop.trf.xlu0
    %v1237 = vpop.trf.xlu0
    %v1238 = vpop.trf.xlu0
    %v1239 = vpop.trf.xlu0
    %v1240 = vpop.trf.xlu0
    %v1241 = vpop.trf.xlu0
    %v1242 = vpop.trf.xlu0
    %v1243 = vpop.trf.xlu0
    %v1244 = vpop.trf.xlu0
    %v1245 = vpop.trf.xlu0
    %v1246 = vpop.trf.xlu0
    %v1247 = vpop.trf.xlu0
    %1248 = vxpose.xlu0.b32.start [1/16] %v1061, 128
    %1249 = vxpose.xlu0.b32.cont [2/16] 0.0, 128
    %1250 = vxpose.xlu0.b32.cont [3/16] 0.0, 128
    %1251 = vxpose.xlu0.b32.cont [4/16] 0.0, 128
    %1252 = vxpose.xlu0.b32.cont [5/16] 0.0, 128
    %1253 = vxpose.xlu0.b32.cont [6/16] 0.0, 128
    %1254 = vxpose.xlu0.b32.cont [7/16] 0.0, 128
    %1255 = vxpose.xlu0.b32.cont [8/16] 0.0, 128
    %1256 = vxpose.xlu0.b32.cont [9/16] 0.0, 128
    %1257 = vxpose.xlu0.b32.cont [10/16] 0.0, 128
    %1258 = vxpose.xlu0.b32.cont [11/16] 0.0, 128
    %1259 = vxpose.xlu0.b32.cont [12/16] 0.0, 128
    %1260 = vxpose.xlu0.b32.cont [13/16] 0.0, 128
    %1261 = vxpose.xlu0.b32.cont [14/16] 0.0, 128
    %1262 = vxpose.xlu0.b32.cont [15/16] 0.0, 128
    %1263 = vxpose.xlu0.b32.end [16/16] 0.0, 128
    %v1264 = vpop.trf.xlu0
    %v1265 = vpop.trf.xlu0
    %v1266 = vpop.trf.xlu0
    %v1267 = vpop.trf.xlu0
    %v1268 = vpop.trf.xlu0
    %v1269 = vpop.trf.xlu0
    %v1270 = vpop.trf.xlu0
    %v1271 = vpop.trf.xlu0
    %v1272 = vpop.trf.xlu0
    %v1273 = vpop.trf.xlu0
    %v1274 = vpop.trf.xlu0
    %v1275 = vpop.trf.xlu0
    %v1276 = vpop.trf.xlu0
    %v1277 = vpop.trf.xlu0
    %v1278 = vpop.trf.xlu0
    %v1279 = vpop.trf.xlu0
    %1280 = vxpose.xlu0.b32.start [1/16] %v1137, 128
    %1281 = vxpose.xlu0.b32.cont [2/16] 0.0, 128
    %1282 = vxpose.xlu0.b32.cont [3/16] 0.0, 128
    %1283 = vxpose.xlu0.b32.cont [4/16] 0.0, 128
    %1284 = vxpose.xlu0.b32.cont [5/16] 0.0, 128
    %1285 = vxpose.xlu0.b32.cont [6/16] 0.0, 128
    %1286 = vxpose.xlu0.b32.cont [7/16] 0.0, 128
    %1287 = vxpose.xlu0.b32.cont [8/16] 0.0, 128
    %1288 = vxpose.xlu0.b32.cont [9/16] 0.0, 128
    %1289 = vxpose.xlu0.b32.cont [10/16] 0.0, 128
    %1290 = vxpose.xlu0.b32.cont [11/16] 0.0, 128
    %1291 = vxpose.xlu0.b32.cont [12/16] 0.0, 128
    %1292 = vxpose.xlu0.b32.cont [13/16] 0.0, 128
    %1293 = vxpose.xlu0.b32.cont [14/16] 0.0, 128
    %1294 = vxpose.xlu0.b32.cont [15/16] 0.0, 128
    %1295 = vxpose.xlu0.b32.end [16/16] 0.0, 128
    %v1296 = vpop.trf.xlu0
    %v1297 = vpop.trf.xlu0
    %v1298 = vpop.trf.xlu0
    %v1299 = vpop.trf.xlu0
    %v1300 = vpop.trf.xlu0
    %v1301 = vpop.trf.xlu0
    %v1302 = vpop.trf.xlu0
    %v1303 = vpop.trf.xlu0
    %v1304 = vpop.trf.xlu0
    %v1305 = vpop.trf.xlu0
    %v1306 = vpop.trf.xlu0
    %v1307 = vpop.trf.xlu0
    %v1308 = vpop.trf.xlu0
    %v1309 = vpop.trf.xlu0
    %v1310 = vpop.trf.xlu0
    %v1311 = vpop.trf.xlu0
    %1312 = vxpose.xlu0.b32.start [1/16] %v1213, 128
    %1313 = vxpose.xlu0.b32.cont [2/16] 0.0, 128
    %1314 = vxpose.xlu0.b32.cont [3/16] 0.0, 128
    %1315 = vxpose.xlu0.b32.cont [4/16] 0.0, 128
    %1316 = vxpose.xlu0.b32.cont [5/16] 0.0, 128
    %1317 = vxpose.xlu0.b32.cont [6/16] 0.0, 128
    %1318 = vxpose.xlu0.b32.cont [7/16] 0.0, 128
    %1319 = vxpose.xlu0.b32.cont [8/16] 0.0, 128
    %1320 = vxpose.xlu0.b32.cont [9/16] 0.0, 128
    %1321 = vxpose.xlu0.b32.cont [10/16] 0.0, 128
    %1322 = vxpose.xlu0.b32.cont [11/16] 0.0, 128
    %1323 = vxpose.xlu0.b32.cont [12/16] 0.0, 128
    %1324 = vxpose.xlu0.b32.cont [13/16] 0.0, 128
    %1325 = vxpose.xlu0.b32.cont [14/16] 0.0, 128
    %1326 = vxpose.xlu0.b32.cont [15/16] 0.0, 128
    %1327 = vxpose.xlu0.b32.end [16/16] 0.0, 128
    %v1328 = vpop.trf.xlu0
    %v1329 = vpop.trf.xlu0
    %v1330 = vpop.trf.xlu0
    %v1331 = vpop.trf.xlu0
    %v1332 = vpop.trf.xlu0
    %v1333 = vpop.trf.xlu0
    %v1334 = vpop.trf.xlu0
    %v1335 = vpop.trf.xlu0
    %v1336 = vpop.trf.xlu0
    %v1337 = vpop.trf.xlu0
    %v1338 = vpop.trf.xlu0
    %v1339 = vpop.trf.xlu0
    %v1340 = vpop.trf.xlu0
    %v1341 = vpop.trf.xlu0
    %v1342 = vpop.trf.xlu0
    %v1343 = vpop.trf.xlu0
    %v1344 = vcombine.low %v1232, %v1296
    %v1345 = vcombine.high %v1232, %v1296
    %v1347 = vunpack.c.l.s4 1983009808
    %v1348 = vunpack.c.0.s8 %v1347
    %v1349 = vlaneseq
    %v1350 = vshrl.u32 %v1349, 7
    %v1351 = vsub.s32 %v1348, %v1350
    %v1352 = vrot.slane %v1344, %v1351
    %v1354 = vunpack.c.l.s4 1983009808
    %v1355 = vunpack.c.0.s8 %v1354
    %v1356 = vlaneseq
    %v1357 = vshrl.u32 %v1356, 7
    %v1358 = vsub.s32 %v1355, %v1357
    %v1359 = vrot.slane %v1345, %v1358
    %v1360 = vcombine.low %v1264, %v1328
    %v1361 = vcombine.high %v1264, %v1328
    %v1363 = vunpack.c.l.s4 1983009808
    %v1364 = vunpack.c.0.s8 %v1363
    %v1365 = vlaneseq
    %v1366 = vshrl.u32 %v1365, 7
    %v1367 = vsub.s32 %v1364, %v1366
    %v1368 = vrot.slane %v1360, %v1367
    %v1370 = vunpack.c.l.s4 1983009808
    %v1371 = vunpack.c.0.s8 %v1370
    %v1372 = vlaneseq
    %v1373 = vshrl.u32 %v1372, 7
    %v1374 = vsub.s32 %v1371, %v1373
    %v1375 = vrot.slane %v1361, %v1374
    %v1376 = vcombine.low %v1352, %v1368
    %v1377 = vcombine.high %v1352, %v1368
    %v1379 = vunpack.c.l.s4 1934713408
    %v1380 = vunpack.c.0.s8 %v1379
    %v1381 = vlaneseq
    %v1382 = vshrl.u32 %v1381, 7
    %v1383 = vsub.s32 %v1380, %v1382
    %v1384 = vrot.slane %v1376, %v1383
    %v1386 = vunpack.c.l.s4 1934713408
    %v1387 = vunpack.c.0.s8 %v1386
    %v1388 = vlaneseq
    %v1389 = vshrl.u32 %v1388, 7
    %v1390 = vsub.s32 %v1387, %v1389
    %v1391 = vrot.slane %v1377, %v1390
    %v1392 = vcombine.low %v1359, %v1375
    %v1393 = vcombine.high %v1359, %v1375
    %v1395 = vunpack.c.l.s4 1934713408
    %v1396 = vunpack.c.0.s8 %v1395
    %v1397 = vlaneseq
    %v1398 = vshrl.u32 %v1397, 7
    %v1399 = vsub.s32 %v1396, %v1398
    %v1400 = vrot.slane %v1392, %v1399
    %v1402 = vunpack.c.l.s4 1934713408
    %v1403 = vunpack.c.0.s8 %v1402
    %v1404 = vlaneseq
    %v1405 = vshrl.u32 %v1404, 7
    %v1406 = vsub.s32 %v1403, %v1405
    %v1407 = vrot.slane %v1393, %v1406
    %v1408 = vcombine.high %v1384, 0.0
    %v1409 = vcombine.high %v1391, 0.0
    %v1410 = vcombine.high %v1400, 0.0
    %v1411 = vcombine.high %v1407, 0.0
    %v1412 = vcombine.low %v1384, %v1391
    %v1414 = vunpack.c.l.s4 1983009808
    %v1415 = vunpack.c.0.s8 %v1414
    %v1416 = vlaneseq
    %v1417 = vshrl.u32 %v1416, 7
    %v1418 = vsub.s32 %v1415, %v1417
    %v1419 = vrot.slane %v1412, %v1418
    %v1420 = vcombine.low %v1408, %v1409
    %v1422 = vunpack.c.l.s4 1983009808
    %v1423 = vunpack.c.0.s8 %v1422
    %v1424 = vlaneseq
    %v1425 = vshrl.u32 %v1424, 7
    %v1426 = vsub.s32 %v1423, %v1425
    %v1427 = vrot.slane %v1420, %v1426
    %v1428 = vcombine.low %v1400, %v1407
    %v1430 = vunpack.c.l.s4 1983009808
    %v1431 = vunpack.c.0.s8 %v1430
    %v1432 = vlaneseq
    %v1433 = vshrl.u32 %v1432, 7
    %v1434 = vsub.s32 %v1431, %v1433
    %v1435 = vrot.slane %v1428, %v1434
    %v1436 = vcombine.low %v1410, %v1411
    %v1438 = vunpack.c.l.s4 1983009808
    %v1439 = vunpack.c.0.s8 %v1438
    %v1440 = vlaneseq
    %v1441 = vshrl.u32 %v1440, 7
    %v1442 = vsub.s32 %v1439, %v1441
    %v1443 = vrot.slane %v1436, %v1442
    %v1444 = vcombine.low %v1419, %v1427
    %v1445 = vcombine.high %v1419, %v1427
    %v1447 = vunpack.c.l.s4 1934713408
    %v1448 = vunpack.c.0.s8 %v1447
    %v1449 = vlaneseq
    %v1450 = vshrl.u32 %v1449, 7
    %v1451 = vsub.s32 %v1448, %v1450
    %v1452 = vrot.slane %v1444, %v1451
    %v1454 = vunpack.c.l.s4 1934713408
    %v1455 = vunpack.c.0.s8 %v1454
    %v1456 = vlaneseq
    %v1457 = vshrl.u32 %v1456, 7
    %v1458 = vsub.s32 %v1455, %v1457
    %v1459 = vrot.slane %v1445, %v1458
    %v1460 = vcombine.low %v1435, %v1443
    %v1461 = vcombine.high %v1435, %v1443
    %v1463 = vunpack.c.l.s4 1934713408
    %v1464 = vunpack.c.0.s8 %v1463
    %v1465 = vlaneseq
    %v1466 = vshrl.u32 %v1465, 7
    %v1467 = vsub.s32 %v1464, %v1466
    %v1468 = vrot.slane %v1460, %v1467
    %v1470 = vunpack.c.l.s4 1934713408
    %v1471 = vunpack.c.0.s8 %v1470
    %v1472 = vlaneseq
    %v1473 = vshrl.u32 %v1472, 7
    %v1474 = vsub.s32 %v1471, %v1473
    %v1475 = vrot.slane %v1461, %v1474
    %v1476 = vcombine.low %v1452, %v1468
    %v1477 = vcombine.high %v1452, %v1468
    %v1478 = vcombine.low %v1459, %v1475
    %v1479 = vcombine.high %v1459, %v1475
    %1481 = vrot.lane.b32.xlu0 %v1477, 8
    %v1482 = vpop.permute.xlu0 %1481
    %1485 = vrot.lane.b32.xlu0 %v1478, 16
    %v1486 = vpop.permute.xlu0 %1485
    %1489 = vrot.lane.b32.xlu0 %v1479, 24
    %v1490 = vpop.permute.xlu0 %1489
    %v1492 = vsel %vm447, %v1476, %v1482
    %vm1493 = vcmask 130048
    %v1494 = vsel %vm1493, %v1492, %v1486
    %vm1495 = vcmask 195584
    %v1496 = vsel %vm1495, %v1494, %v1490
    %v1497 = vld [vmem:[#allocation10] sm:$0xff]
    %v1498 = vld [vmem:[#allocation10 + $0x8] sm:$0xff]
    %v1499 = vld [vmem:[#allocation10 + $0x10] sm:$0xff]
    %v1500 = vld [vmem:[#allocation10 + $0x18] sm:$0xff]
    %v1501 = vld [vmem:[%s7] sm:$0x1]
    %v1503 = vlaneseq
    %v1504 = vshrl.u32 %v1503, 7
    %v1505 = vsub.s32 0, %v1504
    %v1506 = vrot.slane %v1501, %v1505
    %v1509 = vsel %vm116, %v1496, 0
    %1511 = vmatprep.subr.mxu0 0.0
    %1512 = vmatpush1.msra.mxu0 %v1497
    %1513 = vmatprep.subr.mxu0 0.0
    %1514 = vmatpush1.msra.mxu0 %v1498
    %1515 = vmatprep.subr.mxu0 0.0
    %1516 = vmatpush1.msra.mxu0 %v1499
    %1517 = vmatprep.subr.mxu0 0.0
    %1518 = vmatpush1.msra.mxu0 %v1500
    %1519 = vmatprep.subr.mxu0 0.0
    %1520 = vmatpush1.msra.mxu0 0.0
    %1521 = vmatprep.subr.mxu0 0.0
    %1522 = vmatpush1.msra.mxu0 0.0
    %1523 = vmatprep.subr.mxu0 0.0
    %1524 = vmatpush1.msra.mxu0 0.0
    %1525 = vmatprep.subr.mxu0 0.0
    %1526 = vmatpush1.msra.mxu0 0.0
    %1527 = vmatprep.subr.mxu0 0.0
    %1528 = vmatpush1.msra.mxu0 0.0
    %1529 = vmatprep.subr.mxu0 0.0
    %1530 = vmatpush1.msra.mxu0 0.0
    %1531 = vmatprep.subr.mxu0 0.0
    %1532 = vmatpush1.msra.mxu0 0.0
    %1533 = vmatprep.subr.mxu0 0.0
    %1534 = vmatpush1.msra.mxu0 0.0
    %1535 = vmatprep.subr.mxu0 0.0
    %1536 = vmatpush1.msra.mxu0 0.0
    %1537 = vmatprep.subr.mxu0 0.0
    %1538 = vmatpush1.msra.mxu0 0.0
    %1539 = vmatprep.subr.mxu0 0.0
    %1540 = vmatpush1.msra.mxu0 0.0
    %1541 = vmatprep.subr.mxu0 0.0
    %1542 = vmatpush1.msra.mxu0 0.0
    %1543 = vmatprep.subr.mxu0 0.0
    %1544 = vmatpush1.msra.mxu0 0.0
    %1545 = vmatprep.subr.mxu0 0.0
    %1546 = vmatpush1.msra.mxu0 0.0
    %1547 = vmatprep.subr.mxu0 0.0
    %1548 = vmatpush1.msra.mxu0 0.0
    %1549 = vmatprep.subr.mxu0 0.0
    %1550 = vmatpush1.msra.mxu0 0.0
    %1551 = vmatprep.subr.mxu0 0.0
    %1552 = vmatpush1.msra.mxu0 0.0
    %1553 = vmatprep.subr.mxu0 0.0
    %1554 = vmatpush1.msra.mxu0 0.0
    %1555 = vmatprep.subr.mxu0 0.0
    %1556 = vmatpush1.msra.mxu0 0.0
    %1557 = vmatprep.subr.mxu0 0.0
    %1558 = vmatpush1.msra.mxu0 0.0
    %1559 = vmatprep.subr.mxu0 0.0
    %1560 = vmatpush1.msra.mxu0 0.0
    %1561 = vmatprep.subr.mxu0 0.0
    %1562 = vmatpush1.msra.mxu0 0.0
    %1563 = vmatprep.subr.mxu0 0.0
    %1564 = vmatpush1.msra.mxu0 0.0
    %1565 = vmatprep.subr.mxu0 0.0
    %1566 = vmatpush1.msra.mxu0 0.0
    %1567 = vmatprep.subr.mxu0 0.0
    %1568 = vmatpush1.msra.mxu0 0.0
    %1569 = vmatprep.subr.mxu0 0.0
    %1570 = vmatpush1.msra.mxu0 0.0
    %1571 = vmatprep.subr.mxu0 0.0
    %1572 = vmatpush1.msra.mxu0 0.0
    %1573 = vmatprep.subr.mxu0 0.0
    %1574 = vmatpush1.msra.mxu0 0.0
    %1575 = vmatprep.mubr.f32.mxu0 0.0
    %1576 = vmatmul.mubr.f32.gmra.mrb[0].mxu0 %v1509
    %v1577 = vpop.f32.mrb[0].mxu0
    %v1578 = vadd.f32 %v1506, %v1577
    %v1579 = vpop.f32.mrb[0].mxu0
    %1580 = vdwg.mxu0
    %1581 = vst.msk [vmem:[#allocation11] sm:$0xff] %vm116, %v1578
    %1583 = vrot.lane.b32.xlu0 %v195, 120
    %v1584 = vpop.permute.xlu0 %1583
    %1585 = vrot.lane.b32.xlu0 %v195, 112
    %v1586 = vpop.permute.xlu0 %1585
    %1587 = vrot.lane.b32.xlu0 %v195, 104
    %v1588 = vpop.permute.xlu0 %1587
    %1590 = vrot.lane.b32.xlu0 %v287, 120
    %v1591 = vpop.permute.xlu0 %1590
    %1593 = vrot.lane.b32.xlu0 %v287, 112
    %v1594 = vpop.permute.xlu0 %1593
    %1596 = vrot.lane.b32.xlu0 %v287, 104
    %v1597 = vpop.permute.xlu0 %1596
    %1599 = vrot.lane.b32.xlu0 %v195, 96
    %v1600 = vpop.permute.xlu0 %1599
    %1601 = vrot.lane.b32.xlu0 %v1584, 96
    %v1602 = vpop.permute.xlu0 %1601
    %1603 = vrot.lane.b32.xlu0 %v1586, 96
    %v1604 = vpop.permute.xlu0 %1603
    %1605 = vrot.lane.b32.xlu0 %v1588, 96
    %v1606 = vpop.permute.xlu0 %1605
    %1611 = vxpose.xlu0.b32.start [1/16] %v1600, 128
    %1612 = vxpose.xlu0.b32.cont [2/16] 0.0, 128
    %1613 = vxpose.xlu0.b32.cont [3/16] 0.0, 128
    %1614 = vxpose.xlu0.b32.cont [4/16] 0.0, 128
    %1615 = vxpose.xlu0.b32.cont [5/16] 0.0, 128
    %1616 = vxpose.xlu0.b32.cont [6/16] 0.0, 128
    %1617 = vxpose.xlu0.b32.cont [7/16] 0.0, 128
    %1618 = vxpose.xlu0.b32.cont [8/16] 0.0, 128
    %1619 = vxpose.xlu0.b32.cont [9/16] 0.0, 128
    %1620 = vxpose.xlu0.b32.cont [10/16] 0.0, 128
    %1621 = vxpose.xlu0.b32.cont [11/16] 0.0, 128
    %1622 = vxpose.xlu0.b32.cont [12/16] 0.0, 128
    %1623 = vxpose.xlu0.b32.cont [13/16] 0.0, 128
    %1624 = vxpose.xlu0.b32.cont [14/16] 0.0, 128
    %1625 = vxpose.xlu0.b32.cont [15/16] 0.0, 128
    %1626 = vxpose.xlu0.b32.end [16/16] 0.0, 128
    %v1627 = vpop.trf.xlu0
    %v1628 = vpop.trf.xlu0
    %v1629 = vpop.trf.xlu0
    %v1630 = vpop.trf.xlu0
    %v1631 = vpop.trf.xlu0
    %v1632 = vpop.trf.xlu0
    %v1633 = vpop.trf.xlu0
    %v1634 = vpop.trf.xlu0
    %v1635 = vpop.trf.xlu0
    %v1636 = vpop.trf.xlu0
    %v1637 = vpop.trf.xlu0
    %v1638 = vpop.trf.xlu0
    %v1639 = vpop.trf.xlu0
    %v1640 = vpop.trf.xlu0
    %v1641 = vpop.trf.xlu0
    %v1642 = vpop.trf.xlu0
    %1643 = vxpose.xlu0.b32.start [1/16] %v1602, 128
    %1644 = vxpose.xlu0.b32.cont [2/16] 0.0, 128
    %1645 = vxpose.xlu0.b32.cont [3/16] 0.0, 128
    %1646 = vxpose.xlu0.b32.cont [4/16] 0.0, 128
    %1647 = vxpose.xlu0.b32.cont [5/16] 0.0, 128
    %1648 = vxpose.xlu0.b32.cont [6/16] 0.0, 128
    %1649 = vxpose.xlu0.b32.cont [7/16] 0.0, 128
    %1650 = vxpose.xlu0.b32.cont [8/16] 0.0, 128
    %1651 = vxpose.xlu0.b32.cont [9/16] 0.0, 128
    %1652 = vxpose.xlu0.b32.cont [10/16] 0.0, 128
    %1653 = vxpose.xlu0.b32.cont [11/16] 0.0, 128
    %1654 = vxpose.xlu0.b32.cont [12/16] 0.0, 128
    %1655 = vxpose.xlu0.b32.cont [13/16] 0.0, 128
    %1656 = vxpose.xlu0.b32.cont [14/16] 0.0, 128
    %1657 = vxpose.xlu0.b32.cont [15/16] 0.0, 128
    %1658 = vxpose.xlu0.b32.end [16/16] 0.0, 128
    %v1659 = vpop.trf.xlu0
    %v1660 = vpop.trf.xlu0
    %v1661 = vpop.trf.xlu0
    %v1662 = vpop.trf.xlu0
    %v1663 = vpop.trf.xlu0
    %v1664 = vpop.trf.xlu0
    %v1665 = vpop.trf.xlu0
    %v1666 = vpop.trf.xlu0
    %v1667 = vpop.trf.xlu0
    %v1668 = vpop.trf.xlu0
    %v1669 = vpop.trf.xlu0
    %v1670 = vpop.trf.xlu0
    %v1671 = vpop.trf.xlu0
    %v1672 = vpop.trf.xlu0
    %v1673 = vpop.trf.xlu0
    %v1674 = vpop.trf.xlu0
    %1675 = vxpose.xlu0.b32.start [1/16] %v1604, 128
    %1676 = vxpose.xlu0.b32.cont [2/16] 0.0, 128
    %1677 = vxpose.xlu0.b32.cont [3/16] 0.0, 128
    %1678 = vxpose.xlu0.b32.cont [4/16] 0.0, 128
    %1679 = vxpose.xlu0.b32.cont [5/16] 0.0, 128
    %1680 = vxpose.xlu0.b32.cont [6/16] 0.0, 128
    %1681 = vxpose.xlu0.b32.cont [7/16] 0.0, 128
    %1682 = vxpose.xlu0.b32.cont [8/16] 0.0, 128
    %1683 = vxpose.xlu0.b32.cont [9/16] 0.0, 128
    %1684 = vxpose.xlu0.b32.cont [10/16] 0.0, 128
    %1685 = vxpose.xlu0.b32.cont [11/16] 0.0, 128
    %1686 = vxpose.xlu0.b32.cont [12/16] 0.0, 128
    %1687 = vxpose.xlu0.b32.cont [13/16] 0.0, 128
    %1688 = vxpose.xlu0.b32.cont [14/16] 0.0, 128
    %1689 = vxpose.xlu0.b32.cont [15/16] 0.0, 128
    %1690 = vxpose.xlu0.b32.end [16/16] 0.0, 128
    %v1691 = vpop.trf.xlu0
    %v1692 = vpop.trf.xlu0
    %v1693 = vpop.trf.xlu0
    %v1694 = vpop.trf.xlu0
    %v1695 = vpop.trf.xlu0
    %v1696 = vpop.trf.xlu0
    %v1697 = vpop.trf.xlu0
    %v1698 = vpop.trf.xlu0
    %v1699 = vpop.trf.xlu0
    %v1700 = vpop.trf.xlu0
    %v1701 = vpop.trf.xlu0
    %v1702 = vpop.trf.xlu0
    %v1703 = vpop.trf.xlu0
    %v1704 = vpop.trf.xlu0
    %v1705 = vpop.trf.xlu0
    %v1706 = vpop.trf.xlu0
    %1707 = vxpose.xlu0.b32.start [1/16] %v1606, 128
    %1708 = vxpose.xlu0.b32.cont [2/16] 0.0, 128
    %1709 = vxpose.xlu0.b32.cont [3/16] 0.0, 128
    %1710 = vxpose.xlu0.b32.cont [4/16] 0.0, 128
    %1711 = vxpose.xlu0.b32.cont [5/16] 0.0, 128
    %1712 = vxpose.xlu0.b32.cont [6/16] 0.0, 128
    %1713 = vxpose.xlu0.b32.cont [7/16] 0.0, 128
    %1714 = vxpose.xlu0.b32.cont [8/16] 0.0, 128
    %1715 = vxpose.xlu0.b32.cont [9/16] 0.0, 128
    %1716 = vxpose.xlu0.b32.cont [10/16] 0.0, 128
    %1717 = vxpose.xlu0.b32.cont [11/16] 0.0, 128
    %1718 = vxpose.xlu0.b32.cont [12/16] 0.0, 128
    %1719 = vxpose.xlu0.b32.cont [13/16] 0.0, 128
    %1720 = vxpose.xlu0.b32.cont [14/16] 0.0, 128
    %1721 = vxpose.xlu0.b32.cont [15/16] 0.0, 128
    %1722 = vxpose.xlu0.b32.end [16/16] 0.0, 128
    %v1723 = vpop.trf.xlu0
    %v1724 = vpop.trf.xlu0
    %v1725 = vpop.trf.xlu0
    %v1726 = vpop.trf.xlu0
    %v1727 = vpop.trf.xlu0
    %v1728 = vpop.trf.xlu0
    %v1729 = vpop.trf.xlu0
    %v1730 = vpop.trf.xlu0
    %v1731 = vpop.trf.xlu0
    %v1732 = vpop.trf.xlu0
    %v1733 = vpop.trf.xlu0
    %v1734 = vpop.trf.xlu0
    %v1735 = vpop.trf.xlu0
    %v1736 = vpop.trf.xlu0
    %v1737 = vpop.trf.xlu0
    %v1738 = vpop.trf.xlu0
    %v1739 = vsel %vm447, %v195, 0
    %1741 = vmatprep.subr.mxu0 0.0
    %1742 = vmatpush1.msra.mxu0 %v1627
    %1743 = vmatprep.subr.mxu0 0.0
    %1744 = vmatpush1.msra.mxu0 0.0
    %1745 = vmatprep.subr.mxu0 0.0
    %1746 = vmatpush1.msra.mxu0 0.0
    %1747 = vmatprep.subr.mxu0 0.0
    %1748 = vmatpush1.msra.mxu0 0.0
    %1749 = vmatprep.subr.mxu0 0.0
    %1750 = vmatpush1.msra.mxu0 0.0
    %1751 = vmatprep.subr.mxu0 0.0
    %1752 = vmatpush1.msra.mxu0 0.0
    %1753 = vmatprep.subr.mxu0 0.0
    %1754 = vmatpush1.msra.mxu0 0.0
    %1755 = vmatprep.subr.mxu0 0.0
    %1756 = vmatpush1.msra.mxu0 0.0
    %1757 = vmatprep.subr.mxu0 0.0
    %1758 = vmatpush1.msra.mxu0 0.0
    %1759 = vmatprep.subr.mxu0 0.0
    %1760 = vmatpush1.msra.mxu0 0.0
    %1761 = vmatprep.subr.mxu0 0.0
    %1762 = vmatpush1.msra.mxu0 0.0
    %1763 = vmatprep.subr.mxu0 0.0
    %1764 = vmatpush1.msra.mxu0 0.0
    %1765 = vmatprep.subr.mxu0 0.0
    %1766 = vmatpush1.msra.mxu0 0.0
    %1767 = vmatprep.subr.mxu0 0.0
    %1768 = vmatpush1.msra.mxu0 0.0
    %1769 = vmatprep.subr.mxu0 0.0
    %1770 = vmatpush1.msra.mxu0 0.0
    %1771 = vmatprep.subr.mxu0 0.0
    %1772 = vmatpush1.msra.mxu0 0.0
    %1773 = vmatprep.subr.mxu0 0.0
    %1774 = vmatpush1.msra.mxu0 0.0
    %1775 = vmatprep.subr.mxu0 0.0
    %1776 = vmatpush1.msra.mxu0 0.0
    %1777 = vmatprep.subr.mxu0 0.0
    %1778 = vmatpush1.msra.mxu0 0.0
    %1779 = vmatprep.subr.mxu0 0.0
    %1780 = vmatpush1.msra.mxu0 0.0
    %1781 = vmatprep.subr.mxu0 0.0
    %1782 = vmatpush1.msra.mxu0 0.0
    %1783 = vmatprep.subr.mxu0 0.0
    %1784 = vmatpush1.msra.mxu0 0.0
    %1785 = vmatprep.subr.mxu0 0.0
    %1786 = vmatpush1.msra.mxu0 0.0
    %1787 = vmatprep.subr.mxu0 0.0
    %1788 = vmatpush1.msra.mxu0 0.0
    %1789 = vmatprep.subr.mxu0 0.0
    %1790 = vmatpush1.msra.mxu0 0.0
    %1791 = vmatprep.subr.mxu0 0.0
    %1792 = vmatpush1.msra.mxu0 0.0
    %1793 = vmatprep.subr.mxu0 0.0
    %1794 = vmatpush1.msra.mxu0 0.0
    %1795 = vmatprep.subr.mxu0 0.0
    %1796 = vmatpush1.msra.mxu0 0.0
    %1797 = vmatprep.subr.mxu0 0.0
    %1798 = vmatpush1.msra.mxu0 0.0
    %1799 = vmatprep.subr.mxu0 0.0
    %1800 = vmatpush1.msra.mxu0 0.0
    %1801 = vmatprep.subr.mxu0 0.0
    %1802 = vmatpush1.msra.mxu0 0.0
    %1803 = vmatprep.subr.mxu0 0.0
    %1804 = vmatpush1.msra.mxu0 0.0
    %1805 = vmatprep.mubr.f32.mxu0 0.0
    %1806 = vmatmul.mubr.f32.gmra.mrb[0].mxu0 %v1739
    %v1807 = vpop.f32.mrb[0].mxu0
    %v1808 = vadd.f32 0.0, %v1807
    %v1809 = vpop.f32.mrb[0].mxu0
    %1810 = vdwg.mxu0
    %v1811 = vsel %vm447, %v1584, 0
    %1813 = vmatprep.subr.mxu0 0.0
    %1814 = vmatpush1.msra.mxu0 %v1659
    %1815 = vmatprep.subr.mxu0 0.0
    %1816 = vmatpush1.msra.mxu0 0.0
    %1817 = vmatprep.subr.mxu0 0.0
    %1818 = vmatpush1.msra.mxu0 0.0
    %1819 = vmatprep.subr.mxu0 0.0
    %1820 = vmatpush1.msra.mxu0 0.0
    %1821 = vmatprep.subr.mxu0 0.0
    %1822 = vmatpush1.msra.mxu0 0.0
    %1823 = vmatprep.subr.mxu0 0.0
    %1824 = vmatpush1.msra.mxu0 0.0
    %1825 = vmatprep.subr.mxu0 0.0
    %1826 = vmatpush1.msra.mxu0 0.0
    %1827 = vmatprep.subr.mxu0 0.0
    %1828 = vmatpush1.msra.mxu0 0.0
    %1829 = vmatprep.subr.mxu0 0.0
    %1830 = vmatpush1.msra.mxu0 0.0
    %1831 = vmatprep.subr.mxu0 0.0
    %1832 = vmatpush1.msra.mxu0 0.0
    %1833 = vmatprep.subr.mxu0 0.0
    %1834 = vmatpush1.msra.mxu0 0.0
    %1835 = vmatprep.subr.mxu0 0.0
    %1836 = vmatpush1.msra.mxu0 0.0
    %1837 = vmatprep.subr.mxu0 0.0
    %1838 = vmatpush1.msra.mxu0 0.0
    %1839 = vmatprep.subr.mxu0 0.0
    %1840 = vmatpush1.msra.mxu0 0.0
    %1841 = vmatprep.subr.mxu0 0.0
    %1842 = vmatpush1.msra.mxu0 0.0
    %1843 = vmatprep.subr.mxu0 0.0
    %1844 = vmatpush1.msra.mxu0 0.0
    %1845 = vmatprep.subr.mxu0 0.0
    %1846 = vmatpush1.msra.mxu0 0.0
    %1847 = vmatprep.subr.mxu0 0.0
    %1848 = vmatpush1.msra.mxu0 0.0
    %1849 = vmatprep.subr.mxu0 0.0
    %1850 = vmatpush1.msra.mxu0 0.0
    %1851 = vmatprep.subr.mxu0 0.0
    %1852 = vmatpush1.msra.mxu0 0.0
    %1853 = vmatprep.subr.mxu0 0.0
    %1854 = vmatpush1.msra.mxu0 0.0
    %1855 = vmatprep.subr.mxu0 0.0
    %1856 = vmatpush1.msra.mxu0 0.0
    %1857 = vmatprep.subr.mxu0 0.0
    %1858 = vmatpush1.msra.mxu0 0.0
    %1859 = vmatprep.subr.mxu0 0.0
    %1860 = vmatpush1.msra.mxu0 0.0
    %1861 = vmatprep.subr.mxu0 0.0
    %1862 = vmatpush1.msra.mxu0 0.0
    %1863 = vmatprep.subr.mxu0 0.0
    %1864 = vmatpush1.msra.mxu0 0.0
    %1865 = vmatprep.subr.mxu0 0.0
    %1866 = vmatpush1.msra.mxu0 0.0
    %1867 = vmatprep.subr.mxu0 0.0
    %1868 = vmatpush1.msra.mxu0 0.0
    %1869 = vmatprep.subr.mxu0 0.0
    %1870 = vmatpush1.msra.mxu0 0.0
    %1871 = vmatprep.subr.mxu0 0.0
    %1872 = vmatpush1.msra.mxu0 0.0
    %1873 = vmatprep.subr.mxu0 0.0
    %1874 = vmatpush1.msra.mxu0 0.0
    %1875 = vmatprep.subr.mxu0 0.0
    %1876 = vmatpush1.msra.mxu0 0.0
    %1877 = vmatprep.mubr.f32.mxu0 0.0
    %1878 = vmatmul.mubr.f32.gmra.mrb[0].mxu0 %v1811
    %v1879 = vpop.f32.mrb[0].mxu0
    %v1880 = vadd.f32 0.0, %v1879
    %v1881 = vpop.f32.mrb[0].mxu0
    %1882 = vdwg.mxu0
    %v1883 = vsel %vm447, %v1586, 0
    %1885 = vmatprep.subr.mxu0 0.0
    %1886 = vmatpush1.msra.mxu0 %v1691
    %1887 = vmatprep.subr.mxu0 0.0
    %1888 = vmatpush1.msra.mxu0 0.0
    %1889 = vmatprep.subr.mxu0 0.0
    %1890 = vmatpush1.msra.mxu0 0.0
    %1891 = vmatprep.subr.mxu0 0.0
    %1892 = vmatpush1.msra.mxu0 0.0
    %1893 = vmatprep.subr.mxu0 0.0
    %1894 = vmatpush1.msra.mxu0 0.0
    %1895 = vmatprep.subr.mxu0 0.0
    %1896 = vmatpush1.msra.mxu0 0.0
    %1897 = vmatprep.subr.mxu0 0.0
    %1898 = vmatpush1.msra.mxu0 0.0
    %1899 = vmatprep.subr.mxu0 0.0
    %1900 = vmatpush1.msra.mxu0 0.0
    %1901 = vmatprep.subr.mxu0 0.0
    %1902 = vmatpush1.msra.mxu0 0.0
    %1903 = vmatprep.subr.mxu0 0.0
    %1904 = vmatpush1.msra.mxu0 0.0
    %1905 = vmatprep.subr.mxu0 0.0
    %1906 = vmatpush1.msra.mxu0 0.0
    %1907 = vmatprep.subr.mxu0 0.0
    %1908 = vmatpush1.msra.mxu0 0.0
    %1909 = vmatprep.subr.mxu0 0.0
    %1910 = vmatpush1.msra.mxu0 0.0
    %1911 = vmatprep.subr.mxu0 0.0
    %1912 = vmatpush1.msra.mxu0 0.0
    %1913 = vmatprep.subr.mxu0 0.0
    %1914 = vmatpush1.msra.mxu0 0.0
    %1915 = vmatprep.subr.mxu0 0.0
    %1916 = vmatpush1.msra.mxu0 0.0
    %1917 = vmatprep.subr.mxu0 0.0
    %1918 = vmatpush1.msra.mxu0 0.0
    %1919 = vmatprep.subr.mxu0 0.0
    %1920 = vmatpush1.msra.mxu0 0.0
    %1921 = vmatprep.subr.mxu0 0.0
    %1922 = vmatpush1.msra.mxu0 0.0
    %1923 = vmatprep.subr.mxu0 0.0
    %1924 = vmatpush1.msra.mxu0 0.0
    %1925 = vmatprep.subr.mxu0 0.0
    %1926 = vmatpush1.msra.mxu0 0.0
    %1927 = vmatprep.subr.mxu0 0.0
    %1928 = vmatpush1.msra.mxu0 0.0
    %1929 = vmatprep.subr.mxu0 0.0
    %1930 = vmatpush1.msra.mxu0 0.0
    %1931 = vmatprep.subr.mxu0 0.0
    %1932 = vmatpush1.msra.mxu0 0.0
    %1933 = vmatprep.subr.mxu0 0.0
    %1934 = vmatpush1.msra.mxu0 0.0
    %1935 = vmatprep.subr.mxu0 0.0
    %1936 = vmatpush1.msra.mxu0 0.0
    %1937 = vmatprep.subr.mxu0 0.0
    %1938 = vmatpush1.msra.mxu0 0.0
    %1939 = vmatprep.subr.mxu0 0.0
    %1940 = vmatpush1.msra.mxu0 0.0
    %1941 = vmatprep.subr.mxu0 0.0
    %1942 = vmatpush1.msra.mxu0 0.0
    %1943 = vmatprep.subr.mxu0 0.0
    %1944 = vmatpush1.msra.mxu0 0.0
    %1945 = vmatprep.subr.mxu0 0.0
    %1946 = vmatpush1.msra.mxu0 0.0
    %1947 = vmatprep.subr.mxu0 0.0
    %1948 = vmatpush1.msra.mxu0 0.0
    %1949 = vmatprep.mubr.f32.mxu0 0.0
    %1950 = vmatmul.mubr.f32.gmra.mrb[0].mxu0 %v1883
    %v1951 = vpop.f32.mrb[0].mxu0
    %v1952 = vadd.f32 0.0, %v1951
    %v1953 = vpop.f32.mrb[0].mxu0
    %1954 = vdwg.mxu0
    %v1955 = vsel %vm447, %v1588, 0
    %1957 = vmatprep.subr.mxu0 0.0
    %1958 = vmatpush1.msra.mxu0 %v1723
    %1959 = vmatprep.subr.mxu0 0.0
    %1960 = vmatpush1.msra.mxu0 0.0
    %1961 = vmatprep.subr.mxu0 0.0
    %1962 = vmatpush1.msra.mxu0 0.0
    %1963 = vmatprep.subr.mxu0 0.0
    %1964 = vmatpush1.msra.mxu0 0.0
    %1965 = vmatprep.subr.mxu0 0.0
    %1966 = vmatpush1.msra.mxu0 0.0
    %1967 = vmatprep.subr.mxu0 0.0
    %1968 = vmatpush1.msra.mxu0 0.0
    %1969 = vmatprep.subr.mxu0 0.0
    %1970 = vmatpush1.msra.mxu0 0.0
    %1971 = vmatprep.subr.mxu0 0.0
    %1972 = vmatpush1.msra.mxu0 0.0
    %1973 = vmatprep.subr.mxu0 0.0
    %1974 = vmatpush1.msra.mxu0 0.0
    %1975 = vmatprep.subr.mxu0 0.0
    %1976 = vmatpush1.msra.mxu0 0.0
    %1977 = vmatprep.subr.mxu0 0.0
    %1978 = vmatpush1.msra.mxu0 0.0
    %1979 = vmatprep.subr.mxu0 0.0
    %1980 = vmatpush1.msra.mxu0 0.0
    %1981 = vmatprep.subr.mxu0 0.0
    %1982 = vmatpush1.msra.mxu0 0.0
    %1983 = vmatprep.subr.mxu0 0.0
    %1984 = vmatpush1.msra.mxu0 0.0
    %1985 = vmatprep.subr.mxu0 0.0
    %1986 = vmatpush1.msra.mxu0 0.0
    %1987 = vmatprep.subr.mxu0 0.0
    %1988 = vmatpush1.msra.mxu0 0.0
    %1989 = vmatprep.subr.mxu0 0.0
    %1990 = vmatpush1.msra.mxu0 0.0
    %1991 = vmatprep.subr.mxu0 0.0
    %1992 = vmatpush1.msra.mxu0 0.0
    %1993 = vmatprep.subr.mxu0 0.0
    %1994 = vmatpush1.msra.mxu0 0.0
    %1995 = vmatprep.subr.mxu0 0.0
    %1996 = vmatpush1.msra.mxu0 0.0
    %1997 = vmatprep.subr.mxu0 0.0
    %1998 = vmatpush1.msra.mxu0 0.0
    %1999 = vmatprep.subr.mxu0 0.0
    %2000 = vmatpush1.msra.mxu0 0.0
    %2001 = vmatprep.subr.mxu0 0.0
    %2002 = vmatpush1.msra.mxu0 0.0
    %2003 = vmatprep.subr.mxu0 0.0
    %2004 = vmatpush1.msra.mxu0 0.0
    %2005 = vmatprep.subr.mxu0 0.0
    %2006 = vmatpush1.msra.mxu0 0.0
    %2007 = vmatprep.subr.mxu0 0.0
    %2008 = vmatpush1.msra.mxu0 0.0
    %2009 = vmatprep.subr.mxu0 0.0
    %2010 = vmatpush1.msra.mxu0 0.0
    %2011 = vmatprep.subr.mxu0 0.0
    %2012 = vmatpush1.msra.mxu0 0.0
    %2013 = vmatprep.subr.mxu0 0.0
    %2014 = vmatpush1.msra.mxu0 0.0
    %2015 = vmatprep.subr.mxu0 0.0
    %2016 = vmatpush1.msra.mxu0 0.0
    %2017 = vmatprep.subr.mxu0 0.0
    %2018 = vmatpush1.msra.mxu0 0.0
    %2019 = vmatprep.subr.mxu0 0.0
    %2020 = vmatpush1.msra.mxu0 0.0
    %2021 = vmatprep.mubr.f32.mxu0 0.0
    %2022 = vmatmul.mubr.f32.gmra.mrb[0].mxu0 %v1955
    %v2023 = vpop.f32.mrb[0].mxu0
    %v2024 = vadd.f32 0.0, %v2023
    %v2025 = vpop.f32.mrb[0].mxu0
    %2026 = vdwg.mxu0
    %v2027 = vsel %vm447, %v1808, -inf
    %2028 = vmax.xlane.f32.xlu0 %v2027
    %v2029 = vpop.xlane.xlu0 %2028
    %v2030 = vsel %vm447, %v1880, -inf
    %2031 = vmax.xlane.f32.xlu0 %v2030
    %v2032 = vpop.xlane.xlu0 %2031
    %v2033 = vsel %vm447, %v1952, -inf
    %2034 = vmax.xlane.f32.xlu0 %v2033
    %v2035 = vpop.xlane.xlu0 %2034
    %v2036 = vsel %vm447, %v2024, -inf
    %2037 = vmax.xlane.f32.xlu0 %v2036
    %v2038 = vpop.xlane.xlu0 %2037
    %v2039 = vsub.f32 %v1808, %v2029
    %v2040 = vsub.f32 %v1880, %v2032
    %v2041 = vsub.f32 %v1952, %v2035
    %v2042 = vsub.f32 %v2024, %v2038
    %v2043 = vmul.f32 %v2039, 1.442695
    %v2044 = vpow.pop %v2043
    %v2045 = vmul.f32 %v2040, 1.442695
    %v2046 = vpow.pop %v2045
    %v2047 = vmul.f32 %v2041, 1.442695
    %v2048 = vpow.pop %v2047
    %v2049 = vmul.f32 %v2042, 1.442695
    %v2050 = vpow.pop %v2049
    %v2051 = vsel %vm447, %v2044, 0.0
    %2052 = vadd.xlane.f32.xlu0 %v2051
    %v2053 = vpop.xlane.xlu0 %2052
    %v2054 = vsel %vm447, %v2046, 0.0
    %2055 = vadd.xlane.f32.xlu0 %v2054
    %v2056 = vpop.xlane.xlu0 %2055
    %v2057 = vsel %vm447, %v2048, 0.0
    %2058 = vadd.xlane.f32.xlu0 %v2057
    %v2059 = vpop.xlane.xlu0 %2058
    %v2060 = vsel %vm447, %v2050, 0.0
    %2061 = vadd.xlane.f32.xlu0 %v2060
    %v2062 = vpop.xlane.xlu0 %2061
    %v2063 = vrcp.pop %v2053
    %v2064 = vrcp.pop %v2056
    %v2065 = vrcp.pop %v2059
    %v2066 = vrcp.pop %v2062
    %v2067 = vmul.f32 %v2044, %v2063
    %v2068 = vmul.f32 %v2046, %v2064
    %v2069 = vmul.f32 %v2048, %v2065
    %v2070 = vmul.f32 %v2050, %v2066
    %s2071 = scalar_lea.vmem [#allocation12], 32
    %2072 = vst.msk [vmem:[%s2071] sm:$0xff] %vm447, %v2067
    %2073 = vst.msk [vmem:[%s2071 + $0x8] sm:$0xff] %vm447, %v2068
    %2074 = vst.msk [vmem:[%s2071 + $0x10] sm:$0xff] %vm447, %v2069
    %2075 = vst.msk [vmem:[%s2071 + $0x18] sm:$0xff] %vm447, %v2070
    %2076 = vxpose.xlu0.b32.start [1/16] %v287, 128
    %2077 = vxpose.xlu0.b32.cont [2/16] 0.0, 128
    %2078 = vxpose.xlu0.b32.cont [3/16] 0.0, 128
    %2079 = vxpose.xlu0.b32.cont [4/16] 0.0, 128
    %2080 = vxpose.xlu0.b32.cont [5/16] 0.0, 128
    %2081 = vxpose.xlu0.b32.cont [6/16] 0.0, 128
    %2082 = vxpose.xlu0.b32.cont [7/16] 0.0, 128
    %2083 = vxpose.xlu0.b32.cont [8/16] 0.0, 128
    %2084 = vxpose.xlu0.b32.cont [9/16] 0.0, 128
    %2085 = vxpose.xlu0.b32.cont [10/16] 0.0, 128
    %2086 = vxpose.xlu0.b32.cont [11/16] 0.0, 128
    %2087 = vxpose.xlu0.b32.cont [12/16] 0.0, 128
    %2088 = vxpose.xlu0.b32.cont [13/16] 0.0, 128
    %2089 = vxpose.xlu0.b32.cont [14/16] 0.0, 128
    %2090 = vxpose.xlu0.b32.cont [15/16] 0.0, 128
    %2091 = vxpose.xlu0.b32.end [16/16] 0.0, 128
    %v2092 = vpop.trf.xlu0
    %v2093 = vpop.trf.xlu0
    %v2094 = vpop.trf.xlu0
    %v2095 = vpop.trf.xlu0
    %v2096 = vpop.trf.xlu0
    %v2097 = vpop.trf.xlu0
    %v2098 = vpop.trf.xlu0
    %v2099 = vpop.trf.xlu0
    %v2100 = vpop.trf.xlu0
    %v2101 = vpop.trf.xlu0
    %v2102 = vpop.trf.xlu0
    %v2103 = vpop.trf.xlu0
    %v2104 = vpop.trf.xlu0
    %v2105 = vpop.trf.xlu0
    %v2106 = vpop.trf.xlu0
    %v2107 = vpop.trf.xlu0
    %2108 = vxpose.xlu0.b32.start [1/16] %v1591, 128
    %2109 = vxpose.xlu0.b32.cont [2/16] 0.0, 128
    %2110 = vxpose.xlu0.b32.cont [3/16] 0.0, 128
    %2111 = vxpose.xlu0.b32.cont [4/16] 0.0, 128
    %2112 = vxpose.xlu0.b32.cont [5/16] 0.0, 128
    %2113 = vxpose.xlu0.b32.cont [6/16] 0.0, 128
    %2114 = vxpose.xlu0.b32.cont [7/16] 0.0, 128
    %2115 = vxpose.xlu0.b32.cont [8/16] 0.0, 128
    %2116 = vxpose.xlu0.b32.cont [9/16] 0.0, 128
    %2117 = vxpose.xlu0.b32.cont [10/16] 0.0, 128
    %2118 = vxpose.xlu0.b32.cont [11/16] 0.0, 128
    %2119 = vxpose.xlu0.b32.cont [12/16] 0.0, 128
    %2120 = vxpose.xlu0.b32.cont [13/16] 0.0, 128
    %2121 = vxpose.xlu0.b32.cont [14/16] 0.0, 128
    %2122 = vxpose.xlu0.b32.cont [15/16] 0.0, 128
    %2123 = vxpose.xlu0.b32.end [16/16] 0.0, 128
    %v2124 = vpop.trf.xlu0
    %v2125 = vpop.trf.xlu0
    %v2126 = vpop.trf.xlu0
    %v2127 = vpop.trf.xlu0
    %v2128 = vpop.trf.xlu0
    %v2129 = vpop.trf.xlu0
    %v2130 = vpop.trf.xlu0
    %v2131 = vpop.trf.xlu0
    %v2132 = vpop.trf.xlu0
    %v2133 = vpop.trf.xlu0
    %v2134 = vpop.trf.xlu0
    %v2135 = vpop.trf.xlu0
    %v2136 = vpop.trf.xlu0
    %v2137 = vpop.trf.xlu0
    %v2138 = vpop.trf.xlu0
    %v2139 = vpop.trf.xlu0
    %2140 = vxpose.xlu0.b32.start [1/16] %v1594, 128
    %2141 = vxpose.xlu0.b32.cont [2/16] 0.0, 128
    %2142 = vxpose.xlu0.b32.cont [3/16] 0.0, 128
    %2143 = vxpose.xlu0.b32.cont [4/16] 0.0, 128
    %2144 = vxpose.xlu0.b32.cont [5/16] 0.0, 128
    %2145 = vxpose.xlu0.b32.cont [6/16] 0.0, 128
    %2146 = vxpose.xlu0.b32.cont [7/16] 0.0, 128
    %2147 = vxpose.xlu0.b32.cont [8/16] 0.0, 128
    %2148 = vxpose.xlu0.b32.cont [9/16] 0.0, 128
    %2149 = vxpose.xlu0.b32.cont [10/16] 0.0, 128
    %2150 = vxpose.xlu0.b32.cont [11/16] 0.0, 128
    %2151 = vxpose.xlu0.b32.cont [12/16] 0.0, 128
    %2152 = vxpose.xlu0.b32.cont [13/16] 0.0, 128
    %2153 = vxpose.xlu0.b32.cont [14/16] 0.0, 128
    %2154 = vxpose.xlu0.b32.cont [15/16] 0.0, 128
    %2155 = vxpose.xlu0.b32.end [16/16] 0.0, 128
    %v2156 = vpop.trf.xlu0
    %v2157 = vpop.trf.xlu0
    %v2158 = vpop.trf.xlu0
    %v2159 = vpop.trf.xlu0
    %v2160 = vpop.trf.xlu0
    %v2161 = vpop.trf.xlu0
    %v2162 = vpop.trf.xlu0
    %v2163 = vpop.trf.xlu0
    %v2164 = vpop.trf.xlu0
    %v2165 = vpop.trf.xlu0
    %v2166 = vpop.trf.xlu0
    %v2167 = vpop.trf.xlu0
    %v2168 = vpop.trf.xlu0
    %v2169 = vpop.trf.xlu0
    %v2170 = vpop.trf.xlu0
    %v2171 = vpop.trf.xlu0
    %2172 = vxpose.xlu0.b32.start [1/16] %v1597, 128
    %2173 = vxpose.xlu0.b32.cont [2/16] 0.0, 128
    %2174 = vxpose.xlu0.b32.cont [3/16] 0.0, 128
    %2175 = vxpose.xlu0.b32.cont [4/16] 0.0, 128
    %2176 = vxpose.xlu0.b32.cont [5/16] 0.0, 128
    %2177 = vxpose.xlu0.b32.cont [6/16] 0.0, 128
    %2178 = vxpose.xlu0.b32.cont [7/16] 0.0, 128
    %2179 = vxpose.xlu0.b32.cont [8/16] 0.0, 128
    %2180 = vxpose.xlu0.b32.cont [9/16] 0.0, 128
    %2181 = vxpose.xlu0.b32.cont [10/16] 0.0, 128
    %2182 = vxpose.xlu0.b32.cont [11/16] 0.0, 128
    %2183 = vxpose.xlu0.b32.cont [12/16] 0.0, 128
    %2184 = vxpose.xlu0.b32.cont [13/16] 0.0, 128
    %2185 = vxpose.xlu0.b32.cont [14/16] 0.0, 128
    %2186 = vxpose.xlu0.b32.cont [15/16] 0.0, 128
    %2187 = vxpose.xlu0.b32.end [16/16] 0.0, 128
    %v2188 = vpop.trf.xlu0
    %v2189 = vpop.trf.xlu0
    %v2190 = vpop.trf.xlu0
    %v2191 = vpop.trf.xlu0
    %v2192 = vpop.trf.xlu0
    %v2193 = vpop.trf.xlu0
    %v2194 = vpop.trf.xlu0
    %v2195 = vpop.trf.xlu0
    %v2196 = vpop.trf.xlu0
    %v2197 = vpop.trf.xlu0
    %v2198 = vpop.trf.xlu0
    %v2199 = vpop.trf.xlu0
    %v2200 = vpop.trf.xlu0
    %v2201 = vpop.trf.xlu0
    %v2202 = vpop.trf.xlu0
    %v2203 = vpop.trf.xlu0
    %v2205 = vsel %vm447, %v2092, 0
    %v2208 = vsel %vm447, %v2067, 0
    %2210 = vmatprep.subr.mxu0 0.0
    %2211 = vmatpush1.xpose.msra.mxu0 %v2208
    %2212 = vmatprep.subr.mxu0 0.0
    %2213 = vmatpush1.xpose.msra.mxu0 0.0
    %2214 = vmatprep.subr.mxu0 0.0
    %2215 = vmatpush1.xpose.msra.mxu0 0.0
    %2216 = vmatprep.subr.mxu0 0.0
    %2217 = vmatpush1.xpose.msra.mxu0 0.0
    %2218 = vmatprep.subr.mxu0 0.0
    %2219 = vmatpush1.xpose.msra.mxu0 0.0
    %2220 = vmatprep.subr.mxu0 0.0
    %2221 = vmatpush1.xpose.msra.mxu0 0.0
    %2222 = vmatprep.subr.mxu0 0.0
    %2223 = vmatpush1.xpose.msra.mxu0 0.0
    %2224 = vmatprep.subr.mxu0 0.0
    %2225 = vmatpush1.xpose.msra.mxu0 0.0
    %2226 = vmatprep.subr.mxu0 0.0
    %2227 = vmatpush1.xpose.msra.mxu0 0.0
    %2228 = vmatprep.subr.mxu0 0.0
    %2229 = vmatpush1.xpose.msra.mxu0 0.0
    %2230 = vmatprep.subr.mxu0 0.0
    %2231 = vmatpush1.xpose.msra.mxu0 0.0
    %2232 = vmatprep.subr.mxu0 0.0
    %2233 = vmatpush1.xpose.msra.mxu0 0.0
    %2234 = vmatprep.subr.mxu0 0.0
    %2235 = vmatpush1.xpose.msra.mxu0 0.0
    %2236 = vmatprep.subr.mxu0 0.0
    %2237 = vmatpush1.xpose.msra.mxu0 0.0
    %2238 = vmatprep.subr.mxu0 0.0
    %2239 = vmatpush1.xpose.msra.mxu0 0.0
    %2240 = vmatprep.subr.mxu0 0.0
    %2241 = vmatpush1.xpose.msra.mxu0 0.0
    %2242 = vmatprep.subr.mxu0 0.0
    %2243 = vmatpush1.xpose.msra.mxu0 0.0
    %2244 = vmatprep.subr.mxu0 0.0
    %2245 = vmatpush1.xpose.msra.mxu0 0.0
    %2246 = vmatprep.subr.mxu0 0.0
    %2247 = vmatpush1.xpose.msra.mxu0 0.0
    %2248 = vmatprep.subr.mxu0 0.0
    %2249 = vmatpush1.xpose.msra.mxu0 0.0
    %2250 = vmatprep.subr.mxu0 0.0
    %2251 = vmatpush1.xpose.msra.mxu0 0.0
    %2252 = vmatprep.subr.mxu0 0.0
    %2253 = vmatpush1.xpose.msra.mxu0 0.0
    %2254 = vmatprep.subr.mxu0 0.0
    %2255 = vmatpush1.xpose.msra.mxu0 0.0
    %2256 = vmatprep.subr.mxu0 0.0
    %2257 = vmatpush1.xpose.msra.mxu0 0.0
    %2258 = vmatprep.subr.mxu0 0.0
    %2259 = vmatpush1.xpose.msra.mxu0 0.0
    %2260 = vmatprep.subr.mxu0 0.0
    %2261 = vmatpush1.xpose.msra.mxu0 0.0
    %2262 = vmatprep.subr.mxu0 0.0
    %2263 = vmatpush1.xpose.msra.mxu0 0.0
    %2264 = vmatprep.subr.mxu0 0.0
    %2265 = vmatpush1.xpose.msra.mxu0 0.0
    %2266 = vmatprep.subr.mxu0 0.0
    %2267 = vmatpush1.xpose.msra.mxu0 0.0
    %2268 = vmatprep.subr.mxu0 0.0
    %2269 = vmatpush1.xpose.msra.mxu0 0.0
    %2270 = vmatprep.subr.mxu0 0.0
    %2271 = vmatpush1.xpose.msra.mxu0 0.0
    %2272 = vmatprep.subr.mxu0 0.0
    %2273 = vmatpush1.xpose.msra.mxu0 0.0
    %2274 = vmatprep.mubr.f32.mxu0 0.0
    %2275 = vmatmul.mubr.f32.gmra.mrb[0].mxu0 %v2205
    %v2276 = vpop.f32.mrb[0].mxu0
    %v2277 = vadd.f32 0.0, %v2276
    %v2278 = vpop.f32.mrb[0].mxu0
    %2279 = vdwg.mxu0
    %v2281 = vsel %vm447, %v2124, 0
    %v2284 = vsel %vm447, %v2068, 0
    %2286 = vmatprep.subr.mxu0 0.0
    %2287 = vmatpush1.xpose.msra.mxu0 %v2284
    %2288 = vmatprep.subr.mxu0 0.0
    %2289 = vmatpush1.xpose.msra.mxu0 0.0
    %2290 = vmatprep.subr.mxu0 0.0
    %2291 = vmatpush1.xpose.msra.mxu0 0.0
    %2292 = vmatprep.subr.mxu0 0.0
    %2293 = vmatpush1.xpose.msra.mxu0 0.0
    %2294 = vmatprep.subr.mxu0 0.0
    %2295 = vmatpush1.xpose.msra.mxu0 0.0
    %2296 = vmatprep.subr.mxu0 0.0
    %2297 = vmatpush1.xpose.msra.mxu0 0.0
    %2298 = vmatprep.subr.mxu0 0.0
    %2299 = vmatpush1.xpose.msra.mxu0 0.0
    %2300 = vmatprep.subr.mxu0 0.0
    %2301 = vmatpush1.xpose.msra.mxu0 0.0
    %2302 = vmatprep.subr.mxu0 0.0
    %2303 = vmatpush1.xpose.msra.mxu0 0.0
    %2304 = vmatprep.subr.mxu0 0.0
    %2305 = vmatpush1.xpose.msra.mxu0 0.0
    %2306 = vmatprep.subr.mxu0 0.0
    %2307 = vmatpush1.xpose.msra.mxu0 0.0
    %2308 = vmatprep.subr.mxu0 0.0
    %2309 = vmatpush1.xpose.msra.mxu0 0.0
    %2310 = vmatprep.subr.mxu0 0.0
    %2311 = vmatpush1.xpose.msra.mxu0 0.0
    %2312 = vmatprep.subr.mxu0 0.0
    %2313 = vmatpush1.xpose.msra.mxu0 0.0
    %2314 = vmatprep.subr.mxu0 0.0
    %2315 = vmatpush1.xpose.msra.mxu0 0.0
    %2316 = vmatprep.subr.mxu0 0.0
    %2317 = vmatpush1.xpose.msra.mxu0 0.0
    %2318 = vmatprep.subr.mxu0 0.0
    %2319 = vmatpush1.xpose.msra.mxu0 0.0
    %2320 = vmatprep.subr.mxu0 0.0
    %2321 = vmatpush1.xpose.msra.mxu0 0.0
    %2322 = vmatprep.subr.mxu0 0.0
    %2323 = vmatpush1.xpose.msra.mxu0 0.0
    %2324 = vmatprep.subr.mxu0 0.0
    %2325 = vmatpush1.xpose.msra.mxu0 0.0
    %2326 = vmatprep.subr.mxu0 0.0
    %2327 = vmatpush1.xpose.msra.mxu0 0.0
    %2328 = vmatprep.subr.mxu0 0.0
    %2329 = vmatpush1.xpose.msra.mxu0 0.0
    %2330 = vmatprep.subr.mxu0 0.0
    %2331 = vmatpush1.xpose.msra.mxu0 0.0
    %2332 = vmatprep.subr.mxu0 0.0
    %2333 = vmatpush1.xpose.msra.mxu0 0.0
    %2334 = vmatprep.subr.mxu0 0.0
    %2335 = vmatpush1.xpose.msra.mxu0 0.0
    %2336 = vmatprep.subr.mxu0 0.0
    %2337 = vmatpush1.xpose.msra.mxu0 0.0
    %2338 = vmatprep.subr.mxu0 0.0
    %2339 = vmatpush1.xpose.msra.mxu0 0.0
    %2340 = vmatprep.subr.mxu0 0.0
    %2341 = vmatpush1.xpose.msra.mxu0 0.0
    %2342 = vmatprep.subr.mxu0 0.0
    %2343 = vmatpush1.xpose.msra.mxu0 0.0
    %2344 = vmatprep.subr.mxu0 0.0
    %2345 = vmatpush1.xpose.msra.mxu0 0.0
    %2346 = vmatprep.subr.mxu0 0.0
    %2347 = vmatpush1.xpose.msra.mxu0 0.0
    %2348 = vmatprep.subr.mxu0 0.0
    %2349 = vmatpush1.xpose.msra.mxu0 0.0
    %2350 = vmatprep.mubr.f32.mxu0 0.0
    %2351 = vmatmul.mubr.f32.gmra.mrb[0].mxu0 %v2281
    %v2352 = vpop.f32.mrb[0].mxu0
    %v2353 = vadd.f32 0.0, %v2352
    %v2354 = vpop.f32.mrb[0].mxu0
    %2355 = vdwg.mxu0
    %v2357 = vsel %vm447, %v2156, 0
    %v2360 = vsel %vm447, %v2069, 0
    %2362 = vmatprep.subr.mxu0 0.0
    %2363 = vmatpush1.xpose.msra.mxu0 %v2360
    %2364 = vmatprep.subr.mxu0 0.0
    %2365 = vmatpush1.xpose.msra.mxu0 0.0
    %2366 = vmatprep.subr.mxu0 0.0
    %2367 = vmatpush1.xpose.msra.mxu0 0.0
    %2368 = vmatprep.subr.mxu0 0.0
    %2369 = vmatpush1.xpose.msra.mxu0 0.0
    %2370 = vmatprep.subr.mxu0 0.0
    %2371 = vmatpush1.xpose.msra.mxu0 0.0
    %2372 = vmatprep.subr.mxu0 0.0
    %2373 = vmatpush1.xpose.msra.mxu0 0.0
    %2374 = vmatprep.subr.mxu0 0.0
    %2375 = vmatpush1.xpose.msra.mxu0 0.0
    %2376 = vmatprep.subr.mxu0 0.0
    %2377 = vmatpush1.xpose.msra.mxu0 0.0
    %2378 = vmatprep.subr.mxu0 0.0
    %2379 = vmatpush1.xpose.msra.mxu0 0.0
    %2380 = vmatprep.subr.mxu0 0.0
    %2381 = vmatpush1.xpose.msra.mxu0 0.0
    %2382 = vmatprep.subr.mxu0 0.0
    %2383 = vmatpush1.xpose.msra.mxu0 0.0
    %2384 = vmatprep.subr.mxu0 0.0
    %2385 = vmatpush1.xpose.msra.mxu0 0.0
    %2386 = vmatprep.subr.mxu0 0.0
    %2387 = vmatpush1.xpose.msra.mxu0 0.0
    %2388 = vmatprep.subr.mxu0 0.0
    %2389 = vmatpush1.xpose.msra.mxu0 0.0
    %2390 = vmatprep.subr.mxu0 0.0
    %2391 = vmatpush1.xpose.msra.mxu0 0.0
    %2392 = vmatprep.subr.mxu0 0.0
    %2393 = vmatpush1.xpose.msra.mxu0 0.0
    %2394 = vmatprep.subr.mxu0 0.0
    %2395 = vmatpush1.xpose.msra.mxu0 0.0
    %2396 = vmatprep.subr.mxu0 0.0
    %2397 = vmatpush1.xpose.msra.mxu0 0.0
    %2398 = vmatprep.subr.mxu0 0.0
    %2399 = vmatpush1.xpose.msra.mxu0 0.0
    %2400 = vmatprep.subr.mxu0 0.0
    %2401 = vmatpush1.xpose.msra.mxu0 0.0
    %2402 = vmatprep.subr.mxu0 0.0
    %2403 = vmatpush1.xpose.msra.mxu0 0.0
    %2404 = vmatprep.subr.mxu0 0.0
    %2405 = vmatpush1.xpose.msra.mxu0 0.0
    %2406 = vmatprep.subr.mxu0 0.0
    %2407 = vmatpush1.xpose.msra.mxu0 0.0
    %2408 = vmatprep.subr.mxu0 0.0
    %2409 = vmatpush1.xpose.msra.mxu0 0.0
    %2410 = vmatprep.subr.mxu0 0.0
    %2411 = vmatpush1.xpose.msra.mxu0 0.0
    %2412 = vmatprep.subr.mxu0 0.0
    %2413 = vmatpush1.xpose.msra.mxu0 0.0
    %2414 = vmatprep.subr.mxu0 0.0
    %2415 = vmatpush1.xpose.msra.mxu0 0.0
    %2416 = vmatprep.subr.mxu0 0.0
    %2417 = vmatpush1.xpose.msra.mxu0 0.0
    %2418 = vmatprep.subr.mxu0 0.0
    %2419 = vmatpush1.xpose.msra.mxu0 0.0
    %2420 = vmatprep.subr.mxu0 0.0
    %2421 = vmatpush1.xpose.msra.mxu0 0.0
    %2422 = vmatprep.subr.mxu0 0.0
    %2423 = vmatpush1.xpose.msra.mxu0 0.0
    %2424 = vmatprep.subr.mxu0 0.0
    %2425 = vmatpush1.xpose.msra.mxu0 0.0
    %2426 = vmatprep.mubr.f32.mxu0 0.0
    %2427 = vmatmul.mubr.f32.gmra.mrb[0].mxu0 %v2357
    %v2428 = vpop.f32.mrb[0].mxu0
    %v2429 = vadd.f32 0.0, %v2428
    %v2430 = vpop.f32.mrb[0].mxu0
    %2431 = vdwg.mxu0
    %v2433 = vsel %vm447, %v2188, 0
    %v2436 = vsel %vm447, %v2070, 0
    %2438 = vmatprep.subr.mxu0 0.0
    %2439 = vmatpush1.xpose.msra.mxu0 %v2436
    %2440 = vmatprep.subr.mxu0 0.0
    %2441 = vmatpush1.xpose.msra.mxu0 0.0
    %2442 = vmatprep.subr.mxu0 0.0
    %2443 = vmatpush1.xpose.msra.mxu0 0.0
    %2444 = vmatprep.subr.mxu0 0.0
    %2445 = vmatpush1.xpose.msra.mxu0 0.0
    %2446 = vmatprep.subr.mxu0 0.0
    %2447 = vmatpush1.xpose.msra.mxu0 0.0
    %2448 = vmatprep.subr.mxu0 0.0
    %2449 = vmatpush1.xpose.msra.mxu0 0.0
    %2450 = vmatprep.subr.mxu0 0.0
    %2451 = vmatpush1.xpose.msra.mxu0 0.0
    %2452 = vmatprep.subr.mxu0 0.0
    %2453 = vmatpush1.xpose.msra.mxu0 0.0
    %2454 = vmatprep.subr.mxu0 0.0
    %2455 = vmatpush1.xpose.msra.mxu0 0.0
    %2456 = vmatprep.subr.mxu0 0.0
    %2457 = vmatpush1.xpose.msra.mxu0 0.0
    %2458 = vmatprep.subr.mxu0 0.0
    %2459 = vmatpush1.xpose.msra.mxu0 0.0
    %2460 = vmatprep.subr.mxu0 0.0
    %2461 = vmatpush1.xpose.msra.mxu0 0.0
    %2462 = vmatprep.subr.mxu0 0.0
    %2463 = vmatpush1.xpose.msra.mxu0 0.0
    %2464 = vmatprep.subr.mxu0 0.0
    %2465 = vmatpush1.xpose.msra.mxu0 0.0
    %2466 = vmatprep.subr.mxu0 0.0
    %2467 = vmatpush1.xpose.msra.mxu0 0.0
    %2468 = vmatprep.subr.mxu0 0.0
    %2469 = vmatpush1.xpose.msra.mxu0 0.0
    %2470 = vmatprep.subr.mxu0 0.0
    %2471 = vmatpush1.xpose.msra.mxu0 0.0
    %2472 = vmatprep.subr.mxu0 0.0
    %2473 = vmatpush1.xpose.msra.mxu0 0.0
    %2474 = vmatprep.subr.mxu0 0.0
    %2475 = vmatpush1.xpose.msra.mxu0 0.0
    %2476 = vmatprep.subr.mxu0 0.0
    %2477 = vmatpush1.xpose.msra.mxu0 0.0
    %2478 = vmatprep.subr.mxu0 0.0
    %2479 = vmatpush1.xpose.msra.mxu0 0.0
    %2480 = vmatprep.subr.mxu0 0.0
    %2481 = vmatpush1.xpose.msra.mxu0 0.0
    %2482 = vmatprep.subr.mxu0 0.0
    %2483 = vmatpush1.xpose.msra.mxu0 0.0
    %2484 = vmatprep.subr.mxu0 0.0
    %2485 = vmatpush1.xpose.msra.mxu0 0.0
    %2486 = vmatprep.subr.mxu0 0.0
    %2487 = vmatpush1.xpose.msra.mxu0 0.0
    %2488 = vmatprep.subr.mxu0 0.0
    %2489 = vmatpush1.xpose.msra.mxu0 0.0
    %2490 = vmatprep.subr.mxu0 0.0
    %2491 = vmatpush1.xpose.msra.mxu0 0.0
    %2492 = vmatprep.subr.mxu0 0.0
    %2493 = vmatpush1.xpose.msra.mxu0 0.0
    %2494 = vmatprep.subr.mxu0 0.0
    %2495 = vmatpush1.xpose.msra.mxu0 0.0
    %2496 = vmatprep.subr.mxu0 0.0
    %2497 = vmatpush1.xpose.msra.mxu0 0.0
    %2498 = vmatprep.subr.mxu0 0.0
    %2499 = vmatpush1.xpose.msra.mxu0 0.0
    %2500 = vmatprep.subr.mxu0 0.0
    %2501 = vmatpush1.xpose.msra.mxu0 0.0
    %2502 = vmatprep.mubr.f32.mxu0 0.0
    %2503 = vmatmul.mubr.f32.gmra.mrb[0].mxu0 %v2433
    %v2504 = vpop.f32.mrb[0].mxu0
    %v2505 = vadd.f32 0.0, %v2504
    %v2506 = vpop.f32.mrb[0].mxu0
    %2507 = vdwg.mxu0
    %2508 = vxpose.xlu0.b32.start [1/16] %v2277, 128
    %2509 = vxpose.xlu0.b32.cont [2/16] 0.0, 128
    %2510 = vxpose.xlu0.b32.cont [3/16] 0.0, 128
    %2511 = vxpose.xlu0.b32.cont [4/16] 0.0, 128
    %2512 = vxpose.xlu0.b32.cont [5/16] 0.0, 128
    %2513 = vxpose.xlu0.b32.cont [6/16] 0.0, 128
    %2514 = vxpose.xlu0.b32.cont [7/16] 0.0, 128
    %2515 = vxpose.xlu0.b32.cont [8/16] 0.0, 128
    %2516 = vxpose.xlu0.b32.cont [9/16] 0.0, 128
    %2517 = vxpose.xlu0.b32.cont [10/16] 0.0, 128
    %2518 = vxpose.xlu0.b32.cont [11/16] 0.0, 128
    %2519 = vxpose.xlu0.b32.cont [12/16] 0.0, 128
    %2520 = vxpose.xlu0.b32.cont [13/16] 0.0, 128
    %2521 = vxpose.xlu0.b32.cont [14/16] 0.0, 128
    %2522 = vxpose.xlu0.b32.cont [15/16] 0.0, 128
    %2523 = vxpose.xlu0.b32.end [16/16] 0.0, 128
    %v2524 = vpop.trf.xlu0
    %v2525 = vpop.trf.xlu0
    %v2526 = vpop.trf.xlu0
    %v2527 = vpop.trf.xlu0
    %v2528 = vpop.trf.xlu0
    %v2529 = vpop.trf.xlu0
    %v2530 = vpop.trf.xlu0
    %v2531 = vpop.trf.xlu0
    %v2532 = vpop.trf.xlu0
    %v2533 = vpop.trf.xlu0
    %v2534 = vpop.trf.xlu0
    %v2535 = vpop.trf.xlu0
    %v2536 = vpop.trf.xlu0
    %v2537 = vpop.trf.xlu0
    %v2538 = vpop.trf.xlu0
    %v2539 = vpop.trf.xlu0
    %2540 = vxpose.xlu0.b32.start [1/16] %v2353, 128
    %2541 = vxpose.xlu0.b32.cont [2/16] 0.0, 128
    %2542 = vxpose.xlu0.b32.cont [3/16] 0.0, 128
    %2543 = vxpose.xlu0.b32.cont [4/16] 0.0, 128
    %2544 = vxpose.xlu0.b32.cont [5/16] 0.0, 128
    %2545 = vxpose.xlu0.b32.cont [6/16] 0.0, 128
    %2546 = vxpose.xlu0.b32.cont [7/16] 0.0, 128
    %2547 = vxpose.xlu0.b32.cont [8/16] 0.0, 128
    %2548 = vxpose.xlu0.b32.cont [9/16] 0.0, 128
    %2549 = vxpose.xlu0.b32.cont [10/16] 0.0, 128
    %2550 = vxpose.xlu0.b32.cont [11/16] 0.0, 128
    %2551 = vxpose.xlu0.b32.cont [12/16] 0.0, 128
    %2552 = vxpose.xlu0.b32.cont [13/16] 0.0, 128
    %2553 = vxpose.xlu0.b32.cont [14/16] 0.0, 128
    %2554 = vxpose.xlu0.b32.cont [15/16] 0.0, 128
    %2555 = vxpose.xlu0.b32.end [16/16] 0.0, 128
    %v2556 = vpop.trf.xlu0
    %v2557 = vpop.trf.xlu0
    %v2558 = vpop.trf.xlu0
    %v2559 = vpop.trf.xlu0
    %v2560 = vpop.trf.xlu0
    %v2561 = vpop.trf.xlu0
    %v2562 = vpop.trf.xlu0
    %v2563 = vpop.trf.xlu0
    %v2564 = vpop.trf.xlu0
    %v2565 = vpop.trf.xlu0
    %v2566 = vpop.trf.xlu0
    %v2567 = vpop.trf.xlu0
    %v2568 = vpop.trf.xlu0
    %v2569 = vpop.trf.xlu0
    %v2570 = vpop.trf.xlu0
    %v2571 = vpop.trf.xlu0
    %2572 = vxpose.xlu0.b32.start [1/16] %v2429, 128
    %2573 = vxpose.xlu0.b32.cont [2/16] 0.0, 128
    %2574 = vxpose.xlu0.b32.cont [3/16] 0.0, 128
    %2575 = vxpose.xlu0.b32.cont [4/16] 0.0, 128
    %2576 = vxpose.xlu0.b32.cont [5/16] 0.0, 128
    %2577 = vxpose.xlu0.b32.cont [6/16] 0.0, 128
    %2578 = vxpose.xlu0.b32.cont [7/16] 0.0, 128
    %2579 = vxpose.xlu0.b32.cont [8/16] 0.0, 128
    %2580 = vxpose.xlu0.b32.cont [9/16] 0.0, 128
    %2581 = vxpose.xlu0.b32.cont [10/16] 0.0, 128
    %2582 = vxpose.xlu0.b32.cont [11/16] 0.0, 128
    %2583 = vxpose.xlu0.b32.cont [12/16] 0.0, 128
    %2584 = vxpose.xlu0.b32.cont [13/16] 0.0, 128
    %2585 = vxpose.xlu0.b32.cont [14/16] 0.0, 128
    %2586 = vxpose.xlu0.b32.cont [15/16] 0.0, 128
    %2587 = vxpose.xlu0.b32.end [16/16] 0.0, 128
    %v2588 = vpop.trf.xlu0
    %v2589 = vpop.trf.xlu0
    %v2590 = vpop.trf.xlu0
    %v2591 = vpop.trf.xlu0
    %v2592 = vpop.trf.xlu0
    %v2593 = vpop.trf.xlu0
    %v2594 = vpop.trf.xlu0
    %v2595 = vpop.trf.xlu0
    %v2596 = vpop.trf.xlu0
    %v2597 = vpop.trf.xlu0
    %v2598 = vpop.trf.xlu0
    %v2599 = vpop.trf.xlu0
    %v2600 = vpop.trf.xlu0
    %v2601 = vpop.trf.xlu0
    %v2602 = vpop.trf.xlu0
    %v2603 = vpop.trf.xlu0
    %2604 = vxpose.xlu0.b32.start [1/16] %v2505, 128
    %2605 = vxpose.xlu0.b32.cont [2/16] 0.0, 128
    %2606 = vxpose.xlu0.b32.cont [3/16] 0.0, 128
    %2607 = vxpose.xlu0.b32.cont [4/16] 0.0, 128
    %2608 = vxpose.xlu0.b32.cont [5/16] 0.0, 128
    %2609 = vxpose.xlu0.b32.cont [6/16] 0.0, 128
    %2610 = vxpose.xlu0.b32.cont [7/16] 0.0, 128
    %2611 = vxpose.xlu0.b32.cont [8/16] 0.0, 128
    %2612 = vxpose.xlu0.b32.cont [9/16] 0.0, 128
    %2613 = vxpose.xlu0.b32.cont [10/16] 0.0, 128
    %2614 = vxpose.xlu0.b32.cont [11/16] 0.0, 128
    %2615 = vxpose.xlu0.b32.cont [12/16] 0.0, 128
    %2616 = vxpose.xlu0.b32.cont [13/16] 0.0, 128
    %2617 = vxpose.xlu0.b32.cont [14/16] 0.0, 128
    %2618 = vxpose.xlu0.b32.cont [15/16] 0.0, 128
    %2619 = vxpose.xlu0.b32.end [16/16] 0.0, 128
    %v2620 = vpop.trf.xlu0
    %v2621 = vpop.trf.xlu0
    %v2622 = vpop.trf.xlu0
    %v2623 = vpop.trf.xlu0
    %v2624 = vpop.trf.xlu0
    %v2625 = vpop.trf.xlu0
    %v2626 = vpop.trf.xlu0
    %v2627 = vpop.trf.xlu0
    %v2628 = vpop.trf.xlu0
    %v2629 = vpop.trf.xlu0
    %v2630 = vpop.trf.xlu0
    %v2631 = vpop.trf.xlu0
    %v2632 = vpop.trf.xlu0
    %v2633 = vpop.trf.xlu0
    %v2634 = vpop.trf.xlu0
    %v2635 = vpop.trf.xlu0
    %v2636 = vcombine.low %v2524, %v2588
    %v2637 = vcombine.high %v2524, %v2588
    %v2639 = vunpack.c.l.s4 1983009808
    %v2640 = vunpack.c.0.s8 %v2639
    %v2641 = vlaneseq
    %v2642 = vshrl.u32 %v2641, 7
    %v2643 = vsub.s32 %v2640, %v2642
    %v2644 = vrot.slane %v2636, %v2643
    %v2646 = vunpack.c.l.s4 1983009808
    %v2647 = vunpack.c.0.s8 %v2646
    %v2648 = vlaneseq
    %v2649 = vshrl.u32 %v2648, 7
    %v2650 = vsub.s32 %v2647, %v2649
    %v2651 = vrot.slane %v2637, %v2650
    %v2652 = vcombine.low %v2556, %v2620
    %v2653 = vcombine.high %v2556, %v2620
    %v2655 = vunpack.c.l.s4 1983009808
    %v2656 = vunpack.c.0.s8 %v2655
    %v2657 = vlaneseq
    %v2658 = vshrl.u32 %v2657, 7
    %v2659 = vsub.s32 %v2656, %v2658
    %v2660 = vrot.slane %v2652, %v2659
    %v2662 = vunpack.c.l.s4 1983009808
    %v2663 = vunpack.c.0.s8 %v2662
    %v2664 = vlaneseq
    %v2665 = vshrl.u32 %v2664, 7
    %v2666 = vsub.s32 %v2663, %v2665
    %v2667 = vrot.slane %v2653, %v2666
    %v2668 = vcombine.low %v2644, %v2660
    %v2669 = vcombine.high %v2644, %v2660
    %v2671 = vunpack.c.l.s4 1934713408
    %v2672 = vunpack.c.0.s8 %v2671
    %v2673 = vlaneseq
    %v2674 = vshrl.u32 %v2673, 7
    %v2675 = vsub.s32 %v2672, %v2674
    %v2676 = vrot.slane %v2668, %v2675
    %v2678 = vunpack.c.l.s4 1934713408
    %v2679 = vunpack.c.0.s8 %v2678
    %v2680 = vlaneseq
    %v2681 = vshrl.u32 %v2680, 7
    %v2682 = vsub.s32 %v2679, %v2681
    %v2683 = vrot.slane %v2669, %v2682
    %v2684 = vcombine.low %v2651, %v2667
    %v2685 = vcombine.high %v2651, %v2667
    %v2687 = vunpack.c.l.s4 1934713408
    %v2688 = vunpack.c.0.s8 %v2687
    %v2689 = vlaneseq
    %v2690 = vshrl.u32 %v2689, 7
    %v2691 = vsub.s32 %v2688, %v2690
    %v2692 = vrot.slane %v2684, %v2691
    %v2694 = vunpack.c.l.s4 1934713408
    %v2695 = vunpack.c.0.s8 %v2694
    %v2696 = vlaneseq
    %v2697 = vshrl.u32 %v2696, 7
    %v2698 = vsub.s32 %v2695, %v2697
    %v2699 = vrot.slane %v2685, %v2698
    %v2700 = vcombine.high %v2676, 0.0
    %v2701 = vcombine.high %v2683, 0.0
    %v2702 = vcombine.high %v2692, 0.0
    %v2703 = vcombine.high %v2699, 0.0
    %v2704 = vcombine.low %v2676, %v2683
    %v2706 = vunpack.c.l.s4 1983009808
    %v2707 = vunpack.c.0.s8 %v2706
    %v2708 = vlaneseq
    %v2709 = vshrl.u32 %v2708, 7
    %v2710 = vsub.s32 %v2707, %v2709
    %v2711 = vrot.slane %v2704, %v2710
    %v2712 = vcombine.low %v2700, %v2701
    %v2714 = vunpack.c.l.s4 1983009808
    %v2715 = vunpack.c.0.s8 %v2714
    %v2716 = vlaneseq
    %v2717 = vshrl.u32 %v2716, 7
    %v2718 = vsub.s32 %v2715, %v2717
    %v2719 = vrot.slane %v2712, %v2718
    %v2720 = vcombine.low %v2692, %v2699
    %v2722 = vunpack.c.l.s4 1983009808
    %v2723 = vunpack.c.0.s8 %v2722
    %v2724 = vlaneseq
    %v2725 = vshrl.u32 %v2724, 7
    %v2726 = vsub.s32 %v2723, %v2725
    %v2727 = vrot.slane %v2720, %v2726
    %v2728 = vcombine.low %v2702, %v2703
    %v2730 = vunpack.c.l.s4 1983009808
    %v2731 = vunpack.c.0.s8 %v2730
    %v2732 = vlaneseq
    %v2733 = vshrl.u32 %v2732, 7
    %v2734 = vsub.s32 %v2731, %v2733
    %v2735 = vrot.slane %v2728, %v2734
    %v2736 = vcombine.low %v2711, %v2719
    %v2737 = vcombine.high %v2711, %v2719
    %v2739 = vunpack.c.l.s4 1934713408
    %v2740 = vunpack.c.0.s8 %v2739
    %v2741 = vlaneseq
    %v2742 = vshrl.u32 %v2741, 7
    %v2743 = vsub.s32 %v2740, %v2742
    %v2744 = vrot.slane %v2736, %v2743
    %v2746 = vunpack.c.l.s4 1934713408
    %v2747 = vunpack.c.0.s8 %v2746
    %v2748 = vlaneseq
    %v2749 = vshrl.u32 %v2748, 7
    %v2750 = vsub.s32 %v2747, %v2749
    %v2751 = vrot.slane %v2737, %v2750
    %v2752 = vcombine.low %v2727, %v2735
    %v2753 = vcombine.high %v2727, %v2735
    %v2755 = vunpack.c.l.s4 1934713408
    %v2756 = vunpack.c.0.s8 %v2755
    %v2757 = vlaneseq
    %v2758 = vshrl.u32 %v2757, 7
    %v2759 = vsub.s32 %v2756, %v2758
    %v2760 = vrot.slane %v2752, %v2759
    %v2762 = vunpack.c.l.s4 1934713408
    %v2763 = vunpack.c.0.s8 %v2762
    %v2764 = vlaneseq
    %v2765 = vshrl.u32 %v2764, 7
    %v2766 = vsub.s32 %v2763, %v2765
    %v2767 = vrot.slane %v2753, %v2766
    %v2768 = vcombine.low %v2744, %v2760
    %v2769 = vcombine.high %v2744, %v2760
    %v2770 = vcombine.low %v2751, %v2767
    %v2771 = vcombine.high %v2751, %v2767
    %2773 = vrot.lane.b32.xlu0 %v2769, 8
    %v2774 = vpop.permute.xlu0 %2773
    %2777 = vrot.lane.b32.xlu0 %v2770, 16
    %v2778 = vpop.permute.xlu0 %2777
    %2781 = vrot.lane.b32.xlu0 %v2771, 24
    %v2782 = vpop.permute.xlu0 %2781
    %v2784 = vsel %vm447, %v2768, %v2774
    %v2785 = vsel %vm1493, %v2784, %v2778
    %v2786 = vsel %vm1495, %v2785, %v2782
    %v2787 = vld [vmem:[#allocation10] sm:$0xff]
    %v2788 = vld [vmem:[#allocation10 + $0x8] sm:$0xff]
    %v2789 = vld [vmem:[#allocation10 + $0x10] sm:$0xff]
    %v2790 = vld [vmem:[#allocation10 + $0x18] sm:$0xff]
    %v2791 = vld [vmem:[%s7] sm:$0x1]
    %v2793 = vlaneseq
    %v2794 = vshrl.u32 %v2793, 7
    %v2795 = vsub.s32 0, %v2794
    %v2796 = vrot.slane %v2791, %v2795
    %v2799 = vsel %vm116, %v2786, 0
    %2801 = vmatprep.subr.mxu0 0.0
    %2802 = vmatpush1.msra.mxu0 %v2787
    %2803 = vmatprep.subr.mxu0 0.0
    %2804 = vmatpush1.msra.mxu0 %v2788
    %2805 = vmatprep.subr.mxu0 0.0
    %2806 = vmatpush1.msra.mxu0 %v2789
    %2807 = vmatprep.subr.mxu0 0.0
    %2808 = vmatpush1.msra.mxu0 %v2790
    %2809 = vmatprep.subr.mxu0 0.0
    %2810 = vmatpush1.msra.mxu0 0.0
    %2811 = vmatprep.subr.mxu0 0.0
    %2812 = vmatpush1.msra.mxu0 0.0
    %2813 = vmatprep.subr.mxu0 0.0
    %2814 = vmatpush1.msra.mxu0 0.0
    %2815 = vmatprep.subr.mxu0 0.0
    %2816 = vmatpush1.msra.mxu0 0.0
    %2817 = vmatprep.subr.mxu0 0.0
    %2818 = vmatpush1.msra.mxu0 0.0
    %2819 = vmatprep.subr.mxu0 0.0
    %2820 = vmatpush1.msra.mxu0 0.0
    %2821 = vmatprep.subr.mxu0 0.0
    %2822 = vmatpush1.msra.mxu0 0.0
    %2823 = vmatprep.subr.mxu0 0.0
    %2824 = vmatpush1.msra.mxu0 0.0
    %2825 = vmatprep.subr.mxu0 0.0
    %2826 = vmatpush1.msra.mxu0 0.0
    %2827 = vmatprep.subr.mxu0 0.0
    %2828 = vmatpush1.msra.mxu0 0.0
    %2829 = vmatprep.subr.mxu0 0.0
    %2830 = vmatpush1.msra.mxu0 0.0
    %2831 = vmatprep.subr.mxu0 0.0
    %2832 = vmatpush1.msra.mxu0 0.0
    %2833 = vmatprep.subr.mxu0 0.0
    %2834 = vmatpush1.msra.mxu0 0.0
    %2835 = vmatprep.subr.mxu0 0.0
    %2836 = vmatpush1.msra.mxu0 0.0
    %2837 = vmatprep.subr.mxu0 0.0
    %2838 = vmatpush1.msra.mxu0 0.0
    %2839 = vmatprep.subr.mxu0 0.0
    %2840 = vmatpush1.msra.mxu0 0.0
    %2841 = vmatprep.subr.mxu0 0.0
    %2842 = vmatpush1.msra.mxu0 0.0
    %2843 = vmatprep.subr.mxu0 0.0
    %2844 = vmatpush1.msra.mxu0 0.0
    %2845 = vmatprep.subr.mxu0 0.0
    %2846 = vmatpush1.msra.mxu0 0.0
    %2847 = vmatprep.subr.mxu0 0.0
    %2848 = vmatpush1.msra.mxu0 0.0
    %2849 = vmatprep.subr.mxu0 0.0
    %2850 = vmatpush1.msra.mxu0 0.0
    %2851 = vmatprep.subr.mxu0 0.0
    %2852 = vmatpush1.msra.mxu0 0.0
    %2853 = vmatprep.subr.mxu0 0.0
    %2854 = vmatpush1.msra.mxu0 0.0
    %2855 = vmatprep.subr.mxu0 0.0
    %2856 = vmatpush1.msra.mxu0 0.0
    %2857 = vmatprep.subr.mxu0 0.0
    %2858 = vmatpush1.msra.mxu0 0.0
    %2859 = vmatprep.subr.mxu0 0.0
    %2860 = vmatpush1.msra.mxu0 0.0
    %2861 = vmatprep.subr.mxu0 0.0
    %2862 = vmatpush1.msra.mxu0 0.0
    %2863 = vmatprep.subr.mxu0 0.0
    %2864 = vmatpush1.msra.mxu0 0.0
    %2865 = vmatprep.mubr.f32.mxu0 0.0
    %2866 = vmatmul.mubr.f32.gmra.mrb[0].mxu0 %v2799
    %v2867 = vpop.f32.mrb[0].mxu0
    %v2868 = vadd.f32 %v2796, %v2867
    %v2869 = vpop.f32.mrb[0].mxu0
    %2870 = vdwg.mxu0
    %2871 = vst.msk [vmem:[#allocation11 + $0x8] sm:$0xff] %vm116, %v2868
    // Predicated region
    $region54: #{tpu_custom_call.1} parent=1 // pred_check
      _
    $region55: #{tpu_custom_call.1} parent=1 // pred_check_branch
      %2873 = sbr.rel (0) target = $region57
    $region56: #{tpu_custom_call.1} parent=1 // pred_region
      %s2875 = ssub.s32 256, 256
      %2876 = vsyncadd [#allocation4], %s2875
      %s2877 = sshll.u32 [#allocation11], 4
      %s2878 = int_to_ptr.vmem [resolvable:$true] %s2877
      %2883 = dma.vmem_to_hbm [thread:$0]  %s2878, 256, %s8, [#allocation4], 128, 128, 8
    $region57: #{tpu_custom_call.1} parent=1 // pred_fallthru
      _
    // Predicated region
    $region58: #{tpu_custom_call.1} parent=1 // pred_check
      _
    $region59: #{tpu_custom_call.1} parent=1 // pred_check_branch
      %2885 = sbr.rel (0) target = $region61
    $region60: #{tpu_custom_call.1} parent=1 // pred_region
      %s2887 = ssub.s32 1024, 1024
      %2888 = vsyncadd [#allocation13], %s2887
      %s2889 = sshll.u32 [#allocation12], 4
      %s2890 = int_to_ptr.vmem [resolvable:$true] %s2889
      %2895 = dma.vmem_to_hbm [thread:$0]  %s2890, 1024, %s9, [#allocation13], 128, 128, 8
    $region61: #{tpu_custom_call.1} parent=1 // pred_fallthru
      _
    // Predicated region
    $region62: #{tpu_custom_call.1} parent=1 // pred_check
      _
    $region63: #{tpu_custom_call.1} parent=1 // pred_check_branch
      %2897 = sbr.rel (0) target = $region65
    $region64: #{tpu_custom_call.1} parent=1 // pred_region
      %2898 = dma.done [#allocation4], 256
    $region65: #{tpu_custom_call.1} parent=1 // pred_fallthru
      _
    // Predicated region
    $region66: #{tpu_custom_call.1} parent=1 // pred_check
      _
    $region67: #{tpu_custom_call.1} parent=1 // pred_check_branch
      %2900 = sbr.rel (0) target = $region69
    $region68: #{tpu_custom_call.1} parent=1 // pred_region
      %2901 = dma.done [#allocation13], 1024
    $region69: #{tpu_custom_call.1} parent=1 // pred_fallthru
      _
    %2902 = vsyncpa [#allocation3], 1
    %2903 = vsyncpa [#allocation6], 1
    %2904 = vsyncpa [#allocation9], 1
    %2905 = vsyncpa [#allocation4], 1
    %2906 = vsyncpa [#allocation13], 1

</llo_original>
